<compile_context>
chip_gen: v7x
topology: tpu7x:2x2x1
jax: 0.10.0
libtpu: 0.0.40
codegen_flags: <defaults>
</compile_context>

<pallas_src>
import functools
import math

import jax
import jax.numpy as jnp
from jax.experimental import pallas as pl
from jax.experimental.pallas import tpu as pltpu

FREQ = 2            # TransformerModel.freq
IND = 0             # TransformerModel.ind
LN_EPS = 1e-5
LANE = 128          # TPU lane width
HEAD_PAD = 128      # every attention head padded to a full 128-lane slab
MXU_DTYPE = jnp.bfloat16   # matmul operand dtype (accumulation stays f32)


# ----------------------------------------------------------------------------
# Small helpers
# ----------------------------------------------------------------------------
def _round_up(x, m):
    return ((x + m - 1) // m) * m


def _pad_to(a, shape):
    pads = [(0, s - d) for d, s in zip(a.shape, shape)]
    return jnp.pad(a, pads)


# ----------------------------------------------------------------------------
# Fused whole-network kernel (grid = (batch,), all weights VMEM-resident)
# ----------------------------------------------------------------------------
def _fused_transformer_kernel(
        zs_ref, wpe_ref, rin_w_ref, rin_b_ref,
        ln1_w_ref, ln1_b_ref, attn_w_ref, attn_b_ref,
        proj_w_ref, proj_b_ref, ln2_w_ref, ln2_b_ref,
        fc_w_ref, fc_b_ref, mp_w_ref, mp_b_ref,
        lnf_w_ref, lnf_b_ref, rout_w_ref, rout_b_ref,
        o_ref, *, n_layer, n_head, d_model, head_dim, seq_len):
    T = seq_len
    H = n_head
    HP = H * HEAD_PAD
    Dp = rin_w_ref.shape[1]
    scale = 1.0 / math.sqrt(head_dim)
    inv_d = 1.0 / d_model

    # Hoisted constants shared by every layer / head.
    col_mask = (jax.lax.broadcasted_iota(jnp.int32, (1, Dp), 1)
                < d_model).astype(jnp.float32)
    rows = jax.lax.broadcasted_iota(jnp.int32, (T, T), 0)
    cols = jax.lax.broadcasted_iota(jnp.int32, (T, T), 1)
    causal_bias = jnp.where(rows >= cols, 0.0, -1e30).astype(jnp.float32)

    def layernorm(x, gamma, beta):
        # mean-of-squared-deviations form, masked to the logical d_model cols
        mu = jnp.sum(x, axis=-1, keepdims=True) * inv_d
        dev = (x - mu) * col_mask
        var = jnp.sum(dev * dev, axis=-1, keepdims=True) * inv_d
        return dev * jax.lax.rsqrt(var + LN_EPS) * gamma + beta

    # ---- read_in + positional embeddings (residual stream kept in f32) ----
    zs = zs_ref[0]                                           # (T, Kin) bf16
    x = jnp.dot(zs, rin_w_ref[...], preferred_element_type=jnp.float32)
    x = x + rin_b_ref[...] + wpe_ref[...]

    # ---- transformer blocks (statically unrolled) --------------------------
    for l in range(n_layer):
        # attention
        xn = layernorm(x, ln1_w_ref[l], ln1_b_ref[l])
        qkv = jnp.dot(xn.astype(MXU_DTYPE), attn_w_ref[l],
                      preferred_element_type=jnp.float32)
        qkv = (qkv + attn_b_ref[l]).astype(MXU_DTYPE)        # (T, 3*HP)
        head_outs = []
        for h in range(H):
            lo = h * HEAD_PAD
            q = qkv[:, lo:lo + HEAD_PAD]                     # lane-dense 128
            k = qkv[:, HP + lo:HP + lo + HEAD_PAD]
            v = qkv[:, 2 * HP + lo:2 * HP + lo + HEAD_PAD]
            # contract over lanes directly: no transpose of K materialized
            s = jax.lax.dot_general(q, k, (((1,), (1,)), ((), ())),
                                    preferred_element_type=jnp.float32)
            s = s * scale + causal_bias
            m = jnp.max(s, axis=-1, keepdims=True)
            p = jnp.exp(s - m)
            denom = jnp.sum(p, axis=-1, keepdims=True)
            o = jnp.dot(p.astype(MXU_DTYPE), v,
                        preferred_element_type=jnp.float32)
            head_outs.append(o * pl.reciprocal(denom, approx=True))
        attn = jnp.concatenate(head_outs, axis=-1)           # (T, HP)
        proj = jnp.dot(attn.astype(MXU_DTYPE), proj_w_ref[l],
                       preferred_element_type=jnp.float32)
        x = x + proj + proj_b_ref[l]

        # MLP
        xn = layernorm(x, ln2_w_ref[l], ln2_b_ref[l])
        hmid = jnp.dot(xn.astype(MXU_DTYPE), fc_w_ref[l],
                       preferred_element_type=jnp.float32)
        hmid = hmid + fc_b_ref[l]
        # GPT-2 "new" (tanh) GELU; flip to approximate=False if the wrapped
        # GPT2Model uses PyTorch nn.GELU()'s exact erf form.
        hmid = jax.nn.gelu(hmid, approximate=True)
        down = jnp.dot(hmid.astype(MXU_DTYPE), mp_w_ref[l],
                       preferred_element_type=jnp.float32)
        x = x + down + mp_b_ref[l]

    # ---- final LayerNorm + read_out (N == 1) as a VPU reduction ------------
    xn = layernorm(x, lnf_w_ref[...], lnf_b_ref[...])
    y = jnp.sum(xn * rout_w_ref[...], axis=-1, keepdims=True) + rout_b_ref[...]
    # lane-dense store: replicate the scalar across the 128 lanes, slice outside
    o_ref[0] = jnp.broadcast_to(y, (T, LANE)).astype(o_ref.dtype)


# ----------------------------------------------------------------------------
# Parameters: logical (PyTorch-shaped) init, then pad / re-layout for the kernel
# ----------------------------------------------------------------------------
def init_params(key, n_dims, n_positions, n_embd, n_layer, n_head):
    """Logical f32 parameters matching the PyTorch module layout ([in, out])."""
    block_size = FREQ * n_positions + 1
    std = 0.02

    def nrm(k, shape):
        return std * jax.random.normal(k, shape, jnp.float32)

    keys = jax.random.split(key, 3 + n_layer)
    p = {
        "read_in_w": nrm(keys[0], (n_dims, n_embd)),
        "read_in_b": jnp.zeros((n_embd,), jnp.float32),
        "wpe": nrm(keys[1], (block_size, n_embd)),
        "lnf_w": jnp.ones((n_embd,), jnp.float32),
        "lnf_b": jnp.zeros((n_embd,), jnp.float32),
        "read_out_w": nrm(keys[2], (n_embd, 1)),
        "read_out_b": jnp.zeros((1,), jnp.float32),
        "layers": [],
    }
    for li in range(n_layer):
        lk = jax.random.split(keys[3 + li], 4)
        p["layers"].append({
            "ln1_w": jnp.ones((n_embd,), jnp.float32),
            "ln1_b": jnp.zeros((n_embd,), jnp.float32),
            "attn_w": nrm(lk[0], (n_embd, 3 * n_embd)),
            "attn_b": jnp.zeros((3 * n_embd,), jnp.float32),
            "proj_w": nrm(lk[1], (n_embd, n_embd)),
            "proj_b": jnp.zeros((n_embd,), jnp.float32),
            "ln2_w": jnp.ones((n_embd,), jnp.float32),
            "ln2_b": jnp.zeros((n_embd,), jnp.float32),
            "fc_w": nrm(lk[2], (n_embd, 4 * n_embd)),
            "fc_b": jnp.zeros((4 * n_embd,), jnp.float32),
            "mproj_w": nrm(lk[3], (4 * n_embd, n_embd)),
            "mproj_b": jnp.zeros((n_embd,), jnp.float32),
        })
    return p


def prepare_params(p, n_dims, n_embd, n_head):
    """Zero-pad lane dims to 128 multiples, give every attention head its own
    128-lane slab, stack per-layer weights, cast matmul weights to bf16."""
    D = n_embd
    H = n_head
    Dh = D // H
    assert D % H == 0 and Dh <= HEAD_PAD
    Dp = _round_up(D, LANE)
    Kin = _round_up(n_dims, LANE)
    Dmp = _round_up(4 * D, LANE)
    HP = H * HEAD_PAD

    def pad_heads_cols(w):              # [D, D] -> [D, HP] (per-head lane slab)
        w = w.reshape(D, H, Dh)
        w = jnp.pad(w, ((0, 0), (0, 0), (0, HEAD_PAD - Dh)))
        return w.reshape(D, HP)

    def pad_heads_rows(w):              # [D, D] -> [HP, Dp]
        w = w.reshape(H, Dh, D)
        w = jnp.pad(w, ((0, 0), (0, HEAD_PAD - Dh), (0, Dp - D)))
        return w.reshape(HP, Dp)

    def pad_heads_vec(b):               # [D] -> [HP]
        b = b.reshape(H, Dh)
        b = jnp.pad(b, ((0, 0), (0, HEAD_PAD - Dh)))
        return b.reshape(HP)

    def prep_attn_w(lp):
        w = lp["attn_w"]                                       # [D, 3D]
        q, k, v = w[:, :D], w[:, D:2 * D], w[:, 2 * D:]
        w = jnp.concatenate([pad_heads_cols(q), pad_heads_cols(k),
                             pad_heads_cols(v)], axis=1)       # [D, 3*HP]
        return _pad_to(w, (Dp, 3 * HP)).astype(MXU_DTYPE)

    def prep_attn_b(lp):
        b = lp["attn_b"]
        b = jnp.concatenate([pad_heads_vec(b[:D]), pad_heads_vec(b[D:2 * D]),
                             pad_heads_vec(b[2 * D:])])
        return b.reshape(1, 3 * HP)

    layers = p["layers"]

    def stack(fn):
        return jnp.stack([fn(lp) for lp in layers], axis=0)

    def vec(lp_key):
        return lambda lp: _pad_to(lp[lp_key], (Dp,)).reshape(1, Dp)

    out = {
        "read_in_w": _pad_to(p["read_in_w"], (Kin, Dp)).astype(MXU_DTYPE),
        "read_in_b": _pad_to(p["read_in_b"], (Dp,)).reshape(1, Dp),
        "wpe": _pad_to(p["wpe"], (p["wpe"].shape[0], Dp)),
        "lnf_w": _pad_to(p["lnf_w"], (Dp,)).reshape(1, Dp),
        "lnf_b": _pad_to(p["lnf_b"], (Dp,)).reshape(1, Dp),
        "read_out_w": _pad_to(p["read_out_w"][:, 0], (Dp,)).reshape(1, Dp),
        "read_out_b": p["read_out_b"].reshape(1, 1),
        "ln1_w": stack(vec("ln1_w")),
        "ln1_b": stack(vec("ln1_b")),
        "attn_w": stack(prep_attn_w),
        "attn_b": stack(prep_attn_b),
        "proj_w": stack(lambda lp: pad_heads_rows(lp["proj_w"]).astype(MXU_DTYPE)),
        "proj_b": stack(vec("proj_b")),
        "ln2_w": stack(vec("ln2_w")),
        "ln2_b": stack(vec("ln2_b")),
        "fc_w": stack(lambda lp: _pad_to(lp["fc_w"], (Dp, Dmp)).astype(MXU_DTYPE)),
        "fc_b": stack(lambda lp: _pad_to(lp["fc_b"], (Dmp,)).reshape(1, Dmp)),
        "mproj_w": stack(lambda lp: _pad_to(lp["mproj_w"], (Dmp, Dp)).astype(MXU_DTYPE)),
        "mproj_b": stack(vec("mproj_b")),
    }
    return out


# ----------------------------------------------------------------------------
# Forward pass (PyHessian wrapper with ys=None: last column of xs_ys is y)
# ----------------------------------------------------------------------------
def forward(params, xs_ys, *, n_dims, n_embd, n_head, n_layer):
    B, n, d = xs_ys.shape
    d_in = d - 1
    assert d_in == n_dims
    D = n_embd
    H = n_head
    Dh = D // H
    T = FREQ * n
    Kin = params["read_in_w"].shape[0]
    assert T <= params["wpe"].shape[0], "sequence length exceeds block_size"

    # _combine: interleave x_i and [y_i, 0, ..., 0]; pad features to Kin lanes.
    xs = xs_ys[:, :, :-1]
    ys = xs_ys[:, :, -1]
    ys_wide = jnp.concatenate(
        [ys[..., None], jnp.zeros((B, n, d_in - 1), xs_ys.dtype)], axis=2)
    zs = jnp.stack([xs, ys_wide], axis=2).reshape(B, T, d_in)
    zs = jnp.pad(zs, ((0, 0), (0, 0), (0, Kin - d_in))).astype(MXU_DTYPE)

    wpe_t = params["wpe"][:T]

    in_arrays = [
        zs, wpe_t,
        params["read_in_w"], params["read_in_b"],
        params["ln1_w"], params["ln1_b"],
        params["attn_w"], params["attn_b"],
        params["proj_w"], params["proj_b"],
        params["ln2_w"], params["ln2_b"],
        params["fc_w"], params["fc_b"],
        params["mproj_w"], params["mproj_b"],
        params["lnf_w"], params["lnf_b"],
        params["read_out_w"], params["read_out_b"],
    ]

    def _const_map(rank):
        return lambda b: (0,) * rank

    in_specs = [pl.BlockSpec((1, T, Kin), lambda b: (b, 0, 0))]
    in_specs += [pl.BlockSpec(tuple(a.shape), _const_map(a.ndim))
                 for a in in_arrays[1:]]
    out_specs = pl.BlockSpec((1, T, LANE), lambda b: (b, 0, 0))

    # Only raise the scoped-VMEM limit when the resident weights need it.
    in_bytes = sum(a.size * a.dtype.itemsize for a in in_arrays)
    cp_kwargs = dict(dimension_semantics=("parallel",))
    vmem_need = 2 * in_bytes + (6 << 20)      # double-buffer + intermediates slack
    if vmem_need > (16 << 20):
        # TODO(synk): configs whose weights exceed scoped VMEM need the tiled
        # per-op path (flash attention + K-tiled matmuls), not included here.
        cp_kwargs["vmem_limit_bytes"] = int(min(vmem_need, 56 << 20))

    out = pl.pallas_call(
        functools.partial(_fused_transformer_kernel,
                          n_layer=n_layer, n_head=H, d_model=D,
                          head_dim=Dh, seq_len=T),
        out_shape=jax.ShapeDtypeStruct((B, T, LANE), jnp.float32),
        grid=(B,),
        in_specs=in_specs,
        out_specs=out_specs,
        compiler_params=pltpu.CompilerParams(**cp_kwargs),
    )(*in_arrays)

    # regression head: prediction[:, ind::freq, 0]
    return out[:, IND::FREQ, 0]


# ----------------------------------------------------------------------------
if __name__ == "__main__":
    # Small config consistent with the module: n_dims features + 1 y column.
    n_dims = 7
    n_positions = 8
    n_embd = 64
    n_layer = 2
    n_head = 4
    B = 2

    key = jax.random.PRNGKey(0)
    kp, kx = jax.random.split(key)
    raw_params = init_params(kp, n_dims, n_positions, n_embd, n_layer, n_head)
    params = prepare_params(raw_params, n_dims, n_embd, n_head)

    # xs_ys: [B, n, n_dims + 1]  (last column is y)
    xs_ys = jax.random.normal(kx, (B, n_positions, n_dims + 1), jnp.float32)

    fwd = jax.jit(functools.partial(
        forward, n_dims=n_dims, n_embd=n_embd, n_head=n_head, n_layer=n_layer))
    y = fwd(params, xs_ys)
    jax.block_until_ready(y)
    assert y.shape == (B, n_positions)
    assert bool(jnp.all(jnp.isfinite(y)))
    print("KERNEL_OK")
</pallas_src>

<mosaic_0001>
module attributes {stable_mosaic.version = 11 : i64} {
  func.func @_fused_transformer_kernel(%arg0: i32, %arg1: memref<1x16x128xbf16, #tpu.memory_space<vmem>>, %arg2: memref<16x128xf32, #tpu.memory_space<vmem>>, %arg3: memref<128x128xbf16, #tpu.memory_space<vmem>>, %arg4: memref<1x128xf32, #tpu.memory_space<vmem>>, %arg5: memref<2x1x128xf32, #tpu.memory_space<vmem>>, %arg6: memref<2x1x128xf32, #tpu.memory_space<vmem>>, %arg7: memref<2x128x1536xbf16, #tpu.memory_space<vmem>>, %arg8: memref<2x1x1536xf32, #tpu.memory_space<vmem>>, %arg9: memref<2x512x128xbf16, #tpu.memory_space<vmem>>, %arg10: memref<2x1x128xf32, #tpu.memory_space<vmem>>, %arg11: memref<2x1x128xf32, #tpu.memory_space<vmem>>, %arg12: memref<2x1x128xf32, #tpu.memory_space<vmem>>, %arg13: memref<2x128x256xbf16, #tpu.memory_space<vmem>>, %arg14: memref<2x1x256xf32, #tpu.memory_space<vmem>>, %arg15: memref<2x256x128xbf16, #tpu.memory_space<vmem>>, %arg16: memref<2x1x128xf32, #tpu.memory_space<vmem>>, %arg17: memref<1x128xf32, #tpu.memory_space<vmem>>, %arg18: memref<1x128xf32, #tpu.memory_space<vmem>>, %arg19: memref<1x128xf32, #tpu.memory_space<vmem>>, %arg20: memref<1x1xf32, #tpu.memory_space<vmem>>, %arg21: memref<1x16x128xf32, #tpu.memory_space<vmem>>) attributes {dimension_semantics = [#tpu.dimension_semantics<parallel>], iteration_bounds = array<i64: 2>, scalar_prefetch = 0 : i64, scratch_operands = 0 : i64, tpu.core_type = #tpu.core_type<tc>, window_params = [{transform_indices = @transform_0, window_bounds = array<i64: 1, 16, 128>}, {pipeline_mode = #tpu.pipeline_mode<synchronous>, transform_indices = @transform_1, window_bounds = array<i64: 16, 128>}, {pipeline_mode = #tpu.pipeline_mode<synchronous>, transform_indices = @transform_2, window_bounds = array<i64: 128, 128>}, {pipeline_mode = #tpu.pipeline_mode<synchronous>, transform_indices = @transform_3, window_bounds = array<i64: 1, 128>}, {pipeline_mode = #tpu.pipeline_mode<synchronous>, transform_indices = @transform_4, window_bounds = array<i64: 2, 1, 128>}, {pipeline_mode = #tpu.pipeline_mode<synchronous>, transform_indices = @transform_5, window_bounds = array<i64: 2, 1, 128>}, {pipeline_mode = #tpu.pipeline_mode<synchronous>, transform_indices = @transform_6, window_bounds = array<i64: 2, 128, 1536>}, {pipeline_mode = #tpu.pipeline_mode<synchronous>, transform_indices = @transform_7, window_bounds = array<i64: 2, 1, 1536>}, {pipeline_mode = #tpu.pipeline_mode<synchronous>, transform_indices = @transform_8, window_bounds = array<i64: 2, 512, 128>}, {pipeline_mode = #tpu.pipeline_mode<synchronous>, transform_indices = @transform_9, window_bounds = array<i64: 2, 1, 128>}, {pipeline_mode = #tpu.pipeline_mode<synchronous>, transform_indices = @transform_10, window_bounds = array<i64: 2, 1, 128>}, {pipeline_mode = #tpu.pipeline_mode<synchronous>, transform_indices = @transform_11, window_bounds = array<i64: 2, 1, 128>}, {pipeline_mode = #tpu.pipeline_mode<synchronous>, transform_indices = @transform_12, window_bounds = array<i64: 2, 128, 256>}, {pipeline_mode = #tpu.pipeline_mode<synchronous>, transform_indices = @transform_13, window_bounds = array<i64: 2, 1, 256>}, {pipeline_mode = #tpu.pipeline_mode<synchronous>, transform_indices = @transform_14, window_bounds = array<i64: 2, 256, 128>}, {pipeline_mode = #tpu.pipeline_mode<synchronous>, transform_indices = @transform_15, window_bounds = array<i64: 2, 1, 128>}, {pipeline_mode = #tpu.pipeline_mode<synchronous>, transform_indices = @transform_16, window_bounds = array<i64: 1, 128>}, {pipeline_mode = #tpu.pipeline_mode<synchronous>, transform_indices = @transform_17, window_bounds = array<i64: 1, 128>}, {pipeline_mode = #tpu.pipeline_mode<synchronous>, transform_indices = @transform_18, window_bounds = array<i64: 1, 128>}, {pipeline_mode = #tpu.pipeline_mode<synchronous>, transform_indices = @transform_19, window_bounds = array<i64: 1, 1>}, {transform_indices = @transform_20, window_bounds = array<i64: 1, 16, 128>}]} {
    %0 = tpu.iota {dimensions = array<i32: 1>} : vector<1x128xi32>
    %c64_i32 = arith.constant 64 : i32
    %1 = vector.broadcast %c64_i32 : i32 to vector<1x128xi32>
    %2 = arith.cmpi slt, %0, %1 : vector<1x128xi32>
    %3 = arith.extui %2 : vector<1x128xi1> to vector<1x128xi32>
    %4 = arith.sitofp %3 : vector<1x128xi32> to vector<1x128xf32>
    %5 = tpu.iota {dimensions = array<i32: 0>} : vector<16x16xi32>
    %6 = tpu.iota {dimensions = array<i32: 1>} : vector<16x16xi32>
    %7 = arith.cmpi sge, %5, %6 : vector<16x16xi32>
    %cst = arith.constant 0.000000e+00 : f32
    %cst_0 = arith.constant -1.000000e+30 : f32
    %8 = vector.broadcast %cst : f32 to vector<16x16xf32>
    %9 = vector.broadcast %cst_0 : f32 to vector<16x16xf32>
    %10 = arith.select %7, %8, %9 : vector<16x16xi1>, vector<16x16xf32>
    %c0 = arith.constant 0 : index
    %c0_1 = arith.constant 0 : index
    %c0_2 = arith.constant 0 : index
    %11 = vector.load %arg1[%c0, %c0_1, %c0_2] : memref<1x16x128xbf16, #tpu.memory_space<vmem>>, vector<1x16x128xbf16>
    %12 = vector.shape_cast %11 : vector<1x16x128xbf16> to vector<16x128xbf16>
    %c0_3 = arith.constant 0 : index
    %c0_4 = arith.constant 0 : index
    %13 = vector.load %arg3[%c0_3, %c0_4] : memref<128x128xbf16, #tpu.memory_space<vmem>>, vector<128x128xbf16>
    %cst_5 = arith.constant dense<0.000000e+00> : vector<16x128xf32>
    %14 = tpu.matmul %12, %13, %cst_5 {dimension_numbers = #tpu.dot_dimension_numbers<[1], [0], [0], [1], [0, 0, 1, 1], [], []>} : vector<16x128xbf16>, vector<128x128xbf16>, vector<16x128xf32> -> vector<16x128xf32>
    %c0_6 = arith.constant 0 : index
    %c0_7 = arith.constant 0 : index
    %15 = vector.load %arg4[%c0_6, %c0_7] : memref<1x128xf32, #tpu.memory_space<vmem>>, vector<1x128xf32>
    %16 = vector.broadcast %15 : vector<1x128xf32> to vector<16x128xf32>
    %17 = arith.addf %14, %16 : vector<16x128xf32>
    %c0_8 = arith.constant 0 : index
    %c0_9 = arith.constant 0 : index
    %18 = vector.load %arg2[%c0_8, %c0_9] : memref<16x128xf32, #tpu.memory_space<vmem>>, vector<16x128xf32>
    %19 = arith.addf %17, %18 : vector<16x128xf32>
    %c0_10 = arith.constant 0 : index
    %c0_11 = arith.constant 0 : index
    %c0_12 = arith.constant 0 : index
    %20 = vector.load %arg5[%c0_10, %c0_11, %c0_12] : memref<2x1x128xf32, #tpu.memory_space<vmem>>, vector<1x1x128xf32>
    %21 = vector.shape_cast %20 : vector<1x1x128xf32> to vector<1x128xf32>
    %c0_13 = arith.constant 0 : index
    %c0_14 = arith.constant 0 : index
    %c0_15 = arith.constant 0 : index
    %22 = vector.load %arg6[%c0_13, %c0_14, %c0_15] : memref<2x1x128xf32, #tpu.memory_space<vmem>>, vector<1x1x128xf32>
    %23 = vector.shape_cast %22 : vector<1x1x128xf32> to vector<1x128xf32>
    %cst_16 = arith.constant dense<0.000000e+00> : vector<16xf32>
    %24 = vector.multi_reduction <add>, %19, %cst_16 [1] : vector<16x128xf32> to vector<16xf32>
    %25 = vector.shape_cast %24 : vector<16xf32> to vector<16x1xf32>
    %cst_17 = arith.constant 1.562500e-02 : f32
    %26 = vector.broadcast %cst_17 : f32 to vector<16x1xf32>
    %27 = arith.mulf %25, %26 : vector<16x1xf32>
    %28 = vector.broadcast %27 : vector<16x1xf32> to vector<16x128xf32>
    %29 = arith.subf %19, %28 : vector<16x128xf32>
    %30 = vector.broadcast %4 : vector<1x128xf32> to vector<16x128xf32>
    %31 = arith.mulf %29, %30 : vector<16x128xf32>
    %32 = arith.mulf %31, %31 : vector<16x128xf32>
    %cst_18 = arith.constant dense<0.000000e+00> : vector<16xf32>
    %33 = vector.multi_reduction <add>, %32, %cst_18 [1] : vector<16x128xf32> to vector<16xf32>
    %34 = vector.shape_cast %33 : vector<16xf32> to vector<16x1xf32>
    %cst_19 = arith.constant 1.562500e-02 : f32
    %35 = vector.broadcast %cst_19 : f32 to vector<16x1xf32>
    %36 = arith.mulf %34, %35 : vector<16x1xf32>
    %cst_20 = arith.constant 9.99999974E-6 : f32
    %37 = vector.broadcast %cst_20 : f32 to vector<16x1xf32>
    %38 = arith.addf %36, %37 : vector<16x1xf32>
    %39 = math.rsqrt %38 : vector<16x1xf32>
    %40 = vector.broadcast %39 : vector<16x1xf32> to vector<16x128xf32>
    %41 = arith.mulf %31, %40 : vector<16x128xf32>
    %42 = vector.broadcast %21 : vector<1x128xf32> to vector<16x128xf32>
    %43 = arith.mulf %41, %42 : vector<16x128xf32>
    %44 = vector.broadcast %23 : vector<1x128xf32> to vector<16x128xf32>
    %45 = arith.addf %43, %44 : vector<16x128xf32>
    %46 = arith.truncf %45 : vector<16x128xf32> to vector<16x128xbf16>
    %c0_21 = arith.constant 0 : index
    %c0_22 = arith.constant 0 : index
    %c0_23 = arith.constant 0 : index
    %47 = vector.load %arg7[%c0_21, %c0_22, %c0_23] : memref<2x128x1536xbf16, #tpu.memory_space<vmem>>, vector<1x128x1536xbf16>
    %48 = vector.shape_cast %47 : vector<1x128x1536xbf16> to vector<128x1536xbf16>
    %cst_24 = arith.constant dense<0.000000e+00> : vector<16x1536xf32>
    %49 = tpu.matmul %46, %48, %cst_24 {dimension_numbers = #tpu.dot_dimension_numbers<[1], [0], [0], [1], [0, 0, 1, 1], [], []>} : vector<16x128xbf16>, vector<128x1536xbf16>, vector<16x1536xf32> -> vector<16x1536xf32>
    %c0_25 = arith.constant 0 : index
    %c0_26 = arith.constant 0 : index
    %c0_27 = arith.constant 0 : index
    %50 = vector.load %arg8[%c0_25, %c0_26, %c0_27] : memref<2x1x1536xf32, #tpu.memory_space<vmem>>, vector<1x1x1536xf32>
    %51 = vector.shape_cast %50 : vector<1x1x1536xf32> to vector<1x1536xf32>
    %52 = vector.broadcast %51 : vector<1x1536xf32> to vector<16x1536xf32>
    %53 = arith.addf %49, %52 : vector<16x1536xf32>
    %54 = arith.truncf %53 : vector<16x1536xf32> to vector<16x1536xbf16>
    %55 = vector.extract_strided_slice %54 {offsets = [0, 0], sizes = [16, 128], strides = [1, 1]} : vector<16x1536xbf16> to vector<16x128xbf16>
    %56 = vector.extract_strided_slice %54 {offsets = [0, 512], sizes = [16, 128], strides = [1, 1]} : vector<16x1536xbf16> to vector<16x128xbf16>
    %57 = vector.extract_strided_slice %54 {offsets = [0, 1024], sizes = [16, 128], strides = [1, 1]} : vector<16x1536xbf16> to vector<16x128xbf16>
    %cst_28 = arith.constant dense<0.000000e+00> : vector<16x16xf32>
    %58 = tpu.matmul %55, %56, %cst_28 {dimension_numbers = #tpu.dot_dimension_numbers<[1], [1], [0], [0], [0, 0, 1, 0], [], []>} : vector<16x128xbf16>, vector<16x128xbf16>, vector<16x16xf32> -> vector<16x16xf32>
    %cst_29 = arith.constant 2.500000e-01 : f32
    %59 = vector.broadcast %cst_29 : f32 to vector<16x16xf32>
    %60 = arith.mulf %58, %59 : vector<16x16xf32>
    %61 = arith.addf %60, %10 : vector<16x16xf32>
    %cst_30 = arith.constant dense<0xFF800000> : vector<16xf32>
    %62 = vector.multi_reduction <maximumf>, %61, %cst_30 [1] : vector<16x16xf32> to vector<16xf32>
    %63 = vector.shape_cast %62 : vector<16xf32> to vector<16x1xf32>
    %64 = vector.broadcast %63 : vector<16x1xf32> to vector<16x16xf32>
    %65 = arith.subf %61, %64 : vector<16x16xf32>
    %66 = math.exp %65 : vector<16x16xf32>
    %cst_31 = arith.constant dense<0.000000e+00> : vector<16xf32>
    %67 = vector.multi_reduction <add>, %66, %cst_31 [1] : vector<16x16xf32> to vector<16xf32>
    %68 = vector.shape_cast %67 : vector<16xf32> to vector<16x1xf32>
    %69 = arith.truncf %66 : vector<16x16xf32> to vector<16x16xbf16>
    %cst_32 = arith.constant dense<0.000000e+00> : vector<16x128xf32>
    %70 = tpu.matmul %69, %57, %cst_32 {dimension_numbers = #tpu.dot_dimension_numbers<[1], [0], [0], [1], [0, 0, 1, 1], [], []>} : vector<16x16xbf16>, vector<16x128xbf16>, vector<16x128xf32> -> vector<16x128xf32>
    %71 = tpu.reciprocal %68 {approx = true} : vector<16x1xf32> -> vector<16x1xf32>
    %72 = vector.broadcast %71 : vector<16x1xf32> to vector<16x128xf32>
    %73 = arith.mulf %70, %72 : vector<16x128xf32>
    %74 = vector.extract_strided_slice %54 {offsets = [0, 128], sizes = [16, 128], strides = [1, 1]} : vector<16x1536xbf16> to vector<16x128xbf16>
    %75 = vector.extract_strided_slice %54 {offsets = [0, 640], sizes = [16, 128], strides = [1, 1]} : vector<16x1536xbf16> to vector<16x128xbf16>
    %76 = vector.extract_strided_slice %54 {offsets = [0, 1152], sizes = [16, 128], strides = [1, 1]} : vector<16x1536xbf16> to vector<16x128xbf16>
    %cst_33 = arith.constant dense<0.000000e+00> : vector<16x16xf32>
    %77 = tpu.matmul %74, %75, %cst_33 {dimension_numbers = #tpu.dot_dimension_numbers<[1], [1], [0], [0], [0, 0, 1, 0], [], []>} : vector<16x128xbf16>, vector<16x128xbf16>, vector<16x16xf32> -> vector<16x16xf32>
    %cst_34 = arith.constant 2.500000e-01 : f32
    %78 = vector.broadcast %cst_34 : f32 to vector<16x16xf32>
    %79 = arith.mulf %77, %78 : vector<16x16xf32>
    %80 = arith.addf %79, %10 : vector<16x16xf32>
    %cst_35 = arith.constant dense<0xFF800000> : vector<16xf32>
    %81 = vector.multi_reduction <maximumf>, %80, %cst_35 [1] : vector<16x16xf32> to vector<16xf32>
    %82 = vector.shape_cast %81 : vector<16xf32> to vector<16x1xf32>
    %83 = vector.broadcast %82 : vector<16x1xf32> to vector<16x16xf32>
    %84 = arith.subf %80, %83 : vector<16x16xf32>
    %85 = math.exp %84 : vector<16x16xf32>
    %cst_36 = arith.constant dense<0.000000e+00> : vector<16xf32>
    %86 = vector.multi_reduction <add>, %85, %cst_36 [1] : vector<16x16xf32> to vector<16xf32>
    %87 = vector.shape_cast %86 : vector<16xf32> to vector<16x1xf32>
    %88 = arith.truncf %85 : vector<16x16xf32> to vector<16x16xbf16>
    %cst_37 = arith.constant dense<0.000000e+00> : vector<16x128xf32>
    %89 = tpu.matmul %88, %76, %cst_37 {dimension_numbers = #tpu.dot_dimension_numbers<[1], [0], [0], [1], [0, 0, 1, 1], [], []>} : vector<16x16xbf16>, vector<16x128xbf16>, vector<16x128xf32> -> vector<16x128xf32>
    %90 = tpu.reciprocal %87 {approx = true} : vector<16x1xf32> -> vector<16x1xf32>
    %91 = vector.broadcast %90 : vector<16x1xf32> to vector<16x128xf32>
    %92 = arith.mulf %89, %91 : vector<16x128xf32>
    %93 = vector.extract_strided_slice %54 {offsets = [0, 256], sizes = [16, 128], strides = [1, 1]} : vector<16x1536xbf16> to vector<16x128xbf16>
    %94 = vector.extract_strided_slice %54 {offsets = [0, 768], sizes = [16, 128], strides = [1, 1]} : vector<16x1536xbf16> to vector<16x128xbf16>
    %95 = vector.extract_strided_slice %54 {offsets = [0, 1280], sizes = [16, 128], strides = [1, 1]} : vector<16x1536xbf16> to vector<16x128xbf16>
    %cst_38 = arith.constant dense<0.000000e+00> : vector<16x16xf32>
    %96 = tpu.matmul %93, %94, %cst_38 {dimension_numbers = #tpu.dot_dimension_numbers<[1], [1], [0], [0], [0, 0, 1, 0], [], []>} : vector<16x128xbf16>, vector<16x128xbf16>, vector<16x16xf32> -> vector<16x16xf32>
    %cst_39 = arith.constant 2.500000e-01 : f32
    %97 = vector.broadcast %cst_39 : f32 to vector<16x16xf32>
    %98 = arith.mulf %96, %97 : vector<16x16xf32>
    %99 = arith.addf %98, %10 : vector<16x16xf32>
    %cst_40 = arith.constant dense<0xFF800000> : vector<16xf32>
    %100 = vector.multi_reduction <maximumf>, %99, %cst_40 [1] : vector<16x16xf32> to vector<16xf32>
    %101 = vector.shape_cast %100 : vector<16xf32> to vector<16x1xf32>
    %102 = vector.broadcast %101 : vector<16x1xf32> to vector<16x16xf32>
    %103 = arith.subf %99, %102 : vector<16x16xf32>
    %104 = math.exp %103 : vector<16x16xf32>
    %cst_41 = arith.constant dense<0.000000e+00> : vector<16xf32>
    %105 = vector.multi_reduction <add>, %104, %cst_41 [1] : vector<16x16xf32> to vector<16xf32>
    %106 = vector.shape_cast %105 : vector<16xf32> to vector<16x1xf32>
    %107 = arith.truncf %104 : vector<16x16xf32> to vector<16x16xbf16>
    %cst_42 = arith.constant dense<0.000000e+00> : vector<16x128xf32>
    %108 = tpu.matmul %107, %95, %cst_42 {dimension_numbers = #tpu.dot_dimension_numbers<[1], [0], [0], [1], [0, 0, 1, 1], [], []>} : vector<16x16xbf16>, vector<16x128xbf16>, vector<16x128xf32> -> vector<16x128xf32>
    %109 = tpu.reciprocal %106 {approx = true} : vector<16x1xf32> -> vector<16x1xf32>
    %110 = vector.broadcast %109 : vector<16x1xf32> to vector<16x128xf32>
    %111 = arith.mulf %108, %110 : vector<16x128xf32>
    %112 = vector.extract_strided_slice %54 {offsets = [0, 384], sizes = [16, 128], strides = [1, 1]} : vector<16x1536xbf16> to vector<16x128xbf16>
    %113 = vector.extract_strided_slice %54 {offsets = [0, 896], sizes = [16, 128], strides = [1, 1]} : vector<16x1536xbf16> to vector<16x128xbf16>
    %114 = vector.extract_strided_slice %54 {offsets = [0, 1408], sizes = [16, 128], strides = [1, 1]} : vector<16x1536xbf16> to vector<16x128xbf16>
    %cst_43 = arith.constant dense<0.000000e+00> : vector<16x16xf32>
    %115 = tpu.matmul %112, %113, %cst_43 {dimension_numbers = #tpu.dot_dimension_numbers<[1], [1], [0], [0], [0, 0, 1, 0], [], []>} : vector<16x128xbf16>, vector<16x128xbf16>, vector<16x16xf32> -> vector<16x16xf32>
    %cst_44 = arith.constant 2.500000e-01 : f32
    %116 = vector.broadcast %cst_44 : f32 to vector<16x16xf32>
    %117 = arith.mulf %115, %116 : vector<16x16xf32>
    %118 = arith.addf %117, %10 : vector<16x16xf32>
    %cst_45 = arith.constant dense<0xFF800000> : vector<16xf32>
    %119 = vector.multi_reduction <maximumf>, %118, %cst_45 [1] : vector<16x16xf32> to vector<16xf32>
    %120 = vector.shape_cast %119 : vector<16xf32> to vector<16x1xf32>
    %121 = vector.broadcast %120 : vector<16x1xf32> to vector<16x16xf32>
    %122 = arith.subf %118, %121 : vector<16x16xf32>
    %123 = math.exp %122 : vector<16x16xf32>
    %cst_46 = arith.constant dense<0.000000e+00> : vector<16xf32>
    %124 = vector.multi_reduction <add>, %123, %cst_46 [1] : vector<16x16xf32> to vector<16xf32>
    %125 = vector.shape_cast %124 : vector<16xf32> to vector<16x1xf32>
    %126 = arith.truncf %123 : vector<16x16xf32> to vector<16x16xbf16>
    %cst_47 = arith.constant dense<0.000000e+00> : vector<16x128xf32>
    %127 = tpu.matmul %126, %114, %cst_47 {dimension_numbers = #tpu.dot_dimension_numbers<[1], [0], [0], [1], [0, 0, 1, 1], [], []>} : vector<16x16xbf16>, vector<16x128xbf16>, vector<16x128xf32> -> vector<16x128xf32>
    %128 = tpu.reciprocal %125 {approx = true} : vector<16x1xf32> -> vector<16x1xf32>
    %129 = vector.broadcast %128 : vector<16x1xf32> to vector<16x128xf32>
    %130 = arith.mulf %127, %129 : vector<16x128xf32>
    %131 = tpu.concatenate %73, %92, %111, %130 in 1 : vector<16x128xf32>, vector<16x128xf32>, vector<16x128xf32>, vector<16x128xf32> -> vector<16x512xf32>
    %132 = arith.truncf %131 : vector<16x512xf32> to vector<16x512xbf16>
    %c0_48 = arith.constant 0 : index
    %c0_49 = arith.constant 0 : index
    %c0_50 = arith.constant 0 : index
    %133 = vector.load %arg9[%c0_48, %c0_49, %c0_50] : memref<2x512x128xbf16, #tpu.memory_space<vmem>>, vector<1x512x128xbf16>
    %134 = vector.shape_cast %133 : vector<1x512x128xbf16> to vector<512x128xbf16>
    %cst_51 = arith.constant dense<0.000000e+00> : vector<16x128xf32>
    %135 = tpu.matmul %132, %134, %cst_51 {dimension_numbers = #tpu.dot_dimension_numbers<[1], [0], [0], [1], [0, 0, 1, 1], [], []>} : vector<16x512xbf16>, vector<512x128xbf16>, vector<16x128xf32> -> vector<16x128xf32>
    %136 = arith.addf %19, %135 : vector<16x128xf32>
    %c0_52 = arith.constant 0 : index
    %c0_53 = arith.constant 0 : index
    %c0_54 = arith.constant 0 : index
    %137 = vector.load %arg10[%c0_52, %c0_53, %c0_54] : memref<2x1x128xf32, #tpu.memory_space<vmem>>, vector<1x1x128xf32>
    %138 = vector.shape_cast %137 : vector<1x1x128xf32> to vector<1x128xf32>
    %139 = vector.broadcast %138 : vector<1x128xf32> to vector<16x128xf32>
    %140 = arith.addf %136, %139 : vector<16x128xf32>
    %c0_55 = arith.constant 0 : index
    %c0_56 = arith.constant 0 : index
    %c0_57 = arith.constant 0 : index
    %141 = vector.load %arg11[%c0_55, %c0_56, %c0_57] : memref<2x1x128xf32, #tpu.memory_space<vmem>>, vector<1x1x128xf32>
    %142 = vector.shape_cast %141 : vector<1x1x128xf32> to vector<1x128xf32>
    %c0_58 = arith.constant 0 : index
    %c0_59 = arith.constant 0 : index
    %c0_60 = arith.constant 0 : index
    %143 = vector.load %arg12[%c0_58, %c0_59, %c0_60] : memref<2x1x128xf32, #tpu.memory_space<vmem>>, vector<1x1x128xf32>
    %144 = vector.shape_cast %143 : vector<1x1x128xf32> to vector<1x128xf32>
    %cst_61 = arith.constant dense<0.000000e+00> : vector<16xf32>
    %145 = vector.multi_reduction <add>, %140, %cst_61 [1] : vector<16x128xf32> to vector<16xf32>
    %146 = vector.shape_cast %145 : vector<16xf32> to vector<16x1xf32>
    %cst_62 = arith.constant 1.562500e-02 : f32
    %147 = vector.broadcast %cst_62 : f32 to vector<16x1xf32>
    %148 = arith.mulf %146, %147 : vector<16x1xf32>
    %149 = vector.broadcast %148 : vector<16x1xf32> to vector<16x128xf32>
    %150 = arith.subf %140, %149 : vector<16x128xf32>
    %151 = vector.broadcast %4 : vector<1x128xf32> to vector<16x128xf32>
    %152 = arith.mulf %150, %151 : vector<16x128xf32>
    %153 = arith.mulf %152, %152 : vector<16x128xf32>
    %cst_63 = arith.constant dense<0.000000e+00> : vector<16xf32>
    %154 = vector.multi_reduction <add>, %153, %cst_63 [1] : vector<16x128xf32> to vector<16xf32>
    %155 = vector.shape_cast %154 : vector<16xf32> to vector<16x1xf32>
    %cst_64 = arith.constant 1.562500e-02 : f32
    %156 = vector.broadcast %cst_64 : f32 to vector<16x1xf32>
    %157 = arith.mulf %155, %156 : vector<16x1xf32>
    %cst_65 = arith.constant 9.99999974E-6 : f32
    %158 = vector.broadcast %cst_65 : f32 to vector<16x1xf32>
    %159 = arith.addf %157, %158 : vector<16x1xf32>
    %160 = math.rsqrt %159 : vector<16x1xf32>
    %161 = vector.broadcast %160 : vector<16x1xf32> to vector<16x128xf32>
    %162 = arith.mulf %152, %161 : vector<16x128xf32>
    %163 = vector.broadcast %142 : vector<1x128xf32> to vector<16x128xf32>
    %164 = arith.mulf %162, %163 : vector<16x128xf32>
    %165 = vector.broadcast %144 : vector<1x128xf32> to vector<16x128xf32>
    %166 = arith.addf %164, %165 : vector<16x128xf32>
    %167 = arith.truncf %166 : vector<16x128xf32> to vector<16x128xbf16>
    %c0_66 = arith.constant 0 : index
    %c0_67 = arith.constant 0 : index
    %c0_68 = arith.constant 0 : index
    %168 = vector.load %arg13[%c0_66, %c0_67, %c0_68] : memref<2x128x256xbf16, #tpu.memory_space<vmem>>, vector<1x128x256xbf16>
    %169 = vector.shape_cast %168 : vector<1x128x256xbf16> to vector<128x256xbf16>
    %cst_69 = arith.constant dense<0.000000e+00> : vector<16x256xf32>
    %170 = tpu.matmul %167, %169, %cst_69 {dimension_numbers = #tpu.dot_dimension_numbers<[1], [0], [0], [1], [0, 0, 1, 1], [], []>} : vector<16x128xbf16>, vector<128x256xbf16>, vector<16x256xf32> -> vector<16x256xf32>
    %c0_70 = arith.constant 0 : index
    %c0_71 = arith.constant 0 : index
    %c0_72 = arith.constant 0 : index
    %171 = vector.load %arg14[%c0_70, %c0_71, %c0_72] : memref<2x1x256xf32, #tpu.memory_space<vmem>>, vector<1x1x256xf32>
    %172 = vector.shape_cast %171 : vector<1x1x256xf32> to vector<1x256xf32>
    %173 = vector.broadcast %172 : vector<1x256xf32> to vector<16x256xf32>
    %174 = arith.addf %170, %173 : vector<16x256xf32>
    %175 = arith.mulf %174, %174 : vector<16x256xf32>
    %176 = arith.mulf %174, %175 : vector<16x256xf32>
    %cst_73 = arith.constant 4.471500e-02 : f32
    %177 = vector.broadcast %cst_73 : f32 to vector<16x256xf32>
    %178 = arith.mulf %177, %176 : vector<16x256xf32>
    %179 = arith.addf %174, %178 : vector<16x256xf32>
    %cst_74 = arith.constant 0.797884583 : f32
    %180 = vector.broadcast %cst_74 : f32 to vector<16x256xf32>
    %181 = arith.mulf %180, %179 : vector<16x256xf32>
    %182 = math.tanh %181 : vector<16x256xf32>
    %cst_75 = arith.constant 1.000000e+00 : f32
    %183 = vector.broadcast %cst_75 : f32 to vector<16x256xf32>
    %184 = arith.addf %183, %182 : vector<16x256xf32>
    %cst_76 = arith.constant 5.000000e-01 : f32
    %185 = vector.broadcast %cst_76 : f32 to vector<16x256xf32>
    %186 = arith.mulf %185, %184 : vector<16x256xf32>
    %187 = arith.mulf %174, %186 : vector<16x256xf32>
    %188 = arith.truncf %187 : vector<16x256xf32> to vector<16x256xbf16>
    %c0_77 = arith.constant 0 : index
    %c0_78 = arith.constant 0 : index
    %c0_79 = arith.constant 0 : index
    %189 = vector.load %arg15[%c0_77, %c0_78, %c0_79] : memref<2x256x128xbf16, #tpu.memory_space<vmem>>, vector<1x256x128xbf16>
    %190 = vector.shape_cast %189 : vector<1x256x128xbf16> to vector<256x128xbf16>
    %cst_80 = arith.constant dense<0.000000e+00> : vector<16x128xf32>
    %191 = tpu.matmul %188, %190, %cst_80 {dimension_numbers = #tpu.dot_dimension_numbers<[1], [0], [0], [1], [0, 0, 1, 1], [], []>} : vector<16x256xbf16>, vector<256x128xbf16>, vector<16x128xf32> -> vector<16x128xf32>
    %192 = arith.addf %140, %191 : vector<16x128xf32>
    %c0_81 = arith.constant 0 : index
    %c0_82 = arith.constant 0 : index
    %c0_83 = arith.constant 0 : index
    %193 = vector.load %arg16[%c0_81, %c0_82, %c0_83] : memref<2x1x128xf32, #tpu.memory_space<vmem>>, vector<1x1x128xf32>
    %194 = vector.shape_cast %193 : vector<1x1x128xf32> to vector<1x128xf32>
    %195 = vector.broadcast %194 : vector<1x128xf32> to vector<16x128xf32>
    %196 = arith.addf %192, %195 : vector<16x128xf32>
    %c1 = arith.constant 1 : index
    %c0_84 = arith.constant 0 : index
    %c0_85 = arith.constant 0 : index
    %197 = vector.load %arg5[%c1, %c0_84, %c0_85] : memref<2x1x128xf32, #tpu.memory_space<vmem>>, vector<1x1x128xf32>
    %198 = vector.shape_cast %197 : vector<1x1x128xf32> to vector<1x128xf32>
    %c1_86 = arith.constant 1 : index
    %c0_87 = arith.constant 0 : index
    %c0_88 = arith.constant 0 : index
    %199 = vector.load %arg6[%c1_86, %c0_87, %c0_88] : memref<2x1x128xf32, #tpu.memory_space<vmem>>, vector<1x1x128xf32>
    %200 = vector.shape_cast %199 : vector<1x1x128xf32> to vector<1x128xf32>
    %cst_89 = arith.constant dense<0.000000e+00> : vector<16xf32>
    %201 = vector.multi_reduction <add>, %196, %cst_89 [1] : vector<16x128xf32> to vector<16xf32>
    %202 = vector.shape_cast %201 : vector<16xf32> to vector<16x1xf32>
    %cst_90 = arith.constant 1.562500e-02 : f32
    %203 = vector.broadcast %cst_90 : f32 to vector<16x1xf32>
    %204 = arith.mulf %202, %203 : vector<16x1xf32>
    %205 = vector.broadcast %204 : vector<16x1xf32> to vector<16x128xf32>
    %206 = arith.subf %196, %205 : vector<16x128xf32>
    %207 = vector.broadcast %4 : vector<1x128xf32> to vector<16x128xf32>
    %208 = arith.mulf %206, %207 : vector<16x128xf32>
    %209 = arith.mulf %208, %208 : vector<16x128xf32>
    %cst_91 = arith.constant dense<0.000000e+00> : vector<16xf32>
    %210 = vector.multi_reduction <add>, %209, %cst_91 [1] : vector<16x128xf32> to vector<16xf32>
    %211 = vector.shape_cast %210 : vector<16xf32> to vector<16x1xf32>
    %cst_92 = arith.constant 1.562500e-02 : f32
    %212 = vector.broadcast %cst_92 : f32 to vector<16x1xf32>
    %213 = arith.mulf %211, %212 : vector<16x1xf32>
    %cst_93 = arith.constant 9.99999974E-6 : f32
    %214 = vector.broadcast %cst_93 : f32 to vector<16x1xf32>
    %215 = arith.addf %213, %214 : vector<16x1xf32>
    %216 = math.rsqrt %215 : vector<16x1xf32>
    %217 = vector.broadcast %216 : vector<16x1xf32> to vector<16x128xf32>
    %218 = arith.mulf %208, %217 : vector<16x128xf32>
    %219 = vector.broadcast %198 : vector<1x128xf32> to vector<16x128xf32>
    %220 = arith.mulf %218, %219 : vector<16x128xf32>
    %221 = vector.broadcast %200 : vector<1x128xf32> to vector<16x128xf32>
    %222 = arith.addf %220, %221 : vector<16x128xf32>
    %223 = arith.truncf %222 : vector<16x128xf32> to vector<16x128xbf16>
    %c1_94 = arith.constant 1 : index
    %c0_95 = arith.constant 0 : index
    %c0_96 = arith.constant 0 : index
    %224 = vector.load %arg7[%c1_94, %c0_95, %c0_96] : memref<2x128x1536xbf16, #tpu.memory_space<vmem>>, vector<1x128x1536xbf16>
    %225 = vector.shape_cast %224 : vector<1x128x1536xbf16> to vector<128x1536xbf16>
    %cst_97 = arith.constant dense<0.000000e+00> : vector<16x1536xf32>
    %226 = tpu.matmul %223, %225, %cst_97 {dimension_numbers = #tpu.dot_dimension_numbers<[1], [0], [0], [1], [0, 0, 1, 1], [], []>} : vector<16x128xbf16>, vector<128x1536xbf16>, vector<16x1536xf32> -> vector<16x1536xf32>
    %c1_98 = arith.constant 1 : index
    %c0_99 = arith.constant 0 : index
    %c0_100 = arith.constant 0 : index
    %227 = vector.load %arg8[%c1_98, %c0_99, %c0_100] : memref<2x1x1536xf32, #tpu.memory_space<vmem>>, vector<1x1x1536xf32>
    %228 = vector.shape_cast %227 : vector<1x1x1536xf32> to vector<1x1536xf32>
    %229 = vector.broadcast %228 : vector<1x1536xf32> to vector<16x1536xf32>
    %230 = arith.addf %226, %229 : vector<16x1536xf32>
    %231 = arith.truncf %230 : vector<16x1536xf32> to vector<16x1536xbf16>
    %232 = vector.extract_strided_slice %231 {offsets = [0, 0], sizes = [16, 128], strides = [1, 1]} : vector<16x1536xbf16> to vector<16x128xbf16>
    %233 = vector.extract_strided_slice %231 {offsets = [0, 512], sizes = [16, 128], strides = [1, 1]} : vector<16x1536xbf16> to vector<16x128xbf16>
    %234 = vector.extract_strided_slice %231 {offsets = [0, 1024], sizes = [16, 128], strides = [1, 1]} : vector<16x1536xbf16> to vector<16x128xbf16>
    %cst_101 = arith.constant dense<0.000000e+00> : vector<16x16xf32>
    %235 = tpu.matmul %232, %233, %cst_101 {dimension_numbers = #tpu.dot_dimension_numbers<[1], [1], [0], [0], [0, 0, 1, 0], [], []>} : vector<16x128xbf16>, vector<16x128xbf16>, vector<16x16xf32> -> vector<16x16xf32>
    %cst_102 = arith.constant 2.500000e-01 : f32
    %236 = vector.broadcast %cst_102 : f32 to vector<16x16xf32>
    %237 = arith.mulf %235, %236 : vector<16x16xf32>
    %238 = arith.addf %237, %10 : vector<16x16xf32>
    %cst_103 = arith.constant dense<0xFF800000> : vector<16xf32>
    %239 = vector.multi_reduction <maximumf>, %238, %cst_103 [1] : vector<16x16xf32> to vector<16xf32>
    %240 = vector.shape_cast %239 : vector<16xf32> to vector<16x1xf32>
    %241 = vector.broadcast %240 : vector<16x1xf32> to vector<16x16xf32>
    %242 = arith.subf %238, %241 : vector<16x16xf32>
    %243 = math.exp %242 : vector<16x16xf32>
    %cst_104 = arith.constant dense<0.000000e+00> : vector<16xf32>
    %244 = vector.multi_reduction <add>, %243, %cst_104 [1] : vector<16x16xf32> to vector<16xf32>
    %245 = vector.shape_cast %244 : vector<16xf32> to vector<16x1xf32>
    %246 = arith.truncf %243 : vector<16x16xf32> to vector<16x16xbf16>
    %cst_105 = arith.constant dense<0.000000e+00> : vector<16x128xf32>
    %247 = tpu.matmul %246, %234, %cst_105 {dimension_numbers = #tpu.dot_dimension_numbers<[1], [0], [0], [1], [0, 0, 1, 1], [], []>} : vector<16x16xbf16>, vector<16x128xbf16>, vector<16x128xf32> -> vector<16x128xf32>
    %248 = tpu.reciprocal %245 {approx = true} : vector<16x1xf32> -> vector<16x1xf32>
    %249 = vector.broadcast %248 : vector<16x1xf32> to vector<16x128xf32>
    %250 = arith.mulf %247, %249 : vector<16x128xf32>
    %251 = vector.extract_strided_slice %231 {offsets = [0, 128], sizes = [16, 128], strides = [1, 1]} : vector<16x1536xbf16> to vector<16x128xbf16>
    %252 = vector.extract_strided_slice %231 {offsets = [0, 640], sizes = [16, 128], strides = [1, 1]} : vector<16x1536xbf16> to vector<16x128xbf16>
    %253 = vector.extract_strided_slice %231 {offsets = [0, 1152], sizes = [16, 128], strides = [1, 1]} : vector<16x1536xbf16> to vector<16x128xbf16>
    %cst_106 = arith.constant dense<0.000000e+00> : vector<16x16xf32>
    %254 = tpu.matmul %251, %252, %cst_106 {dimension_numbers = #tpu.dot_dimension_numbers<[1], [1], [0], [0], [0, 0, 1, 0], [], []>} : vector<16x128xbf16>, vector<16x128xbf16>, vector<16x16xf32> -> vector<16x16xf32>
    %cst_107 = arith.constant 2.500000e-01 : f32
    %255 = vector.broadcast %cst_107 : f32 to vector<16x16xf32>
    %256 = arith.mulf %254, %255 : vector<16x16xf32>
    %257 = arith.addf %256, %10 : vector<16x16xf32>
    %cst_108 = arith.constant dense<0xFF800000> : vector<16xf32>
    %258 = vector.multi_reduction <maximumf>, %257, %cst_108 [1] : vector<16x16xf32> to vector<16xf32>
    %259 = vector.shape_cast %258 : vector<16xf32> to vector<16x1xf32>
    %260 = vector.broadcast %259 : vector<16x1xf32> to vector<16x16xf32>
    %261 = arith.subf %257, %260 : vector<16x16xf32>
    %262 = math.exp %261 : vector<16x16xf32>
    %cst_109 = arith.constant dense<0.000000e+00> : vector<16xf32>
    %263 = vector.multi_reduction <add>, %262, %cst_109 [1] : vector<16x16xf32> to vector<16xf32>
    %264 = vector.shape_cast %263 : vector<16xf32> to vector<16x1xf32>
    %265 = arith.truncf %262 : vector<16x16xf32> to vector<16x16xbf16>
    %cst_110 = arith.constant dense<0.000000e+00> : vector<16x128xf32>
    %266 = tpu.matmul %265, %253, %cst_110 {dimension_numbers = #tpu.dot_dimension_numbers<[1], [0], [0], [1], [0, 0, 1, 1], [], []>} : vector<16x16xbf16>, vector<16x128xbf16>, vector<16x128xf32> -> vector<16x128xf32>
    %267 = tpu.reciprocal %264 {approx = true} : vector<16x1xf32> -> vector<16x1xf32>
    %268 = vector.broadcast %267 : vector<16x1xf32> to vector<16x128xf32>
    %269 = arith.mulf %266, %268 : vector<16x128xf32>
    %270 = vector.extract_strided_slice %231 {offsets = [0, 256], sizes = [16, 128], strides = [1, 1]} : vector<16x1536xbf16> to vector<16x128xbf16>
    %271 = vector.extract_strided_slice %231 {offsets = [0, 768], sizes = [16, 128], strides = [1, 1]} : vector<16x1536xbf16> to vector<16x128xbf16>
    %272 = vector.extract_strided_slice %231 {offsets = [0, 1280], sizes = [16, 128], strides = [1, 1]} : vector<16x1536xbf16> to vector<16x128xbf16>
    %cst_111 = arith.constant dense<0.000000e+00> : vector<16x16xf32>
    %273 = tpu.matmul %270, %271, %cst_111 {dimension_numbers = #tpu.dot_dimension_numbers<[1], [1], [0], [0], [0, 0, 1, 0], [], []>} : vector<16x128xbf16>, vector<16x128xbf16>, vector<16x16xf32> -> vector<16x16xf32>
    %cst_112 = arith.constant 2.500000e-01 : f32
    %274 = vector.broadcast %cst_112 : f32 to vector<16x16xf32>
    %275 = arith.mulf %273, %274 : vector<16x16xf32>
    %276 = arith.addf %275, %10 : vector<16x16xf32>
    %cst_113 = arith.constant dense<0xFF800000> : vector<16xf32>
    %277 = vector.multi_reduction <maximumf>, %276, %cst_113 [1] : vector<16x16xf32> to vector<16xf32>
    %278 = vector.shape_cast %277 : vector<16xf32> to vector<16x1xf32>
    %279 = vector.broadcast %278 : vector<16x1xf32> to vector<16x16xf32>
    %280 = arith.subf %276, %279 : vector<16x16xf32>
    %281 = math.exp %280 : vector<16x16xf32>
    %cst_114 = arith.constant dense<0.000000e+00> : vector<16xf32>
    %282 = vector.multi_reduction <add>, %281, %cst_114 [1] : vector<16x16xf32> to vector<16xf32>
    %283 = vector.shape_cast %282 : vector<16xf32> to vector<16x1xf32>
    %284 = arith.truncf %281 : vector<16x16xf32> to vector<16x16xbf16>
    %cst_115 = arith.constant dense<0.000000e+00> : vector<16x128xf32>
    %285 = tpu.matmul %284, %272, %cst_115 {dimension_numbers = #tpu.dot_dimension_numbers<[1], [0], [0], [1], [0, 0, 1, 1], [], []>} : vector<16x16xbf16>, vector<16x128xbf16>, vector<16x128xf32> -> vector<16x128xf32>
    %286 = tpu.reciprocal %283 {approx = true} : vector<16x1xf32> -> vector<16x1xf32>
    %287 = vector.broadcast %286 : vector<16x1xf32> to vector<16x128xf32>
    %288 = arith.mulf %285, %287 : vector<16x128xf32>
    %289 = vector.extract_strided_slice %231 {offsets = [0, 384], sizes = [16, 128], strides = [1, 1]} : vector<16x1536xbf16> to vector<16x128xbf16>
    %290 = vector.extract_strided_slice %231 {offsets = [0, 896], sizes = [16, 128], strides = [1, 1]} : vector<16x1536xbf16> to vector<16x128xbf16>
    %291 = vector.extract_strided_slice %231 {offsets = [0, 1408], sizes = [16, 128], strides = [1, 1]} : vector<16x1536xbf16> to vector<16x128xbf16>
    %cst_116 = arith.constant dense<0.000000e+00> : vector<16x16xf32>
    %292 = tpu.matmul %289, %290, %cst_116 {dimension_numbers = #tpu.dot_dimension_numbers<[1], [1], [0], [0], [0, 0, 1, 0], [], []>} : vector<16x128xbf16>, vector<16x128xbf16>, vector<16x16xf32> -> vector<16x16xf32>
    %cst_117 = arith.constant 2.500000e-01 : f32
    %293 = vector.broadcast %cst_117 : f32 to vector<16x16xf32>
    %294 = arith.mulf %292, %293 : vector<16x16xf32>
    %295 = arith.addf %294, %10 : vector<16x16xf32>
    %cst_118 = arith.constant dense<0xFF800000> : vector<16xf32>
    %296 = vector.multi_reduction <maximumf>, %295, %cst_118 [1] : vector<16x16xf32> to vector<16xf32>
    %297 = vector.shape_cast %296 : vector<16xf32> to vector<16x1xf32>
    %298 = vector.broadcast %297 : vector<16x1xf32> to vector<16x16xf32>
    %299 = arith.subf %295, %298 : vector<16x16xf32>
    %300 = math.exp %299 : vector<16x16xf32>
    %cst_119 = arith.constant dense<0.000000e+00> : vector<16xf32>
    %301 = vector.multi_reduction <add>, %300, %cst_119 [1] : vector<16x16xf32> to vector<16xf32>
    %302 = vector.shape_cast %301 : vector<16xf32> to vector<16x1xf32>
    %303 = arith.truncf %300 : vector<16x16xf32> to vector<16x16xbf16>
    %cst_120 = arith.constant dense<0.000000e+00> : vector<16x128xf32>
    %304 = tpu.matmul %303, %291, %cst_120 {dimension_numbers = #tpu.dot_dimension_numbers<[1], [0], [0], [1], [0, 0, 1, 1], [], []>} : vector<16x16xbf16>, vector<16x128xbf16>, vector<16x128xf32> -> vector<16x128xf32>
    %305 = tpu.reciprocal %302 {approx = true} : vector<16x1xf32> -> vector<16x1xf32>
    %306 = vector.broadcast %305 : vector<16x1xf32> to vector<16x128xf32>
    %307 = arith.mulf %304, %306 : vector<16x128xf32>
    %308 = tpu.concatenate %250, %269, %288, %307 in 1 : vector<16x128xf32>, vector<16x128xf32>, vector<16x128xf32>, vector<16x128xf32> -> vector<16x512xf32>
    %309 = arith.truncf %308 : vector<16x512xf32> to vector<16x512xbf16>
    %c1_121 = arith.constant 1 : index
    %c0_122 = arith.constant 0 : index
    %c0_123 = arith.constant 0 : index
    %310 = vector.load %arg9[%c1_121, %c0_122, %c0_123] : memref<2x512x128xbf16, #tpu.memory_space<vmem>>, vector<1x512x128xbf16>
    %311 = vector.shape_cast %310 : vector<1x512x128xbf16> to vector<512x128xbf16>
    %cst_124 = arith.constant dense<0.000000e+00> : vector<16x128xf32>
    %312 = tpu.matmul %309, %311, %cst_124 {dimension_numbers = #tpu.dot_dimension_numbers<[1], [0], [0], [1], [0, 0, 1, 1], [], []>} : vector<16x512xbf16>, vector<512x128xbf16>, vector<16x128xf32> -> vector<16x128xf32>
    %313 = arith.addf %196, %312 : vector<16x128xf32>
    %c1_125 = arith.constant 1 : index
    %c0_126 = arith.constant 0 : index
    %c0_127 = arith.constant 0 : index
    %314 = vector.load %arg10[%c1_125, %c0_126, %c0_127] : memref<2x1x128xf32, #tpu.memory_space<vmem>>, vector<1x1x128xf32>
    %315 = vector.shape_cast %314 : vector<1x1x128xf32> to vector<1x128xf32>
    %316 = vector.broadcast %315 : vector<1x128xf32> to vector<16x128xf32>
    %317 = arith.addf %313, %316 : vector<16x128xf32>
    %c1_128 = arith.constant 1 : index
    %c0_129 = arith.constant 0 : index
    %c0_130 = arith.constant 0 : index
    %318 = vector.load %arg11[%c1_128, %c0_129, %c0_130] : memref<2x1x128xf32, #tpu.memory_space<vmem>>, vector<1x1x128xf32>
    %319 = vector.shape_cast %318 : vector<1x1x128xf32> to vector<1x128xf32>
    %c1_131 = arith.constant 1 : index
    %c0_132 = arith.constant 0 : index
    %c0_133 = arith.constant 0 : index
    %320 = vector.load %arg12[%c1_131, %c0_132, %c0_133] : memref<2x1x128xf32, #tpu.memory_space<vmem>>, vector<1x1x128xf32>
    %321 = vector.shape_cast %320 : vector<1x1x128xf32> to vector<1x128xf32>
    %cst_134 = arith.constant dense<0.000000e+00> : vector<16xf32>
    %322 = vector.multi_reduction <add>, %317, %cst_134 [1] : vector<16x128xf32> to vector<16xf32>
    %323 = vector.shape_cast %322 : vector<16xf32> to vector<16x1xf32>
    %cst_135 = arith.constant 1.562500e-02 : f32
    %324 = vector.broadcast %cst_135 : f32 to vector<16x1xf32>
    %325 = arith.mulf %323, %324 : vector<16x1xf32>
    %326 = vector.broadcast %325 : vector<16x1xf32> to vector<16x128xf32>
    %327 = arith.subf %317, %326 : vector<16x128xf32>
    %328 = vector.broadcast %4 : vector<1x128xf32> to vector<16x128xf32>
    %329 = arith.mulf %327, %328 : vector<16x128xf32>
    %330 = arith.mulf %329, %329 : vector<16x128xf32>
    %cst_136 = arith.constant dense<0.000000e+00> : vector<16xf32>
    %331 = vector.multi_reduction <add>, %330, %cst_136 [1] : vector<16x128xf32> to vector<16xf32>
    %332 = vector.shape_cast %331 : vector<16xf32> to vector<16x1xf32>
    %cst_137 = arith.constant 1.562500e-02 : f32
    %333 = vector.broadcast %cst_137 : f32 to vector<16x1xf32>
    %334 = arith.mulf %332, %333 : vector<16x1xf32>
    %cst_138 = arith.constant 9.99999974E-6 : f32
    %335 = vector.broadcast %cst_138 : f32 to vector<16x1xf32>
    %336 = arith.addf %334, %335 : vector<16x1xf32>
    %337 = math.rsqrt %336 : vector<16x1xf32>
    %338 = vector.broadcast %337 : vector<16x1xf32> to vector<16x128xf32>
    %339 = arith.mulf %329, %338 : vector<16x128xf32>
    %340 = vector.broadcast %319 : vector<1x128xf32> to vector<16x128xf32>
    %341 = arith.mulf %339, %340 : vector<16x128xf32>
    %342 = vector.broadcast %321 : vector<1x128xf32> to vector<16x128xf32>
    %343 = arith.addf %341, %342 : vector<16x128xf32>
    %344 = arith.truncf %343 : vector<16x128xf32> to vector<16x128xbf16>
    %c1_139 = arith.constant 1 : index
    %c0_140 = arith.constant 0 : index
    %c0_141 = arith.constant 0 : index
    %345 = vector.load %arg13[%c1_139, %c0_140, %c0_141] : memref<2x128x256xbf16, #tpu.memory_space<vmem>>, vector<1x128x256xbf16>
    %346 = vector.shape_cast %345 : vector<1x128x256xbf16> to vector<128x256xbf16>
    %cst_142 = arith.constant dense<0.000000e+00> : vector<16x256xf32>
    %347 = tpu.matmul %344, %346, %cst_142 {dimension_numbers = #tpu.dot_dimension_numbers<[1], [0], [0], [1], [0, 0, 1, 1], [], []>} : vector<16x128xbf16>, vector<128x256xbf16>, vector<16x256xf32> -> vector<16x256xf32>
    %c1_143 = arith.constant 1 : index
    %c0_144 = arith.constant 0 : index
    %c0_145 = arith.constant 0 : index
    %348 = vector.load %arg14[%c1_143, %c0_144, %c0_145] : memref<2x1x256xf32, #tpu.memory_space<vmem>>, vector<1x1x256xf32>
    %349 = vector.shape_cast %348 : vector<1x1x256xf32> to vector<1x256xf32>
    %350 = vector.broadcast %349 : vector<1x256xf32> to vector<16x256xf32>
    %351 = arith.addf %347, %350 : vector<16x256xf32>
    %352 = arith.mulf %351, %351 : vector<16x256xf32>
    %353 = arith.mulf %351, %352 : vector<16x256xf32>
    %cst_146 = arith.constant 4.471500e-02 : f32
    %354 = vector.broadcast %cst_146 : f32 to vector<16x256xf32>
    %355 = arith.mulf %354, %353 : vector<16x256xf32>
    %356 = arith.addf %351, %355 : vector<16x256xf32>
    %cst_147 = arith.constant 0.797884583 : f32
    %357 = vector.broadcast %cst_147 : f32 to vector<16x256xf32>
    %358 = arith.mulf %357, %356 : vector<16x256xf32>
    %359 = math.tanh %358 : vector<16x256xf32>
    %cst_148 = arith.constant 1.000000e+00 : f32
    %360 = vector.broadcast %cst_148 : f32 to vector<16x256xf32>
    %361 = arith.addf %360, %359 : vector<16x256xf32>
    %cst_149 = arith.constant 5.000000e-01 : f32
    %362 = vector.broadcast %cst_149 : f32 to vector<16x256xf32>
    %363 = arith.mulf %362, %361 : vector<16x256xf32>
    %364 = arith.mulf %351, %363 : vector<16x256xf32>
    %365 = arith.truncf %364 : vector<16x256xf32> to vector<16x256xbf16>
    %c1_150 = arith.constant 1 : index
    %c0_151 = arith.constant 0 : index
    %c0_152 = arith.constant 0 : index
    %366 = vector.load %arg15[%c1_150, %c0_151, %c0_152] : memref<2x256x128xbf16, #tpu.memory_space<vmem>>, vector<1x256x128xbf16>
    %367 = vector.shape_cast %366 : vector<1x256x128xbf16> to vector<256x128xbf16>
    %cst_153 = arith.constant dense<0.000000e+00> : vector<16x128xf32>
    %368 = tpu.matmul %365, %367, %cst_153 {dimension_numbers = #tpu.dot_dimension_numbers<[1], [0], [0], [1], [0, 0, 1, 1], [], []>} : vector<16x256xbf16>, vector<256x128xbf16>, vector<16x128xf32> -> vector<16x128xf32>
    %369 = arith.addf %317, %368 : vector<16x128xf32>
    %c1_154 = arith.constant 1 : index
    %c0_155 = arith.constant 0 : index
    %c0_156 = arith.constant 0 : index
    %370 = vector.load %arg16[%c1_154, %c0_155, %c0_156] : memref<2x1x128xf32, #tpu.memory_space<vmem>>, vector<1x1x128xf32>
    %371 = vector.shape_cast %370 : vector<1x1x128xf32> to vector<1x128xf32>
    %372 = vector.broadcast %371 : vector<1x128xf32> to vector<16x128xf32>
    %373 = arith.addf %369, %372 : vector<16x128xf32>
    %c0_157 = arith.constant 0 : index
    %c0_158 = arith.constant 0 : index
    %374 = vector.load %arg17[%c0_157, %c0_158] : memref<1x128xf32, #tpu.memory_space<vmem>>, vector<1x128xf32>
    %c0_159 = arith.constant 0 : index
    %c0_160 = arith.constant 0 : index
    %375 = vector.load %arg18[%c0_159, %c0_160] : memref<1x128xf32, #tpu.memory_space<vmem>>, vector<1x128xf32>
    %cst_161 = arith.constant dense<0.000000e+00> : vector<16xf32>
    %376 = vector.multi_reduction <add>, %373, %cst_161 [1] : vector<16x128xf32> to vector<16xf32>
    %377 = vector.shape_cast %376 : vector<16xf32> to vector<16x1xf32>
    %cst_162 = arith.constant 1.562500e-02 : f32
    %378 = vector.broadcast %cst_162 : f32 to vector<16x1xf32>
    %379 = arith.mulf %377, %378 : vector<16x1xf32>
    %380 = vector.broadcast %379 : vector<16x1xf32> to vector<16x128xf32>
    %381 = arith.subf %373, %380 : vector<16x128xf32>
    %382 = vector.broadcast %4 : vector<1x128xf32> to vector<16x128xf32>
    %383 = arith.mulf %381, %382 : vector<16x128xf32>
    %384 = arith.mulf %383, %383 : vector<16x128xf32>
    %cst_163 = arith.constant dense<0.000000e+00> : vector<16xf32>
    %385 = vector.multi_reduction <add>, %384, %cst_163 [1] : vector<16x128xf32> to vector<16xf32>
    %386 = vector.shape_cast %385 : vector<16xf32> to vector<16x1xf32>
    %cst_164 = arith.constant 1.562500e-02 : f32
    %387 = vector.broadcast %cst_164 : f32 to vector<16x1xf32>
    %388 = arith.mulf %386, %387 : vector<16x1xf32>
    %cst_165 = arith.constant 9.99999974E-6 : f32
    %389 = vector.broadcast %cst_165 : f32 to vector<16x1xf32>
    %390 = arith.addf %388, %389 : vector<16x1xf32>
    %391 = math.rsqrt %390 : vector<16x1xf32>
    %392 = vector.broadcast %391 : vector<16x1xf32> to vector<16x128xf32>
    %393 = arith.mulf %383, %392 : vector<16x128xf32>
    %394 = vector.broadcast %374 : vector<1x128xf32> to vector<16x128xf32>
    %395 = arith.mulf %393, %394 : vector<16x128xf32>
    %396 = vector.broadcast %375 : vector<1x128xf32> to vector<16x128xf32>
    %397 = arith.addf %395, %396 : vector<16x128xf32>
    %c0_166 = arith.constant 0 : index
    %c0_167 = arith.constant 0 : index
    %398 = vector.load %arg19[%c0_166, %c0_167] : memref<1x128xf32, #tpu.memory_space<vmem>>, vector<1x128xf32>
    %399 = vector.broadcast %398 : vector<1x128xf32> to vector<16x128xf32>
    %400 = arith.mulf %397, %399 : vector<16x128xf32>
    %cst_168 = arith.constant dense<0.000000e+00> : vector<16xf32>
    %401 = vector.multi_reduction <add>, %400, %cst_168 [1] : vector<16x128xf32> to vector<16xf32>
    %402 = vector.shape_cast %401 : vector<16xf32> to vector<16x1xf32>
    %c0_169 = arith.constant 0 : index
    %c0_170 = arith.constant 0 : index
    %403 = vector.load %arg20[%c0_169, %c0_170] : memref<1x1xf32, #tpu.memory_space<vmem>>, vector<1x1xf32>
    %404 = vector.broadcast %403 : vector<1x1xf32> to vector<16x1xf32>
    %405 = arith.addf %402, %404 : vector<16x1xf32>
    %406 = vector.shape_cast %405 : vector<16x1xf32> to vector<16x1xf32>
    %407 = vector.broadcast %406 : vector<16x1xf32> to vector<16x128xf32>
    %c0_171 = arith.constant 0 : index
    %c0_172 = arith.constant 0 : index
    %c0_173 = arith.constant 0 : index
    %408 = vector.load %arg21[%c0_171, %c0_172, %c0_173] : memref<1x16x128xf32, #tpu.memory_space<vmem>>, vector<1x16x128xf32>
    %409 = vector.shape_cast %408 : vector<1x16x128xf32> to vector<16x128xf32>
    %410 = vector.shape_cast %407 : vector<16x128xf32> to vector<1x16x128xf32>
    tpu.vector_store %arg21[%c0_171, %c0_172, %c0_173], %410 {strides = array<i32>} : memref<1x16x128xf32, #tpu.memory_space<vmem>>, vector<1x16x128xf32>,
    return
  }
  func.func @transform_0(%arg0: i32) -> (i32, i32, i32) {
    %c0_i32 = arith.constant 0 : i32
    %c0_i32_0 = arith.constant 0 : i32
    %c0_i32_1 = arith.constant 0 : i32
    return %arg0, %c0_i32, %c0_i32_0 : i32, i32, i32
  }
  func.func @transform_1(%arg0: i32) -> (i32, i32) {
    %c0_i32 = arith.constant 0 : i32
    %c0_i32_0 = arith.constant 0 : i32
    %c0_i32_1 = arith.constant 0 : i32
    return %c0_i32, %c0_i32_0 : i32, i32
  }
  func.func @transform_2(%arg0: i32) -> (i32, i32) {
    %c0_i32 = arith.constant 0 : i32
    %c0_i32_0 = arith.constant 0 : i32
    %c0_i32_1 = arith.constant 0 : i32
    return %c0_i32, %c0_i32_0 : i32, i32
  }
  func.func @transform_3(%arg0: i32) -> (i32, i32) {
    %c0_i32 = arith.constant 0 : i32
    %c0_i32_0 = arith.constant 0 : i32
    %c0_i32_1 = arith.constant 0 : i32
    return %c0_i32, %c0_i32_0 : i32, i32
  }
  func.func @transform_4(%arg0: i32) -> (i32, i32, i32) {
    %c0_i32 = arith.constant 0 : i32
    %c0_i32_0 = arith.constant 0 : i32
    %c0_i32_1 = arith.constant 0 : i32
    %c0_i32_2 = arith.constant 0 : i32
    return %c0_i32, %c0_i32_0, %c0_i32_1 : i32, i32, i32
  }
  func.func @transform_5(%arg0: i32) -> (i32, i32, i32) {
    %c0_i32 = arith.constant 0 : i32
    %c0_i32_0 = arith.constant 0 : i32
    %c0_i32_1 = arith.constant 0 : i32
    %c0_i32_2 = arith.constant 0 : i32
    return %c0_i32, %c0_i32_0, %c0_i32_1 : i32, i32, i32
  }
  func.func @transform_6(%arg0: i32) -> (i32, i32, i32) {
    %c0_i32 = arith.constant 0 : i32
    %c0_i32_0 = arith.constant 0 : i32
    %c0_i32_1 = arith.constant 0 : i32
    %c0_i32_2 = arith.constant 0 : i32
    return %c0_i32, %c0_i32_0, %c0_i32_1 : i32, i32, i32
  }
  func.func @transform_7(%arg0: i32) -> (i32, i32, i32) {
    %c0_i32 = arith.constant 0 : i32
    %c0_i32_0 = arith.constant 0 : i32
    %c0_i32_1 = arith.constant 0 : i32
    %c0_i32_2 = arith.constant 0 : i32
    return %c0_i32, %c0_i32_0, %c0_i32_1 : i32, i32, i32
  }
  func.func @transform_8(%arg0: i32) -> (i32, i32, i32) {
    %c0_i32 = arith.constant 0 : i32
    %c0_i32_0 = arith.constant 0 : i32
    %c0_i32_1 = arith.constant 0 : i32
    %c0_i32_2 = arith.constant 0 : i32
    return %c0_i32, %c0_i32_0, %c0_i32_1 : i32, i32, i32
  }
  func.func @transform_9(%arg0: i32) -> (i32, i32, i32) {
    %c0_i32 = arith.constant 0 : i32
    %c0_i32_0 = arith.constant 0 : i32
    %c0_i32_1 = arith.constant 0 : i32
    %c0_i32_2 = arith.constant 0 : i32
    return %c0_i32, %c0_i32_0, %c0_i32_1 : i32, i32, i32
  }
  func.func @transform_10(%arg0: i32) -> (i32, i32, i32) {
    %c0_i32 = arith.constant 0 : i32
    %c0_i32_0 = arith.constant 0 : i32
    %c0_i32_1 = arith.constant 0 : i32
    %c0_i32_2 = arith.constant 0 : i32
    return %c0_i32, %c0_i32_0, %c0_i32_1 : i32, i32, i32
  }
  func.func @transform_11(%arg0: i32) -> (i32, i32, i32) {
    %c0_i32 = arith.constant 0 : i32
    %c0_i32_0 = arith.constant 0 : i32
    %c0_i32_1 = arith.constant 0 : i32
    %c0_i32_2 = arith.constant 0 : i32
    return %c0_i32, %c0_i32_0, %c0_i32_1 : i32, i32, i32
  }
  func.func @transform_12(%arg0: i32) -> (i32, i32, i32) {
    %c0_i32 = arith.constant 0 : i32
    %c0_i32_0 = arith.constant 0 : i32
    %c0_i32_1 = arith.constant 0 : i32
    %c0_i32_2 = arith.constant 0 : i32
    return %c0_i32, %c0_i32_0, %c0_i32_1 : i32, i32, i32
  }
  func.func @transform_13(%arg0: i32) -> (i32, i32, i32) {
    %c0_i32 = arith.constant 0 : i32
    %c0_i32_0 = arith.constant 0 : i32
    %c0_i32_1 = arith.constant 0 : i32
    %c0_i32_2 = arith.constant 0 : i32
    return %c0_i32, %c0_i32_0, %c0_i32_1 : i32, i32, i32
  }
  func.func @transform_14(%arg0: i32) -> (i32, i32, i32) {
    %c0_i32 = arith.constant 0 : i32
    %c0_i32_0 = arith.constant 0 : i32
    %c0_i32_1 = arith.constant 0 : i32
    %c0_i32_2 = arith.constant 0 : i32
    return %c0_i32, %c0_i32_0, %c0_i32_1 : i32, i32, i32
  }
  func.func @transform_15(%arg0: i32) -> (i32, i32, i32) {
    %c0_i32 = arith.constant 0 : i32
    %c0_i32_0 = arith.constant 0 : i32
    %c0_i32_1 = arith.constant 0 : i32
    %c0_i32_2 = arith.constant 0 : i32
    return %c0_i32, %c0_i32_0, %c0_i32_1 : i32, i32, i32
  }
  func.func @transform_16(%arg0: i32) -> (i32, i32) {
    %c0_i32 = arith.constant 0 : i32
    %c0_i32_0 = arith.constant 0 : i32
    %c0_i32_1 = arith.constant 0 : i32
    return %c0_i32, %c0_i32_0 : i32, i32
  }
  func.func @transform_17(%arg0: i32) -> (i32, i32) {
    %c0_i32 = arith.constant 0 : i32
    %c0_i32_0 = arith.constant 0 : i32
    %c0_i32_1 = arith.constant 0 : i32
    return %c0_i32, %c0_i32_0 : i32, i32
  }
  func.func @transform_18(%arg0: i32) -> (i32, i32) {
    %c0_i32 = arith.constant 0 : i32
    %c0_i32_0 = arith.constant 0 : i32
    %c0_i32_1 = arith.constant 0 : i32
    return %c0_i32, %c0_i32_0 : i32, i32
  }
  func.func @transform_19(%arg0: i32) -> (i32, i32) {
    %c0_i32 = arith.constant 0 : i32
    %c0_i32_0 = arith.constant 0 : i32
    %c0_i32_1 = arith.constant 0 : i32
    return %c0_i32, %c0_i32_0 : i32, i32
  }
  func.func @transform_20(%arg0: i32) -> (i32, i32, i32) {
    %c0_i32 = arith.constant 0 : i32
    %c0_i32_0 = arith.constant 0 : i32
    %c0_i32_1 = arith.constant 0 : i32
    return %arg0, %c0_i32, %c0_i32_0 : i32, i32, i32
  }
}

</mosaic_0001>

<llo_original>
// kernel: forward.1
$region0: #{forward.1}
  #allocation0 [shape = 'u32[]', space=smem, size = 0x4, offset = 0x4, fixed_abs, tag = 'smem constant byte address 0x4 - core index']
  #allocation1 [shape = 'u32[144,128]{1,0:T(1,128)}', space=vmem, size = 0x12000, scoped, tag = 'internal scratch']
  #allocation2 [shape = 'f32[1,1]{1,0:T(1,128)S(1)}', space=vmem, size = 0x200, scoped, tag = 'scoped memory for forward.1']
  %s0 = inlined_call_operand.vmem [shape: bf16[2,16,128], index: 0, kind: input, shape index: {}]
  %s1 = inlined_call_operand.vmem [shape: f32[16,128], index: 1, kind: input, shape index: {}]
  %s2 = inlined_call_operand.vmem [shape: bf16[128,128], index: 2, kind: input, shape index: {}]
  %s3 = inlined_call_operand.vmem [shape: f32[1,128], index: 3, kind: input, shape index: {}]
  %s4 = inlined_call_operand.vmem [shape: f32[2,1,128], index: 4, kind: input, shape index: {}]
  %s5 = inlined_call_operand.vmem [shape: f32[2,1,128], index: 5, kind: input, shape index: {}]
  %s6 = inlined_call_operand.hbm [shape: bf16[2,128,1536], index: 6, kind: input, shape index: {}]
  %s7 = inlined_call_operand.vmem [shape: f32[2,1,1536], index: 7, kind: input, shape index: {}]
  %s8 = inlined_call_operand.hbm [shape: bf16[2,512,128], index: 8, kind: input, shape index: {}]
  %s9 = inlined_call_operand.vmem [shape: f32[2,1,128], index: 9, kind: input, shape index: {}]
  %s10 = inlined_call_operand.vmem [shape: f32[2,1,128], index: 10, kind: input, shape index: {}]
  %s11 = inlined_call_operand.vmem [shape: f32[2,1,128], index: 11, kind: input, shape index: {}]
  %s12 = inlined_call_operand.hbm [shape: bf16[2,128,256], index: 12, kind: input, shape index: {}]
  %s13 = inlined_call_operand.vmem [shape: f32[2,1,256], index: 13, kind: input, shape index: {}]
  %s14 = inlined_call_operand.hbm [shape: bf16[2,256,128], index: 14, kind: input, shape index: {}]
  %s15 = inlined_call_operand.vmem [shape: f32[2,1,128], index: 15, kind: input, shape index: {}]
  %s16 = inlined_call_operand.vmem [shape: f32[1,128], index: 16, kind: input, shape index: {}]
  %s17 = inlined_call_operand.vmem [shape: f32[1,128], index: 17, kind: input, shape index: {}]
  %s18 = inlined_call_operand.vmem [shape: f32[1,128], index: 18, kind: input, shape index: {}]
  %s19 = inlined_call_operand.<no memory space> [shape: f32[1,1], index: 19, kind: input, shape index: {}]
  %s20 = inlined_call_operand.vmem [shape: f32[2,16,128], index: 20, kind: output, shape index: {}]
  %s21 = sld [smem:[#allocation0]]
  $region129: #{forward.1} parent=0
    _
  %s23 = ssub.s32 1, %s21
  %s24 = scalar_select 0, %s23, %s21
  %v25 = vstv %s19
  %26 = vst [vmem:[#allocation2] sm:$0x1] %v25
  $region1: #{forward.1} parent=0
    #allocation3 [shape = 'u8[786432]{0}', space=vmem, size = 0xc0000, scoped, tag = 'input window, operand 6, single buffered']
    #allocation4 [shape = 's32[2]{0}', space=sflag, size = 0x8, scoped, tag = 'scoped memory for forward.1']
    #allocation5 [shape = 'u8[262144]{0}', space=vmem, size = 0x40000, scoped, tag = 'input window, operand 8, single buffered']
    #allocation6 [shape = 's32[1]{0}', space=sflag, size = 0x4, scoped, tag = 'scoped memory for forward.1']
    #allocation7 [shape = 'u8[131072]{0}', space=vmem, size = 0x20000, scoped, tag = 'input window, operand 12, single buffered']
    #allocation8 [shape = 'u8[131072]{0}', space=vmem, size = 0x20000, scoped, tag = 'input window, operand 14, single buffered']
    #allocation9 [shape = 's32[1]{0}', space=sflag, size = 0x4, scoped, tag = 'scoped memory for forward.1']
    %27 = vsyncpa [#allocation4], 0
    %28 = vsyncpa [#allocation6], 0
    %29 = vsyncpa [#allocation9], 0
    loop: start=0, step=1, limit=4
    $region2: #{forward.1} parent=1 // loop_pre_header
      _
    $region3: #{forward.1} parent=1 // loop_header
      %s31 = sphi 0, %s35
      %p32 = scmp.ge.s32.totalorder %s31, 4
      %s41 = sphi 0, %s43
      %s44 = sphi 0, %s41
      %s45 = sphi 0, %s44
      %s61 = sphi 0, %s45
      %s65 = sphi 0, %s65
      %s67 = sphi 0, %s65
      %s68 = sphi 0, %s67
      %s82 = sphi 0, %s68
      %s86 = sphi 0, %s86
      %s88 = sphi 0, %s86
      %s89 = sphi 0, %s88
      %s103 = sphi 0, %s89
      %s107 = sphi 0, %s107
      %s109 = sphi 0, %s107
      %s110 = sphi 0, %s109
      %s124 = sphi 0, %s110
      %s128 = sphi 0, %s128
      %s130 = sphi 0, %s128
      %s131 = sphi 0, %s130
      %s145 = sphi 0, %s131
      %s149 = sphi 0, %s149
      %s151 = sphi 0, %s149
      %s152 = sphi 0, %s151
      %s166 = sphi 0, %s152
      %s170 = sphi 0, %s170
      %s172 = sphi 0, %s170
      %s173 = sphi 0, %s172
      %s187 = sphi 0, %s173
      %s191 = sphi 0, %s191
      %s193 = sphi 0, %s191
      %s194 = sphi 0, %s193
      %s208 = sphi 0, %s194
      %s212 = sphi 0, %s212
      %s214 = sphi 0, %s212
      %s215 = sphi 0, %s214
      %s229 = sphi 0, %s215
      %s233 = sphi 0, %s233
      %s235 = sphi 0, %s233
      %s236 = sphi 0, %s235
      %s250 = sphi 0, %s236
      %s254 = sphi 0, %s254
      %s256 = sphi 0, %s254
      %s257 = sphi 0, %s256
      %s271 = sphi 0, %s257
      %s275 = sphi 0, %s275
      %s277 = sphi 0, %s275
      %s278 = sphi 0, %s277
      %s292 = sphi 0, %s278
      %s296 = sphi 0, %s296
      %s298 = sphi 0, %s296
      %s299 = sphi 0, %s298
      %s313 = sphi 0, %s299
      %s317 = sphi 0, %s317
      %s319 = sphi 0, %s317
      %s320 = sphi 0, %s319
      %s334 = sphi 0, %s320
      %s338 = sphi 0, %s338
      %s340 = sphi 0, %s338
      %s341 = sphi 0, %s340
      %s355 = sphi 0, %s341
      %s359 = sphi 0, %s359
      %s361 = sphi 0, %s359
      %s362 = sphi 0, %s361
      %s376 = sphi 0, %s362
      %s380 = sphi 0, %s380
      %s382 = sphi 0, %s380
      %s383 = sphi 0, %s382
      %s397 = sphi 0, %s383
      %s401 = sphi 0, %s401
      %s403 = sphi 0, %s401
      %s404 = sphi 0, %s403
      %s418 = sphi 0, %s404
      %s422 = sphi 0, %s422
      %s424 = sphi 0, %s422
      %s425 = sphi 0, %s424
      %s439 = sphi 0, %s425
      %s443 = sphi 0, %s443
      %s445 = sphi 0, %s443
      %s446 = sphi 0, %s445
      %s460 = sphi 0, %s446
      %s466 = sphi 0, %s468
      %s469 = sphi 0, %s466
      %s470 = sphi 0, %s469
      %s486 = sphi 0, %s470
    $region4: #{forward.1} parent=1 // loop_header_branch
      %34 = sbr.rel (%p32) target = $region8
    $region5: #{forward.1} parent=1 // loop_body
      %s36 = ssub.s32 %s31, 1
      %s37 = ssub.s32 %s31, 2
      %s38 = sadd.s32 %s31, 1
      %s39 = ssub.s32 %s31, %s38
      %p40 = scmp.eq.s32.totalorder %s39, 0
      %s42 = sadd.s32 %s41, 1
      %s43 = scalar_select %p40, %s41, %s42
      %p46 = pneg %p40
      %p47 = scmp.eq.s32.totalorder %s31, 1
      %p48 = por %p46, %p47
      %p49 = scmp.ne.s32.totalorder %s41, %s44
      %p50 = scmp.eq.s32.totalorder %s31, 0
      %p51 = por %p49, %p50
      %p52 = scmp.ne.s32.totalorder %s41, %s44
      %p53 = scmp.eq.s32.totalorder %s36, 1
      %p54 = por %p52, %p53
      %p55 = scmp.ne.s32.totalorder %s44, %s45
      %p56 = scmp.eq.s32.totalorder %s36, 0
      %p57 = por %p55, %p56
      %p58 = scmp.ne.s32.totalorder %s44, %s45
      %p59 = scmp.eq.s32.totalorder %s37, 1
      %p60 = por %p58, %p59
      %p62 = scmp.ne.s32.totalorder %s45, %s61
      %p63 = scmp.eq.s32.totalorder %s37, 0
      %p64 = por %p62, %p63
      %s66 = sadd.s32 %s65, 1
      %p69 = scmp.eq.s32.totalorder %s31, 1
      %p70 = scmp.ne.s32.totalorder %s65, %s67
      %p71 = scmp.eq.s32.totalorder %s31, 0
      %p72 = por %p70, %p71
      %p73 = scmp.ne.s32.totalorder %s65, %s67
      %p74 = scmp.eq.s32.totalorder %s36, 1
      %p75 = por %p73, %p74
      %p76 = scmp.ne.s32.totalorder %s67, %s68
      %p77 = scmp.eq.s32.totalorder %s36, 0
      %p78 = por %p76, %p77
      %p79 = scmp.ne.s32.totalorder %s67, %s68
      %p80 = scmp.eq.s32.totalorder %s37, 1
      %p81 = por %p79, %p80
      %p83 = scmp.ne.s32.totalorder %s68, %s82
      %p84 = scmp.eq.s32.totalorder %s37, 0
      %p85 = por %p83, %p84
      %s87 = sadd.s32 %s86, 1
      %p90 = scmp.eq.s32.totalorder %s31, 1
      %p91 = scmp.ne.s32.totalorder %s86, %s88
      %p92 = scmp.eq.s32.totalorder %s31, 0
      %p93 = por %p91, %p92
      %p94 = scmp.ne.s32.totalorder %s86, %s88
      %p95 = scmp.eq.s32.totalorder %s36, 1
      %p96 = por %p94, %p95
      %p97 = scmp.ne.s32.totalorder %s88, %s89
      %p98 = scmp.eq.s32.totalorder %s36, 0
      %p99 = por %p97, %p98
      %p100 = scmp.ne.s32.totalorder %s88, %s89
      %p101 = scmp.eq.s32.totalorder %s37, 1
      %p102 = por %p100, %p101
      %p104 = scmp.ne.s32.totalorder %s89, %s103
      %p105 = scmp.eq.s32.totalorder %s37, 0
      %p106 = por %p104, %p105
      %s108 = sadd.s32 %s107, 1
      %p111 = scmp.eq.s32.totalorder %s31, 1
      %p112 = scmp.ne.s32.totalorder %s107, %s109
      %p113 = scmp.eq.s32.totalorder %s31, 0
      %p114 = por %p112, %p113
      %p115 = scmp.ne.s32.totalorder %s107, %s109
      %p116 = scmp.eq.s32.totalorder %s36, 1
      %p117 = por %p115, %p116
      %p118 = scmp.ne.s32.totalorder %s109, %s110
      %p119 = scmp.eq.s32.totalorder %s36, 0
      %p120 = por %p118, %p119
      %p121 = scmp.ne.s32.totalorder %s109, %s110
      %p122 = scmp.eq.s32.totalorder %s37, 1
      %p123 = por %p121, %p122
      %p125 = scmp.ne.s32.totalorder %s110, %s124
      %p126 = scmp.eq.s32.totalorder %s37, 0
      %p127 = por %p125, %p126
      %s129 = sadd.s32 %s128, 1
      %p132 = scmp.eq.s32.totalorder %s31, 1
      %p133 = scmp.ne.s32.totalorder %s128, %s130
      %p134 = scmp.eq.s32.totalorder %s31, 0
      %p135 = por %p133, %p134
      %p136 = scmp.ne.s32.totalorder %s128, %s130
      %p137 = scmp.eq.s32.totalorder %s36, 1
      %p138 = por %p136, %p137
      %p139 = scmp.ne.s32.totalorder %s130, %s131
      %p140 = scmp.eq.s32.totalorder %s36, 0
      %p141 = por %p139, %p140
      %p142 = scmp.ne.s32.totalorder %s130, %s131
      %p143 = scmp.eq.s32.totalorder %s37, 1
      %p144 = por %p142, %p143
      %p146 = scmp.ne.s32.totalorder %s131, %s145
      %p147 = scmp.eq.s32.totalorder %s37, 0
      %p148 = por %p146, %p147
      %s150 = sadd.s32 %s149, 1
      %p153 = scmp.eq.s32.totalorder %s31, 1
      %p154 = scmp.ne.s32.totalorder %s149, %s151
      %p155 = scmp.eq.s32.totalorder %s31, 0
      %p156 = por %p154, %p155
      %p157 = scmp.ne.s32.totalorder %s149, %s151
      %p158 = scmp.eq.s32.totalorder %s36, 1
      %p159 = por %p157, %p158
      %p160 = scmp.ne.s32.totalorder %s151, %s152
      %p161 = scmp.eq.s32.totalorder %s36, 0
      %p162 = por %p160, %p161
      %p163 = scmp.ne.s32.totalorder %s151, %s152
      %p164 = scmp.eq.s32.totalorder %s37, 1
      %p165 = por %p163, %p164
      %p167 = scmp.ne.s32.totalorder %s152, %s166
      %p168 = scmp.eq.s32.totalorder %s37, 0
      %p169 = por %p167, %p168
      %s171 = sadd.s32 %s170, 1
      %p174 = scmp.eq.s32.totalorder %s31, 1
      %p175 = scmp.ne.s32.totalorder %s170, %s172
      %p176 = scmp.eq.s32.totalorder %s31, 0
      %p177 = por %p175, %p176
      %p178 = scmp.ne.s32.totalorder %s170, %s172
      %p179 = scmp.eq.s32.totalorder %s36, 1
      %p180 = por %p178, %p179
      %p181 = scmp.ne.s32.totalorder %s172, %s173
      %p182 = scmp.eq.s32.totalorder %s36, 0
      %p183 = por %p181, %p182
      %p184 = scmp.ne.s32.totalorder %s172, %s173
      %p185 = scmp.eq.s32.totalorder %s37, 1
      %p186 = por %p184, %p185
      %p188 = scmp.ne.s32.totalorder %s173, %s187
      %p189 = scmp.eq.s32.totalorder %s37, 0
      %p190 = por %p188, %p189
      %s192 = sadd.s32 %s191, 1
      %p195 = scmp.eq.s32.totalorder %s31, 1
      %p196 = scmp.ne.s32.totalorder %s191, %s193
      %p197 = scmp.eq.s32.totalorder %s31, 0
      %p198 = por %p196, %p197
      %p199 = scmp.ne.s32.totalorder %s191, %s193
      %p200 = scmp.eq.s32.totalorder %s36, 1
      %p201 = por %p199, %p200
      %p202 = scmp.ne.s32.totalorder %s193, %s194
      %p203 = scmp.eq.s32.totalorder %s36, 0
      %p204 = por %p202, %p203
      %p205 = scmp.ne.s32.totalorder %s193, %s194
      %p206 = scmp.eq.s32.totalorder %s37, 1
      %p207 = por %p205, %p206
      %p209 = scmp.ne.s32.totalorder %s194, %s208
      %p210 = scmp.eq.s32.totalorder %s37, 0
      %p211 = por %p209, %p210
      %s213 = sadd.s32 %s212, 1
      %p216 = scmp.eq.s32.totalorder %s31, 1
      %p217 = scmp.ne.s32.totalorder %s212, %s214
      %p218 = scmp.eq.s32.totalorder %s31, 0
      %p219 = por %p217, %p218
      %p220 = scmp.ne.s32.totalorder %s212, %s214
      %p221 = scmp.eq.s32.totalorder %s36, 1
      %p222 = por %p220, %p221
      %p223 = scmp.ne.s32.totalorder %s214, %s215
      %p224 = scmp.eq.s32.totalorder %s36, 0
      %p225 = por %p223, %p224
      %p226 = scmp.ne.s32.totalorder %s214, %s215
      %p227 = scmp.eq.s32.totalorder %s37, 1
      %p228 = por %p226, %p227
      %p230 = scmp.ne.s32.totalorder %s215, %s229
      %p231 = scmp.eq.s32.totalorder %s37, 0
      %p232 = por %p230, %p231
      %s234 = sadd.s32 %s233, 1
      %p237 = scmp.eq.s32.totalorder %s31, 1
      %p238 = scmp.ne.s32.totalorder %s233, %s235
      %p239 = scmp.eq.s32.totalorder %s31, 0
      %p240 = por %p238, %p239
      %p241 = scmp.ne.s32.totalorder %s233, %s235
      %p242 = scmp.eq.s32.totalorder %s36, 1
      %p243 = por %p241, %p242
      %p244 = scmp.ne.s32.totalorder %s235, %s236
      %p245 = scmp.eq.s32.totalorder %s36, 0
      %p246 = por %p244, %p245
      %p247 = scmp.ne.s32.totalorder %s235, %s236
      %p248 = scmp.eq.s32.totalorder %s37, 1
      %p249 = por %p247, %p248
      %p251 = scmp.ne.s32.totalorder %s236, %s250
      %p252 = scmp.eq.s32.totalorder %s37, 0
      %p253 = por %p251, %p252
      %s255 = sadd.s32 %s254, 1
      %p258 = scmp.eq.s32.totalorder %s31, 1
      %p259 = scmp.ne.s32.totalorder %s254, %s256
      %p260 = scmp.eq.s32.totalorder %s31, 0
      %p261 = por %p259, %p260
      %p262 = scmp.ne.s32.totalorder %s254, %s256
      %p263 = scmp.eq.s32.totalorder %s36, 1
      %p264 = por %p262, %p263
      %p265 = scmp.ne.s32.totalorder %s256, %s257
      %p266 = scmp.eq.s32.totalorder %s36, 0
      %p267 = por %p265, %p266
      %p268 = scmp.ne.s32.totalorder %s256, %s257
      %p269 = scmp.eq.s32.totalorder %s37, 1
      %p270 = por %p268, %p269
      %p272 = scmp.ne.s32.totalorder %s257, %s271
      %p273 = scmp.eq.s32.totalorder %s37, 0
      %p274 = por %p272, %p273
      %s276 = sadd.s32 %s275, 1
      %p279 = scmp.eq.s32.totalorder %s31, 1
      %p280 = scmp.ne.s32.totalorder %s275, %s277
      %p281 = scmp.eq.s32.totalorder %s31, 0
      %p282 = por %p280, %p281
      %p283 = scmp.ne.s32.totalorder %s275, %s277
      %p284 = scmp.eq.s32.totalorder %s36, 1
      %p285 = por %p283, %p284
      %p286 = scmp.ne.s32.totalorder %s277, %s278
      %p287 = scmp.eq.s32.totalorder %s36, 0
      %p288 = por %p286, %p287
      %p289 = scmp.ne.s32.totalorder %s277, %s278
      %p290 = scmp.eq.s32.totalorder %s37, 1
      %p291 = por %p289, %p290
      %p293 = scmp.ne.s32.totalorder %s278, %s292
      %p294 = scmp.eq.s32.totalorder %s37, 0
      %p295 = por %p293, %p294
      %s297 = sadd.s32 %s296, 1
      %p300 = scmp.eq.s32.totalorder %s31, 1
      %p301 = scmp.ne.s32.totalorder %s296, %s298
      %p302 = scmp.eq.s32.totalorder %s31, 0
      %p303 = por %p301, %p302
      %p304 = scmp.ne.s32.totalorder %s296, %s298
      %p305 = scmp.eq.s32.totalorder %s36, 1
      %p306 = por %p304, %p305
      %p307 = scmp.ne.s32.totalorder %s298, %s299
      %p308 = scmp.eq.s32.totalorder %s36, 0
      %p309 = por %p307, %p308
      %p310 = scmp.ne.s32.totalorder %s298, %s299
      %p311 = scmp.eq.s32.totalorder %s37, 1
      %p312 = por %p310, %p311
      %p314 = scmp.ne.s32.totalorder %s299, %s313
      %p315 = scmp.eq.s32.totalorder %s37, 0
      %p316 = por %p314, %p315
      %s318 = sadd.s32 %s317, 1
      %p321 = scmp.eq.s32.totalorder %s31, 1
      %p322 = scmp.ne.s32.totalorder %s317, %s319
      %p323 = scmp.eq.s32.totalorder %s31, 0
      %p324 = por %p322, %p323
      %p325 = scmp.ne.s32.totalorder %s317, %s319
      %p326 = scmp.eq.s32.totalorder %s36, 1
      %p327 = por %p325, %p326
      %p328 = scmp.ne.s32.totalorder %s319, %s320
      %p329 = scmp.eq.s32.totalorder %s36, 0
      %p330 = por %p328, %p329
      %p331 = scmp.ne.s32.totalorder %s319, %s320
      %p332 = scmp.eq.s32.totalorder %s37, 1
      %p333 = por %p331, %p332
      %p335 = scmp.ne.s32.totalorder %s320, %s334
      %p336 = scmp.eq.s32.totalorder %s37, 0
      %p337 = por %p335, %p336
      %s339 = sadd.s32 %s338, 1
      %p342 = scmp.eq.s32.totalorder %s31, 1
      %p343 = scmp.ne.s32.totalorder %s338, %s340
      %p344 = scmp.eq.s32.totalorder %s31, 0
      %p345 = por %p343, %p344
      %p346 = scmp.ne.s32.totalorder %s338, %s340
      %p347 = scmp.eq.s32.totalorder %s36, 1
      %p348 = por %p346, %p347
      %p349 = scmp.ne.s32.totalorder %s340, %s341
      %p350 = scmp.eq.s32.totalorder %s36, 0
      %p351 = por %p349, %p350
      %p352 = scmp.ne.s32.totalorder %s340, %s341
      %p353 = scmp.eq.s32.totalorder %s37, 1
      %p354 = por %p352, %p353
      %p356 = scmp.ne.s32.totalorder %s341, %s355
      %p357 = scmp.eq.s32.totalorder %s37, 0
      %p358 = por %p356, %p357
      %s360 = sadd.s32 %s359, 1
      %p363 = scmp.eq.s32.totalorder %s31, 1
      %p364 = scmp.ne.s32.totalorder %s359, %s361
      %p365 = scmp.eq.s32.totalorder %s31, 0
      %p366 = por %p364, %p365
      %p367 = scmp.ne.s32.totalorder %s359, %s361
      %p368 = scmp.eq.s32.totalorder %s36, 1
      %p369 = por %p367, %p368
      %p370 = scmp.ne.s32.totalorder %s361, %s362
      %p371 = scmp.eq.s32.totalorder %s36, 0
      %p372 = por %p370, %p371
      %p373 = scmp.ne.s32.totalorder %s361, %s362
      %p374 = scmp.eq.s32.totalorder %s37, 1
      %p375 = por %p373, %p374
      %p377 = scmp.ne.s32.totalorder %s362, %s376
      %p378 = scmp.eq.s32.totalorder %s37, 0
      %p379 = por %p377, %p378
      %s381 = sadd.s32 %s380, 1
      %p384 = scmp.eq.s32.totalorder %s31, 1
      %p385 = scmp.ne.s32.totalorder %s380, %s382
      %p386 = scmp.eq.s32.totalorder %s31, 0
      %p387 = por %p385, %p386
      %p388 = scmp.ne.s32.totalorder %s380, %s382
      %p389 = scmp.eq.s32.totalorder %s36, 1
      %p390 = por %p388, %p389
      %p391 = scmp.ne.s32.totalorder %s382, %s383
      %p392 = scmp.eq.s32.totalorder %s36, 0
      %p393 = por %p391, %p392
      %p394 = scmp.ne.s32.totalorder %s382, %s383
      %p395 = scmp.eq.s32.totalorder %s37, 1
      %p396 = por %p394, %p395
      %p398 = scmp.ne.s32.totalorder %s383, %s397
      %p399 = scmp.eq.s32.totalorder %s37, 0
      %p400 = por %p398, %p399
      %s402 = sadd.s32 %s401, 1
      %p405 = scmp.eq.s32.totalorder %s31, 1
      %p406 = scmp.ne.s32.totalorder %s401, %s403
      %p407 = scmp.eq.s32.totalorder %s31, 0
      %p408 = por %p406, %p407
      %p409 = scmp.ne.s32.totalorder %s401, %s403
      %p410 = scmp.eq.s32.totalorder %s36, 1
      %p411 = por %p409, %p410
      %p412 = scmp.ne.s32.totalorder %s403, %s404
      %p413 = scmp.eq.s32.totalorder %s36, 0
      %p414 = por %p412, %p413
      %p415 = scmp.ne.s32.totalorder %s403, %s404
      %p416 = scmp.eq.s32.totalorder %s37, 1
      %p417 = por %p415, %p416
      %p419 = scmp.ne.s32.totalorder %s404, %s418
      %p420 = scmp.eq.s32.totalorder %s37, 0
      %p421 = por %p419, %p420
      %s423 = sadd.s32 %s422, 1
      %p426 = scmp.eq.s32.totalorder %s31, 1
      %p427 = scmp.ne.s32.totalorder %s422, %s424
      %p428 = scmp.eq.s32.totalorder %s31, 0
      %p429 = por %p427, %p428
      %p430 = scmp.ne.s32.totalorder %s422, %s424
      %p431 = scmp.eq.s32.totalorder %s36, 1
      %p432 = por %p430, %p431
      %p433 = scmp.ne.s32.totalorder %s424, %s425
      %p434 = scmp.eq.s32.totalorder %s36, 0
      %p435 = por %p433, %p434
      %p436 = scmp.ne.s32.totalorder %s424, %s425
      %p437 = scmp.eq.s32.totalorder %s37, 1
      %p438 = por %p436, %p437
      %p440 = scmp.ne.s32.totalorder %s425, %s439
      %p441 = scmp.eq.s32.totalorder %s37, 0
      %p442 = por %p440, %p441
      %s444 = sadd.s32 %s443, 1
      %p447 = scmp.eq.s32.totalorder %s31, 1
      %p448 = scmp.ne.s32.totalorder %s443, %s445
      %p449 = scmp.eq.s32.totalorder %s31, 0
      %p450 = por %p448, %p449
      %p451 = scmp.ne.s32.totalorder %s443, %s445
      %p452 = scmp.eq.s32.totalorder %s36, 1
      %p453 = por %p451, %p452
      %p454 = scmp.ne.s32.totalorder %s445, %s446
      %p455 = scmp.eq.s32.totalorder %s36, 0
      %p456 = por %p454, %p455
      %p457 = scmp.ne.s32.totalorder %s445, %s446
      %p458 = scmp.eq.s32.totalorder %s37, 1
      %p459 = por %p457, %p458
      %p461 = scmp.ne.s32.totalorder %s446, %s460
      %p462 = scmp.eq.s32.totalorder %s37, 0
      %p463 = por %p461, %p462
      %s464 = ssub.s32 %s31, %s38
      %p465 = scmp.eq.s32.totalorder %s464, 0
      %s467 = sadd.s32 %s466, 1
      %s468 = scalar_select %p465, %s466, %s467
      %p471 = pneg %p465
      %p472 = scmp.eq.s32.totalorder %s31, 1
      %p473 = por %p471, %p472
      %p474 = scmp.ne.s32.totalorder %s466, %s469
      %p475 = scmp.eq.s32.totalorder %s31, 0
      %p476 = por %p474, %p475
      %p477 = scmp.ne.s32.totalorder %s466, %s469
      %p478 = scmp.eq.s32.totalorder %s36, 1
      %p479 = por %p477, %p478
      %p480 = scmp.ne.s32.totalorder %s469, %s470
      %p481 = scmp.eq.s32.totalorder %s36, 0
      %p482 = por %p480, %p481
      %p483 = scmp.ne.s32.totalorder %s469, %s470
      %p484 = scmp.eq.s32.totalorder %s37, 1
      %p485 = por %p483, %p484
      %p487 = scmp.ne.s32.totalorder %s470, %s486
      %p488 = scmp.eq.s32.totalorder %s37, 0
      %p489 = por %p487, %p488
      %p490 = scmp.le.s32.totalorder 1, %s31
      %p491 = scmp.lt.s32.totalorder %s31, 3
      %p492 = pnand %p490, %p491
      %p493 = pneg %p492
      // Predicated region
      $region9: #{forward.1} parent=5 // pred_check
        _
      $region10: #{forward.1} parent=5 // pred_check_branch
        %495 = sbr.rel (%p492) target = $region12
      $region11: #{forward.1} parent=5 // pred_region
        %s496 = ssub.s32 %s31, 1
        // Predicated region
        $region13: #{forward.1} parent=11 // pred_check
          %p497 = pneg %p78
        $region14: #{forward.1} parent=11 // pred_check_branch
          %499 = sbr.rel (%p497) target = $region16
        $region15: #{forward.1} parent=11 // pred_region
          _
        $region16: #{forward.1} parent=11 // pred_fallthru
          _
        // Predicated region
        $region17: #{forward.1} parent=11 // pred_check
          %p500 = pneg %p99
        $region18: #{forward.1} parent=11 // pred_check_branch
          %502 = sbr.rel (%p500) target = $region20
        $region19: #{forward.1} parent=11 // pred_region
          _
        $region20: #{forward.1} parent=11 // pred_fallthru
          _
        // Predicated region
        $region21: #{forward.1} parent=11 // pred_check
          %p503 = pneg %p120
        $region22: #{forward.1} parent=11 // pred_check_branch
          %505 = sbr.rel (%p503) target = $region24
        $region23: #{forward.1} parent=11 // pred_region
          _
        $region24: #{forward.1} parent=11 // pred_fallthru
          _
        // Predicated region
        $region25: #{forward.1} parent=11 // pred_check
          %p506 = pneg %p141
        $region26: #{forward.1} parent=11 // pred_check_branch
          %508 = sbr.rel (%p506) target = $region28
        $region27: #{forward.1} parent=11 // pred_region
          _
        $region28: #{forward.1} parent=11 // pred_fallthru
          _
        // Predicated region
        $region29: #{forward.1} parent=11 // pred_check
          %p509 = pneg %p162
        $region30: #{forward.1} parent=11 // pred_check_branch
          %511 = sbr.rel (%p509) target = $region32
        $region31: #{forward.1} parent=11 // pred_region
          _
        $region32: #{forward.1} parent=11 // pred_fallthru
          _
        // Predicated region
        $region33: #{forward.1} parent=11 // pred_check
          %p512 = pneg %p183
        $region34: #{forward.1} parent=11 // pred_check_branch
          %514 = sbr.rel (%p512) target = $region36
        $region35: #{forward.1} parent=11 // pred_region
          %s516 = ssub.s32 24576, 24576
          %517 = vsyncadd [#allocation4], %s516
          %s518 = sshll.u32 [#allocation3], 4
          %s519 = int_to_ptr.vmem [resolvable:$true] %s518
          %524 = dma.hbm_to_vmem [thread:$0]  %s6, 24576, %s519, [#allocation4], 768, 768, 48
        $region36: #{forward.1} parent=11 // pred_fallthru
          _
        // Predicated region
        $region37: #{forward.1} parent=11 // pred_check
          %p525 = pneg %p204
        $region38: #{forward.1} parent=11 // pred_check_branch
          %527 = sbr.rel (%p525) target = $region40
        $region39: #{forward.1} parent=11 // pred_region
          _
        $region40: #{forward.1} parent=11 // pred_fallthru
          _
        // Predicated region
        $region41: #{forward.1} parent=11 // pred_check
          %p528 = pneg %p225
        $region42: #{forward.1} parent=11 // pred_check_branch
          %530 = sbr.rel (%p528) target = $region44
        $region43: #{forward.1} parent=11 // pred_region
          %s532 = ssub.s32 8192, 8192
          %533 = vsyncadd [#allocation6], %s532
          %s534 = sshll.u32 [#allocation5], 4
          %s535 = int_to_ptr.vmem [resolvable:$true] %s534
          %540 = dma.hbm_to_vmem [thread:$0]  %s8, 8192, %s535, [#allocation6], 64, 64, 4
        $region44: #{forward.1} parent=11 // pred_fallthru
          _
        // Predicated region
        $region45: #{forward.1} parent=11 // pred_check
          %p541 = pneg %p246
        $region46: #{forward.1} parent=11 // pred_check_branch
          %543 = sbr.rel (%p541) target = $region48
        $region47: #{forward.1} parent=11 // pred_region
          _
        $region48: #{forward.1} parent=11 // pred_fallthru
          _
        // Predicated region
        $region49: #{forward.1} parent=11 // pred_check
          %p544 = pneg %p267
        $region50: #{forward.1} parent=11 // pred_check_branch
          %546 = sbr.rel (%p544) target = $region52
        $region51: #{forward.1} parent=11 // pred_region
          _
        $region52: #{forward.1} parent=11 // pred_fallthru
          _
        // Predicated region
        $region53: #{forward.1} parent=11 // pred_check
          %p547 = pneg %p288
        $region54: #{forward.1} parent=11 // pred_check_branch
          %549 = sbr.rel (%p547) target = $region56
        $region55: #{forward.1} parent=11 // pred_region
          _
        $region56: #{forward.1} parent=11 // pred_fallthru
          _
        // Predicated region
        $region57: #{forward.1} parent=11 // pred_check
          %p550 = pneg %p309
        $region58: #{forward.1} parent=11 // pred_check_branch
          %552 = sbr.rel (%p550) target = $region60
        $region59: #{forward.1} parent=11 // pred_region
          %s554 = ssub.s32 4096, 4096
          %555 = vsyncadd [#allocation6], %s554
          %s556 = sshll.u32 [#allocation7], 4
          %s557 = int_to_ptr.vmem [resolvable:$true] %s556
          %562 = dma.hbm_to_vmem [thread:$0]  %s12, 4096, %s557, [#allocation6], 128, 128, 8
        $region60: #{forward.1} parent=11 // pred_fallthru
          _
        // Predicated region
        $region61: #{forward.1} parent=11 // pred_check
          %p563 = pneg %p330
        $region62: #{forward.1} parent=11 // pred_check_branch
          %565 = sbr.rel (%p563) target = $region64
        $region63: #{forward.1} parent=11 // pred_region
          _
        $region64: #{forward.1} parent=11 // pred_fallthru
          _
        // Predicated region
        $region65: #{forward.1} parent=11 // pred_check
          %p566 = pneg %p351
        $region66: #{forward.1} parent=11 // pred_check_branch
          %568 = sbr.rel (%p566) target = $region68
        $region67: #{forward.1} parent=11 // pred_region
          %s570 = ssub.s32 4096, 4096
          %571 = vsyncadd [#allocation9], %s570
          %s572 = sshll.u32 [#allocation8], 4
          %s573 = int_to_ptr.vmem [resolvable:$true] %s572
          %578 = dma.hbm_to_vmem [thread:$0]  %s14, 4096, %s573, [#allocation9], 64, 64, 4
        $region68: #{forward.1} parent=11 // pred_fallthru
          _
        // Predicated region
        $region69: #{forward.1} parent=11 // pred_check
          %p579 = pneg %p372
        $region70: #{forward.1} parent=11 // pred_check_branch
          %581 = sbr.rel (%p579) target = $region72
        $region71: #{forward.1} parent=11 // pred_region
          _
        $region72: #{forward.1} parent=11 // pred_fallthru
          _
        // Predicated region
        $region73: #{forward.1} parent=11 // pred_check
          %p582 = pneg %p393
        $region74: #{forward.1} parent=11 // pred_check_branch
          %584 = sbr.rel (%p582) target = $region76
        $region75: #{forward.1} parent=11 // pred_region
          _
        $region76: #{forward.1} parent=11 // pred_fallthru
          _
        // Predicated region
        $region77: #{forward.1} parent=11 // pred_check
          %p585 = pneg %p414
        $region78: #{forward.1} parent=11 // pred_check_branch
          %587 = sbr.rel (%p585) target = $region80
        $region79: #{forward.1} parent=11 // pred_region
          _
        $region80: #{forward.1} parent=11 // pred_fallthru
          _
        // Predicated region
        $region81: #{forward.1} parent=11 // pred_check
          %p588 = pneg %p435
        $region82: #{forward.1} parent=11 // pred_check_branch
          %590 = sbr.rel (%p588) target = $region84
        $region83: #{forward.1} parent=11 // pred_region
          _
        $region84: #{forward.1} parent=11 // pred_fallthru
          _
        // Predicated region
        $region85: #{forward.1} parent=11 // pred_check
          %p591 = pneg %p456
        $region86: #{forward.1} parent=11 // pred_check_branch
          %593 = sbr.rel (%p591) target = $region88
        $region87: #{forward.1} parent=11 // pred_region
          _
        $region88: #{forward.1} parent=11 // pred_fallthru
          _
      $region12: #{forward.1} parent=5 // pred_fallthru
        _
      %p594 = scmp.lt.s32.totalorder %s31, 2
      // Predicated region
      $region89: #{forward.1} parent=5 // pred_check
        %p595 = pneg %p594
      $region90: #{forward.1} parent=5 // pred_check_branch
        %597 = sbr.rel (%p595) target = $region92
      $region91: #{forward.1} parent=5 // pred_region
        // Predicated region
        $region93: #{forward.1} parent=91 // pred_check
          %p598 = pneg %p51
        $region94: #{forward.1} parent=91 // pred_check_branch
          %600 = sbr.rel (%p598) target = $region96
        $region95: #{forward.1} parent=91 // pred_region
          %p601 = scmp.lt.s32.totalorder %s31, 1
          %s602 = scalar_select %p601, %s31, 1
          %s603 = smul.addr %s602, 2
          %s604 = smul.addr %s603, 4
          %s605 = scalar_lea.vmem %s0, %s604
        $region96: #{forward.1} parent=91 // pred_fallthru
          _
      $region92: #{forward.1} parent=5 // pred_fallthru
        _
      %p606 = scmp.le.s32.totalorder 1, %s31
      %p607 = scmp.lt.s32.totalorder %s31, 3
      %p608 = pnand %p606, %p607
      %p609 = pneg %p608
      // Predicated region
      $region97: #{forward.1} parent=5 // pred_check
        _
      $region98: #{forward.1} parent=5 // pred_check_branch
        %611 = sbr.rel (%p608) target = $region100
      $region99: #{forward.1} parent=5 // pred_region
        %s612 = ssub.s32 %s31, 1
        // Predicated region
        $region101: #{forward.1} parent=99 // pred_check
          %p613 = pneg %p183
        $region102: #{forward.1} parent=99 // pred_check_branch
          %615 = sbr.rel (%p613) target = $region104
        $region103: #{forward.1} parent=99 // pred_region
          %616 = dma.done [#allocation4], 24576
        $region104: #{forward.1} parent=99 // pred_fallthru
          _
        // Predicated region
        $region105: #{forward.1} parent=99 // pred_check
          %p617 = pneg %p225
        $region106: #{forward.1} parent=99 // pred_check_branch
          %619 = sbr.rel (%p617) target = $region108
        $region107: #{forward.1} parent=99 // pred_region
          %620 = dma.done [#allocation6], 8192
        $region108: #{forward.1} parent=99 // pred_fallthru
          _
        // Predicated region
        $region109: #{forward.1} parent=99 // pred_check
          %p621 = pneg %p309
        $region110: #{forward.1} parent=99 // pred_check_branch
          %623 = sbr.rel (%p621) target = $region112
        $region111: #{forward.1} parent=99 // pred_region
          %624 = dma.done [#allocation6], 4096
        $region112: #{forward.1} parent=99 // pred_fallthru
          _
        // Predicated region
        $region113: #{forward.1} parent=99 // pred_check
          %p625 = pneg %p351
        $region114: #{forward.1} parent=99 // pred_check_branch
          %627 = sbr.rel (%p625) target = $region116
        $region115: #{forward.1} parent=99 // pred_region
          %628 = dma.done [#allocation9], 4096
        $region116: #{forward.1} parent=99 // pred_fallthru
          _
        %p629 = scmp.lt.s32.totalorder %s36, 1
        %s630 = scalar_select %p629, %s36, 1
        %s631 = smul.addr %s630, 2
        %s632 = smul.addr %s631, 4
        %s633 = scalar_lea.vmem %s0, %s632
        %p634 = pneg %p57
        %p635 = pneg %p54
        %p636 = pneg %p78
        %p637 = pneg %p75
        %p638 = pneg %p99
        %p639 = pneg %p96
        %p640 = pneg %p120
        %p641 = pneg %p117
        %p642 = pneg %p141
        %p643 = pneg %p138
        %p644 = pneg %p162
        %p645 = pneg %p159
        %p646 = pneg %p183
        %p647 = pneg %p180
        %p648 = pneg %p204
        %p649 = pneg %p201
        %p650 = pneg %p225
        %p651 = pneg %p222
        %p652 = pneg %p246
        %p653 = pneg %p243
        %p654 = pneg %p267
        %p655 = pneg %p264
        %p656 = pneg %p288
        %p657 = pneg %p285
        %p658 = pneg %p309
        %p659 = pneg %p306
        %p660 = pneg %p330
        %p661 = pneg %p327
        %p662 = pneg %p351
        %p663 = pneg %p348
        %p664 = pneg %p372
        %p665 = pneg %p369
        %p666 = pneg %p393
        %p667 = pneg %p390
        %p668 = pneg %p414
        %p669 = pneg %p411
        %p670 = pneg %p435
        %p671 = pneg %p432
        %p672 = pneg %p456
        %p673 = pneg %p453
        %p674 = pneg %p482
        %p675 = pneg %p479
        %p676 = scmp.lt.s32.totalorder %s36, 1
        %s677 = scalar_select %p676, %s36, 1
        %s678 = smul.addr %s677, 2
        %s679 = smul.addr %s678, 8
        %s680 = scalar_lea.vmem %s20, %s679
        %p681 = scmp.lt.s32.totalorder %s36, 1
        %s682 = scalar_select %p681, %s36, 1
        %s683 = smul.addr %s682, 2
        %s684 = smul.addr %s683, 4
        %s685 = scalar_lea.vmem %s0, %s684
        %p686 = scmp.lt.s32.totalorder %s36, 1
        %s687 = scalar_select %p686, %s36, 1
        %s688 = smul.addr %s687, 2
        %s689 = smul.addr %s688, 8
        %s690 = scalar_lea.vmem %s20, %s689
        %v692 = vlaneseq
        %v693 = vand.u32 %v692, 127
        %vm694 = vcmp.lt.s32.totalorder %v693, 64
        %v695 = vsel %vm694, 1, 0
        %v696 = vcvt.s32.f32 %v695
        %v697 = vlaneseq
        %v698 = vshrl.u32 %v697, 7
        %v699 = vadd.s32 %v698, 8
        %vm700 = vcmp.ge.s32.totalorder %v698, %v693
        %vm701 = vcmp.ge.s32.totalorder %v699, %v693
        %v702 = vsel %vm700, 0.0, -1e+30
        %v703 = vsel %vm701, 0.0, -1e+30
        %v704 = vld [vmem:[%s685] sm:$0xf]
        %v705 = vld [vmem:[%s685 + $0x4] sm:$0xf]
        %v706 = vld [vmem:[%s2] sm:$0xf]
        %v707 = vld [vmem:[%s2 + $0x4] sm:$0xf]
        %v708 = vld [vmem:[%s2 + $0x8] sm:$0xf]
        %v709 = vld [vmem:[%s2 + $0xc] sm:$0xf]
        %v710 = vld [vmem:[%s2 + $0x10] sm:$0xf]
        %v711 = vld [vmem:[%s2 + $0x14] sm:$0xf]
        %v712 = vld [vmem:[%s2 + $0x18] sm:$0xf]
        %v713 = vld [vmem:[%s2 + $0x1c] sm:$0xf]
        %v714 = vld [vmem:[%s2 + $0x20] sm:$0xf]
        %v715 = vld [vmem:[%s2 + $0x24] sm:$0xf]
        %v716 = vld [vmem:[%s2 + $0x28] sm:$0xf]
        %v717 = vld [vmem:[%s2 + $0x2c] sm:$0xf]
        %v718 = vld [vmem:[%s2 + $0x30] sm:$0xf]
        %v719 = vld [vmem:[%s2 + $0x34] sm:$0xf]
        %v720 = vld [vmem:[%s2 + $0x38] sm:$0xf]
        %v721 = vld [vmem:[%s2 + $0x3c] sm:$0xf]
        %v722 = vld [vmem:[%s3] sm:$0x1]
        %v724 = vlaneseq
        %v725 = vshrl.u32 %v724, 7
        %v726 = vsub.s32 0, %v725
        %v727 = vrot.slane %v722, %v726
        %v731 = vunpack.c.l.b16 %v704
        %v732 = vunpack.c.l.b16 %v705
        %v733 = vpack.c.b16 %v732, %v731
        %v751 = vunpack.c.l.b16 %v706
        %v752 = vunpack.c.l.b16 %v707
        %v753 = vunpack.c.l.b16 %v708
        %v754 = vunpack.c.l.b16 %v709
        %v755 = vunpack.c.l.b16 %v710
        %v756 = vunpack.c.l.b16 %v711
        %v757 = vunpack.c.l.b16 %v712
        %v758 = vunpack.c.l.b16 %v713
        %v759 = vunpack.c.l.b16 %v714
        %v760 = vunpack.c.l.b16 %v715
        %v761 = vunpack.c.l.b16 %v716
        %v762 = vunpack.c.l.b16 %v717
        %v763 = vunpack.c.l.b16 %v718
        %v764 = vunpack.c.l.b16 %v719
        %v765 = vunpack.c.l.b16 %v720
        %v766 = vunpack.c.l.b16 %v721
        %v767 = vpack.c.b16 %v752, %v751
        %v768 = vpack.c.b16 %v754, %v753
        %v769 = vpack.c.b16 %v756, %v755
        %v770 = vpack.c.b16 %v758, %v757
        %v771 = vpack.c.b16 %v760, %v759
        %v772 = vpack.c.b16 %v762, %v761
        %v773 = vpack.c.b16 %v764, %v763
        %v774 = vpack.c.b16 %v766, %v765
        %783 = vmatprep.subr.bf16.mxu0 0
        %784 = vmatpush1.bf16.msra.mxu0 %v767
        %785 = vmatprep.subr.bf16.mxu0 0
        %786 = vmatpush1.bf16.msra.mxu0 %v768
        %787 = vmatprep.subr.bf16.mxu0 0
        %788 = vmatpush1.bf16.msra.mxu0 %v769
        %789 = vmatprep.subr.bf16.mxu0 0
        %790 = vmatpush1.bf16.msra.mxu0 %v770
        %791 = vmatprep.subr.bf16.mxu0 0
        %792 = vmatpush1.bf16.msra.mxu0 %v771
        %793 = vmatprep.subr.bf16.mxu0 0
        %794 = vmatpush1.bf16.msra.mxu0 %v772
        %795 = vmatprep.subr.bf16.mxu0 0
        %796 = vmatpush1.bf16.msra.mxu0 %v773
        %797 = vmatprep.subr.bf16.mxu0 0
        %798 = vmatpush1.bf16.msra.mxu0 %v774
        %799 = vmatprep.subr.bf16.mxu0 0
        %800 = vmatpush1.bf16.msra.mxu0 0
        %801 = vmatprep.subr.bf16.mxu0 0
        %802 = vmatpush1.bf16.msra.mxu0 0
        %803 = vmatprep.subr.bf16.mxu0 0
        %804 = vmatpush1.bf16.msra.mxu0 0
        %805 = vmatprep.subr.bf16.mxu0 0
        %806 = vmatpush1.bf16.msra.mxu0 0
        %807 = vmatprep.subr.bf16.mxu0 0
        %808 = vmatpush1.bf16.msra.mxu0 0
        %809 = vmatprep.subr.bf16.mxu0 0
        %810 = vmatpush1.bf16.msra.mxu0 0
        %811 = vmatprep.subr.bf16.mxu0 0
        %812 = vmatpush1.bf16.msra.mxu0 0
        %813 = vmatprep.subr.bf16.mxu0 0
        %814 = vmatpush1.bf16.msra.mxu0 0
        %815 = vmatprep.mubr.bf16.mxu0 0
        %816 = vmatmul.mubr.bf16.gmra.mrb[0].mxu0 %v733
        %v817 = vpop.f32.mrb[0].mxu0
        %v818 = vadd.f32 %v727, %v817
        %v819 = vpop.f32.mrb[0].mxu0
        %v820 = vpop.f32.mrb[0].mxu0
        %v821 = vadd.f32 %v727, %v820
        %v822 = vpop.f32.mrb[0].mxu0
        %823 = vdwg.mxu0
        %v824 = vld [vmem:[%s1] sm:$0xff]
        %v825 = vld [vmem:[%s1 + $0x8] sm:$0xff]
        %v826 = vadd.f32 %v818, %v824
        %v827 = vadd.f32 %v821, %v825
        %v828 = vld [vmem:[%s4] sm:$0x1]
        %v829 = vld [vmem:[%s5] sm:$0x1]
        %830 = vadd.xlane.f32.xlu0 %v826
        %v831 = vpop.xlane.xlu0 %830
        %832 = vadd.xlane.f32.xlu0 %v827
        %v833 = vpop.xlane.xlu0 %832
        %v834 = vmul.f32 %v831, 0.015625
        %v835 = vmul.f32 %v833, 0.015625
        %v836 = vsub.f32 %v826, %v834
        %v837 = vsub.f32 %v827, %v835
        %v838 = vmul.f32 %v836, %v696
        %v839 = vmul.f32 %v837, %v696
        %v840 = vmul.f32 %v838, %v838
        %v841 = vmul.f32 %v839, %v839
        %842 = vadd.xlane.f32.xlu0 %v840
        %v843 = vpop.xlane.xlu0 %842
        %844 = vadd.xlane.f32.xlu0 %v841
        %v845 = vpop.xlane.xlu0 %844
        %v846 = vmul.f32 %v843, 0.015625
        %v847 = vmul.f32 %v845, 0.015625
        %v848 = vadd.f32 %v846, 1e-05
        %v849 = vadd.f32 %v847, 1e-05
        %v850 = vrsqrt.pop %v848
        %v851 = vrsqrt.pop %v849
        %v852 = vmul.f32 %v838, %v850
        %v853 = vmul.f32 %v839, %v851
        %v855 = vlaneseq
        %v856 = vshrl.u32 %v855, 7
        %v857 = vsub.s32 0, %v856
        %v858 = vrot.slane %v828, %v857
        %v860 = vmul.f32 %v852, %v858
        %v861 = vmul.f32 %v853, %v858
        %v863 = vlaneseq
        %v864 = vshrl.u32 %v863, 7
        %v865 = vsub.s32 0, %v864
        %v866 = vrot.slane %v829, %v865
        %v868 = vadd.f32 %v860, %v866
        %v869 = vadd.f32 %v861, %v866
        %v870 = vpack.c.bf16 %v869, %v868
        %v871 = vld [vmem:[#allocation3] sm:$0xff]
        %v872 = vld [vmem:[#allocation3 + $0x8] sm:$0xff]
        %v873 = vld [vmem:[#allocation3 + $0x10] sm:$0xff]
        %v874 = vld [vmem:[#allocation3 + $0x18] sm:$0xff]
        %v875 = vld [vmem:[#allocation3 + $0x20] sm:$0xff]
        %v876 = vld [vmem:[#allocation3 + $0x28] sm:$0xff]
        %v877 = vld [vmem:[#allocation3 + $0x30] sm:$0xff]
        %v878 = vld [vmem:[#allocation3 + $0x38] sm:$0xff]
        %v879 = vld [vmem:[#allocation3 + $0x40] sm:$0xff]
        %v880 = vld [vmem:[#allocation3 + $0x48] sm:$0xff]
        %v881 = vld [vmem:[#allocation3 + $0x50] sm:$0xff]
        %v882 = vld [vmem:[#allocation3 + $0x58] sm:$0xff]
        %v883 = vld [vmem:[#allocation3 + $0x60] sm:$0xff]
        %v884 = vld [vmem:[#allocation3 + $0x68] sm:$0xff]
        %v885 = vld [vmem:[#allocation3 + $0x70] sm:$0xff]
        %v886 = vld [vmem:[#allocation3 + $0x78] sm:$0xff]
        %v887 = vld [vmem:[#allocation3 + $0x80] sm:$0xff]
        %v888 = vld [vmem:[#allocation3 + $0x88] sm:$0xff]
        %v889 = vld [vmem:[#allocation3 + $0x90] sm:$0xff]
        %v890 = vld [vmem:[#allocation3 + $0x98] sm:$0xff]
        %v891 = vld [vmem:[#allocation3 + $0xa0] sm:$0xff]
        %v892 = vld [vmem:[#allocation3 + $0xa8] sm:$0xff]
        %v893 = vld [vmem:[#allocation3 + $0xb0] sm:$0xff]
        %v894 = vld [vmem:[#allocation3 + $0xb8] sm:$0xff]
        %v895 = vld [vmem:[#allocation3 + $0xc0] sm:$0xff]
        %v896 = vld [vmem:[#allocation3 + $0xc8] sm:$0xff]
        %v897 = vld [vmem:[#allocation3 + $0xd0] sm:$0xff]
        %v898 = vld [vmem:[#allocation3 + $0xd8] sm:$0xff]
        %v899 = vld [vmem:[#allocation3 + $0xe0] sm:$0xff]
        %v900 = vld [vmem:[#allocation3 + $0xe8] sm:$0xff]
        %v901 = vld [vmem:[#allocation3 + $0xf0] sm:$0xff]
        %v902 = vld [vmem:[#allocation3 + $0xf8] sm:$0xff]
        %v903 = vld [vmem:[#allocation3 + $0x100] sm:$0xff]
        %v904 = vld [vmem:[#allocation3 + $0x108] sm:$0xff]
        %v905 = vld [vmem:[#allocation3 + $0x110] sm:$0xff]
        %v906 = vld [vmem:[#allocation3 + $0x118] sm:$0xff]
        %v907 = vld [vmem:[#allocation3 + $0x120] sm:$0xff]
        %v908 = vld [vmem:[#allocation3 + $0x128] sm:$0xff]
        %v909 = vld [vmem:[#allocation3 + $0x130] sm:$0xff]
        %v910 = vld [vmem:[#allocation3 + $0x138] sm:$0xff]
        %v911 = vld [vmem:[#allocation3 + $0x140] sm:$0xff]
        %v912 = vld [vmem:[#allocation3 + $0x148] sm:$0xff]
        %v913 = vld [vmem:[#allocation3 + $0x150] sm:$0xff]
        %v914 = vld [vmem:[#allocation3 + $0x158] sm:$0xff]
        %v915 = vld [vmem:[#allocation3 + $0x160] sm:$0xff]
        %v916 = vld [vmem:[#allocation3 + $0x168] sm:$0xff]
        %v917 = vld [vmem:[#allocation3 + $0x170] sm:$0xff]
        %v918 = vld [vmem:[#allocation3 + $0x178] sm:$0xff]
        %v919 = vld [vmem:[#allocation3 + $0x180] sm:$0xff]
        %v920 = vld [vmem:[#allocation3 + $0x188] sm:$0xff]
        %v921 = vld [vmem:[#allocation3 + $0x190] sm:$0xff]
        %v922 = vld [vmem:[#allocation3 + $0x198] sm:$0xff]
        %v923 = vld [vmem:[#allocation3 + $0x1a0] sm:$0xff]
        %v924 = vld [vmem:[#allocation3 + $0x1a8] sm:$0xff]
        %v925 = vld [vmem:[#allocation3 + $0x1b0] sm:$0xff]
        %v926 = vld [vmem:[#allocation3 + $0x1b8] sm:$0xff]
        %v927 = vld [vmem:[#allocation3 + $0x1c0] sm:$0xff]
        %v928 = vld [vmem:[#allocation3 + $0x1c8] sm:$0xff]
        %v929 = vld [vmem:[#allocation3 + $0x1d0] sm:$0xff]
        %v930 = vld [vmem:[#allocation3 + $0x1d8] sm:$0xff]
        %v931 = vld [vmem:[#allocation3 + $0x1e0] sm:$0xff]
        %v932 = vld [vmem:[#allocation3 + $0x1e8] sm:$0xff]
        %v933 = vld [vmem:[#allocation3 + $0x1f0] sm:$0xff]
        %v934 = vld [vmem:[#allocation3 + $0x1f8] sm:$0xff]
        %v935 = vld [vmem:[#allocation3 + $0x200] sm:$0xff]
        %v936 = vld [vmem:[#allocation3 + $0x208] sm:$0xff]
        %v937 = vld [vmem:[#allocation3 + $0x210] sm:$0xff]
        %v938 = vld [vmem:[#allocation3 + $0x218] sm:$0xff]
        %v939 = vld [vmem:[#allocation3 + $0x220] sm:$0xff]
        %v940 = vld [vmem:[#allocation3 + $0x228] sm:$0xff]
        %v941 = vld [vmem:[#allocation3 + $0x230] sm:$0xff]
        %v942 = vld [vmem:[#allocation3 + $0x238] sm:$0xff]
        %v943 = vld [vmem:[#allocation3 + $0x240] sm:$0xff]
        %v944 = vld [vmem:[#allocation3 + $0x248] sm:$0xff]
        %v945 = vld [vmem:[#allocation3 + $0x250] sm:$0xff]
        %v946 = vld [vmem:[#allocation3 + $0x258] sm:$0xff]
        %v947 = vld [vmem:[#allocation3 + $0x260] sm:$0xff]
        %v948 = vld [vmem:[#allocation3 + $0x268] sm:$0xff]
        %v949 = vld [vmem:[#allocation3 + $0x270] sm:$0xff]
        %v950 = vld [vmem:[#allocation3 + $0x278] sm:$0xff]
        %v951 = vld [vmem:[#allocation3 + $0x280] sm:$0xff]
        %v952 = vld [vmem:[#allocation3 + $0x288] sm:$0xff]
        %v953 = vld [vmem:[#allocation3 + $0x290] sm:$0xff]
        %v954 = vld [vmem:[#allocation3 + $0x298] sm:$0xff]
        %v955 = vld [vmem:[#allocation3 + $0x2a0] sm:$0xff]
        %v956 = vld [vmem:[#allocation3 + $0x2a8] sm:$0xff]
        %v957 = vld [vmem:[#allocation3 + $0x2b0] sm:$0xff]
        %v958 = vld [vmem:[#allocation3 + $0x2b8] sm:$0xff]
        %v959 = vld [vmem:[#allocation3 + $0x2c0] sm:$0xff]
        %v960 = vld [vmem:[#allocation3 + $0x2c8] sm:$0xff]
        %v961 = vld [vmem:[#allocation3 + $0x2d0] sm:$0xff]
        %v962 = vld [vmem:[#allocation3 + $0x2d8] sm:$0xff]
        %v963 = vld [vmem:[#allocation3 + $0x2e0] sm:$0xff]
        %v964 = vld [vmem:[#allocation3 + $0x2e8] sm:$0xff]
        %v965 = vld [vmem:[#allocation3 + $0x2f0] sm:$0xff]
        %v966 = vld [vmem:[#allocation3 + $0x2f8] sm:$0xff]
        %v967 = vld [vmem:[%s7] sm:$0xff]
        %v968 = vld [vmem:[%s7 + $0x8] sm:$0xf]
        %v971 = vlaneseq
        %v972 = vshrl.u32 %v971, 7
        %v973 = vsub.s32 0, %v972
        %v974 = vrot.slane %v967, %v973
        %v975 = vlaneseq
        %v976 = vshrl.u32 %v975, 7
        %v977 = vsub.s32 1, %v976
        %v978 = vrot.slane %v967, %v977
        %v979 = vlaneseq
        %v980 = vshrl.u32 %v979, 7
        %v981 = vsub.s32 2, %v980
        %v982 = vrot.slane %v967, %v981
        %v983 = vlaneseq
        %v984 = vshrl.u32 %v983, 7
        %v985 = vsub.s32 3, %v984
        %v986 = vrot.slane %v967, %v985
        %v987 = vlaneseq
        %v988 = vshrl.u32 %v987, 7
        %v989 = vsub.s32 4, %v988
        %v990 = vrot.slane %v967, %v989
        %v991 = vlaneseq
        %v992 = vshrl.u32 %v991, 7
        %v993 = vsub.s32 5, %v992
        %v994 = vrot.slane %v967, %v993
        %v995 = vlaneseq
        %v996 = vshrl.u32 %v995, 7
        %v997 = vsub.s32 6, %v996
        %v998 = vrot.slane %v967, %v997
        %v999 = vlaneseq
        %v1000 = vshrl.u32 %v999, 7
        %v1001 = vsub.s32 7, %v1000
        %v1002 = vrot.slane %v967, %v1001
        %v1003 = vlaneseq
        %v1004 = vshrl.u32 %v1003, 7
        %v1005 = vsub.s32 0, %v1004
        %v1006 = vrot.slane %v968, %v1005
        %v1007 = vlaneseq
        %v1008 = vshrl.u32 %v1007, 7
        %v1009 = vsub.s32 1, %v1008
        %v1010 = vrot.slane %v968, %v1009
        %v1011 = vlaneseq
        %v1012 = vshrl.u32 %v1011, 7
        %v1013 = vsub.s32 2, %v1012
        %v1014 = vrot.slane %v968, %v1013
        %v1015 = vlaneseq
        %v1016 = vshrl.u32 %v1015, 7
        %v1017 = vsub.s32 3, %v1016
        %v1018 = vrot.slane %v968, %v1017
        %v1127 = vunpack.c.l.b16 %v871
        %v1128 = vunpack.c.h.b16 %v871
        %v1129 = vunpack.c.l.b16 %v872
        %v1130 = vunpack.c.h.b16 %v872
        %v1131 = vunpack.c.l.b16 %v873
        %v1132 = vunpack.c.h.b16 %v873
        %v1133 = vunpack.c.l.b16 %v874
        %v1134 = vunpack.c.h.b16 %v874
        %v1135 = vunpack.c.l.b16 %v875
        %v1136 = vunpack.c.h.b16 %v875
        %v1137 = vunpack.c.l.b16 %v876
        %v1138 = vunpack.c.h.b16 %v876
        %v1139 = vunpack.c.l.b16 %v877
        %v1140 = vunpack.c.h.b16 %v877
        %v1141 = vunpack.c.l.b16 %v878
        %v1142 = vunpack.c.h.b16 %v878
        %v1143 = vunpack.c.l.b16 %v879
        %v1144 = vunpack.c.h.b16 %v879
        %v1145 = vunpack.c.l.b16 %v880
        %v1146 = vunpack.c.h.b16 %v880
        %v1147 = vunpack.c.l.b16 %v881
        %v1148 = vunpack.c.h.b16 %v881
        %v1149 = vunpack.c.l.b16 %v882
        %v1150 = vunpack.c.h.b16 %v882
        %v1151 = vunpack.c.l.b16 %v883
        %v1152 = vunpack.c.h.b16 %v883
        %v1153 = vunpack.c.l.b16 %v884
        %v1154 = vunpack.c.h.b16 %v884
        %v1155 = vunpack.c.l.b16 %v885
        %v1156 = vunpack.c.h.b16 %v885
        %v1157 = vunpack.c.l.b16 %v886
        %v1158 = vunpack.c.h.b16 %v886
        %v1159 = vunpack.c.l.b16 %v887
        %v1160 = vunpack.c.h.b16 %v887
        %v1161 = vunpack.c.l.b16 %v888
        %v1162 = vunpack.c.h.b16 %v888
        %v1163 = vunpack.c.l.b16 %v889
        %v1164 = vunpack.c.h.b16 %v889
        %v1165 = vunpack.c.l.b16 %v890
        %v1166 = vunpack.c.h.b16 %v890
        %v1167 = vunpack.c.l.b16 %v891
        %v1168 = vunpack.c.h.b16 %v891
        %v1169 = vunpack.c.l.b16 %v892
        %v1170 = vunpack.c.h.b16 %v892
        %v1171 = vunpack.c.l.b16 %v893
        %v1172 = vunpack.c.h.b16 %v893
        %v1173 = vunpack.c.l.b16 %v894
        %v1174 = vunpack.c.h.b16 %v894
        %v1175 = vunpack.c.l.b16 %v895
        %v1176 = vunpack.c.h.b16 %v895
        %v1177 = vunpack.c.l.b16 %v896
        %v1178 = vunpack.c.h.b16 %v896
        %v1179 = vunpack.c.l.b16 %v897
        %v1180 = vunpack.c.h.b16 %v897
        %v1181 = vunpack.c.l.b16 %v898
        %v1182 = vunpack.c.h.b16 %v898
        %v1183 = vunpack.c.l.b16 %v899
        %v1184 = vunpack.c.h.b16 %v899
        %v1185 = vunpack.c.l.b16 %v900
        %v1186 = vunpack.c.h.b16 %v900
        %v1187 = vunpack.c.l.b16 %v901
        %v1188 = vunpack.c.h.b16 %v901
        %v1189 = vunpack.c.l.b16 %v902
        %v1190 = vunpack.c.h.b16 %v902
        %v1191 = vunpack.c.l.b16 %v903
        %v1192 = vunpack.c.h.b16 %v903
        %v1193 = vunpack.c.l.b16 %v904
        %v1194 = vunpack.c.h.b16 %v904
        %v1195 = vunpack.c.l.b16 %v905
        %v1196 = vunpack.c.h.b16 %v905
        %v1197 = vunpack.c.l.b16 %v906
        %v1198 = vunpack.c.h.b16 %v906
        %v1199 = vunpack.c.l.b16 %v907
        %v1200 = vunpack.c.h.b16 %v907
        %v1201 = vunpack.c.l.b16 %v908
        %v1202 = vunpack.c.h.b16 %v908
        %v1203 = vunpack.c.l.b16 %v909
        %v1204 = vunpack.c.h.b16 %v909
        %v1205 = vunpack.c.l.b16 %v910
        %v1206 = vunpack.c.h.b16 %v910
        %v1207 = vunpack.c.l.b16 %v911
        %v1208 = vunpack.c.h.b16 %v911
        %v1209 = vunpack.c.l.b16 %v912
        %v1210 = vunpack.c.h.b16 %v912
        %v1211 = vunpack.c.l.b16 %v913
        %v1212 = vunpack.c.h.b16 %v913
        %v1213 = vunpack.c.l.b16 %v914
        %v1214 = vunpack.c.h.b16 %v914
        %v1215 = vunpack.c.l.b16 %v915
        %v1216 = vunpack.c.h.b16 %v915
        %v1217 = vunpack.c.l.b16 %v916
        %v1218 = vunpack.c.h.b16 %v916
        %v1219 = vunpack.c.l.b16 %v917
        %v1220 = vunpack.c.h.b16 %v917
        %v1221 = vunpack.c.l.b16 %v918
        %v1222 = vunpack.c.h.b16 %v918
        %v1223 = vunpack.c.l.b16 %v919
        %v1224 = vunpack.c.h.b16 %v919
        %v1225 = vunpack.c.l.b16 %v920
        %v1226 = vunpack.c.h.b16 %v920
        %v1227 = vunpack.c.l.b16 %v921
        %v1228 = vunpack.c.h.b16 %v921
        %v1229 = vunpack.c.l.b16 %v922
        %v1230 = vunpack.c.h.b16 %v922
        %v1231 = vunpack.c.l.b16 %v923
        %v1232 = vunpack.c.h.b16 %v923
        %v1233 = vunpack.c.l.b16 %v924
        %v1234 = vunpack.c.h.b16 %v924
        %v1235 = vunpack.c.l.b16 %v925
        %v1236 = vunpack.c.h.b16 %v925
        %v1237 = vunpack.c.l.b16 %v926
        %v1238 = vunpack.c.h.b16 %v926
        %v1239 = vunpack.c.l.b16 %v927
        %v1240 = vunpack.c.h.b16 %v927
        %v1241 = vunpack.c.l.b16 %v928
        %v1242 = vunpack.c.h.b16 %v928
        %v1243 = vunpack.c.l.b16 %v929
        %v1244 = vunpack.c.h.b16 %v929
        %v1245 = vunpack.c.l.b16 %v930
        %v1246 = vunpack.c.h.b16 %v930
        %v1247 = vunpack.c.l.b16 %v931
        %v1248 = vunpack.c.h.b16 %v931
        %v1249 = vunpack.c.l.b16 %v932
        %v1250 = vunpack.c.h.b16 %v932
        %v1251 = vunpack.c.l.b16 %v933
        %v1252 = vunpack.c.h.b16 %v933
        %v1253 = vunpack.c.l.b16 %v934
        %v1254 = vunpack.c.h.b16 %v934
        %v1255 = vunpack.c.l.b16 %v935
        %v1256 = vunpack.c.h.b16 %v935
        %v1257 = vunpack.c.l.b16 %v936
        %v1258 = vunpack.c.h.b16 %v936
        %v1259 = vunpack.c.l.b16 %v937
        %v1260 = vunpack.c.h.b16 %v937
        %v1261 = vunpack.c.l.b16 %v938
        %v1262 = vunpack.c.h.b16 %v938
        %v1263 = vunpack.c.l.b16 %v939
        %v1264 = vunpack.c.h.b16 %v939
        %v1265 = vunpack.c.l.b16 %v940
        %v1266 = vunpack.c.h.b16 %v940
        %v1267 = vunpack.c.l.b16 %v941
        %v1268 = vunpack.c.h.b16 %v941
        %v1269 = vunpack.c.l.b16 %v942
        %v1270 = vunpack.c.h.b16 %v942
        %v1271 = vunpack.c.l.b16 %v943
        %v1272 = vunpack.c.h.b16 %v943
        %v1273 = vunpack.c.l.b16 %v944
        %v1274 = vunpack.c.h.b16 %v944
        %v1275 = vunpack.c.l.b16 %v945
        %v1276 = vunpack.c.h.b16 %v945
        %v1277 = vunpack.c.l.b16 %v946
        %v1278 = vunpack.c.h.b16 %v946
        %v1279 = vunpack.c.l.b16 %v947
        %v1280 = vunpack.c.h.b16 %v947
        %v1281 = vunpack.c.l.b16 %v948
        %v1282 = vunpack.c.h.b16 %v948
        %v1283 = vunpack.c.l.b16 %v949
        %v1284 = vunpack.c.h.b16 %v949
        %v1285 = vunpack.c.l.b16 %v950
        %v1286 = vunpack.c.h.b16 %v950
        %v1287 = vunpack.c.l.b16 %v951
        %v1288 = vunpack.c.h.b16 %v951
        %v1289 = vunpack.c.l.b16 %v952
        %v1290 = vunpack.c.h.b16 %v952
        %v1291 = vunpack.c.l.b16 %v953
        %v1292 = vunpack.c.h.b16 %v953
        %v1293 = vunpack.c.l.b16 %v954
        %v1294 = vunpack.c.h.b16 %v954
        %v1295 = vunpack.c.l.b16 %v955
        %v1296 = vunpack.c.h.b16 %v955
        %v1297 = vunpack.c.l.b16 %v956
        %v1298 = vunpack.c.h.b16 %v956
        %v1299 = vunpack.c.l.b16 %v957
        %v1300 = vunpack.c.h.b16 %v957
        %v1301 = vunpack.c.l.b16 %v958
        %v1302 = vunpack.c.h.b16 %v958
        %v1303 = vunpack.c.l.b16 %v959
        %v1304 = vunpack.c.h.b16 %v959
        %v1305 = vunpack.c.l.b16 %v960
        %v1306 = vunpack.c.h.b16 %v960
        %v1307 = vunpack.c.l.b16 %v961
        %v1308 = vunpack.c.h.b16 %v961
        %v1309 = vunpack.c.l.b16 %v962
        %v1310 = vunpack.c.h.b16 %v962
        %v1311 = vunpack.c.l.b16 %v963
        %v1312 = vunpack.c.h.b16 %v963
        %v1313 = vunpack.c.l.b16 %v964
        %v1314 = vunpack.c.h.b16 %v964
        %v1315 = vunpack.c.l.b16 %v965
        %v1316 = vunpack.c.h.b16 %v965
        %v1317 = vunpack.c.l.b16 %v966
        %v1318 = vunpack.c.h.b16 %v966
        %v1319 = vpack.c.b16 %v1139, %v1127
        %v1320 = vpack.c.b16 %v1140, %v1128
        %v1321 = vpack.c.b16 %v1141, %v1129
        %v1322 = vpack.c.b16 %v1142, %v1130
        %v1323 = vpack.c.b16 %v1143, %v1131
        %v1324 = vpack.c.b16 %v1144, %v1132
        %v1325 = vpack.c.b16 %v1145, %v1133
        %v1326 = vpack.c.b16 %v1146, %v1134
        %v1327 = vpack.c.b16 %v1147, %v1135
        %v1328 = vpack.c.b16 %v1148, %v1136
        %v1329 = vpack.c.b16 %v1149, %v1137
        %v1330 = vpack.c.b16 %v1150, %v1138
        %v1331 = vpack.c.b16 %v1163, %v1151
        %v1332 = vpack.c.b16 %v1164, %v1152
        %v1333 = vpack.c.b16 %v1165, %v1153
        %v1334 = vpack.c.b16 %v1166, %v1154
        %v1335 = vpack.c.b16 %v1167, %v1155
        %v1336 = vpack.c.b16 %v1168, %v1156
        %v1337 = vpack.c.b16 %v1169, %v1157
        %v1338 = vpack.c.b16 %v1170, %v1158
        %v1339 = vpack.c.b16 %v1171, %v1159
        %v1340 = vpack.c.b16 %v1172, %v1160
        %v1341 = vpack.c.b16 %v1173, %v1161
        %v1342 = vpack.c.b16 %v1174, %v1162
        %v1343 = vpack.c.b16 %v1187, %v1175
        %v1344 = vpack.c.b16 %v1188, %v1176
        %v1345 = vpack.c.b16 %v1189, %v1177
        %v1346 = vpack.c.b16 %v1190, %v1178
        %v1347 = vpack.c.b16 %v1191, %v1179
        %v1348 = vpack.c.b16 %v1192, %v1180
        %v1349 = vpack.c.b16 %v1193, %v1181
        %v1350 = vpack.c.b16 %v1194, %v1182
        %v1351 = vpack.c.b16 %v1195, %v1183
        %v1352 = vpack.c.b16 %v1196, %v1184
        %v1353 = vpack.c.b16 %v1197, %v1185
        %v1354 = vpack.c.b16 %v1198, %v1186
        %v1355 = vpack.c.b16 %v1211, %v1199
        %v1356 = vpack.c.b16 %v1212, %v1200
        %v1357 = vpack.c.b16 %v1213, %v1201
        %v1358 = vpack.c.b16 %v1214, %v1202
        %v1359 = vpack.c.b16 %v1215, %v1203
        %v1360 = vpack.c.b16 %v1216, %v1204
        %v1361 = vpack.c.b16 %v1217, %v1205
        %v1362 = vpack.c.b16 %v1218, %v1206
        %v1363 = vpack.c.b16 %v1219, %v1207
        %v1364 = vpack.c.b16 %v1220, %v1208
        %v1365 = vpack.c.b16 %v1221, %v1209
        %v1366 = vpack.c.b16 %v1222, %v1210
        %v1367 = vpack.c.b16 %v1235, %v1223
        %v1368 = vpack.c.b16 %v1236, %v1224
        %v1369 = vpack.c.b16 %v1237, %v1225
        %v1370 = vpack.c.b16 %v1238, %v1226
        %v1371 = vpack.c.b16 %v1239, %v1227
        %v1372 = vpack.c.b16 %v1240, %v1228
        %v1373 = vpack.c.b16 %v1241, %v1229
        %v1374 = vpack.c.b16 %v1242, %v1230
        %v1375 = vpack.c.b16 %v1243, %v1231
        %v1376 = vpack.c.b16 %v1244, %v1232
        %v1377 = vpack.c.b16 %v1245, %v1233
        %v1378 = vpack.c.b16 %v1246, %v1234
        %v1379 = vpack.c.b16 %v1259, %v1247
        %v1380 = vpack.c.b16 %v1260, %v1248
        %v1381 = vpack.c.b16 %v1261, %v1249
        %v1382 = vpack.c.b16 %v1262, %v1250
        %v1383 = vpack.c.b16 %v1263, %v1251
        %v1384 = vpack.c.b16 %v1264, %v1252
        %v1385 = vpack.c.b16 %v1265, %v1253
        %v1386 = vpack.c.b16 %v1266, %v1254
        %v1387 = vpack.c.b16 %v1267, %v1255
        %v1388 = vpack.c.b16 %v1268, %v1256
        %v1389 = vpack.c.b16 %v1269, %v1257
        %v1390 = vpack.c.b16 %v1270, %v1258
        %v1391 = vpack.c.b16 %v1283, %v1271
        %v1392 = vpack.c.b16 %v1284, %v1272
        %v1393 = vpack.c.b16 %v1285, %v1273
        %v1394 = vpack.c.b16 %v1286, %v1274
        %v1395 = vpack.c.b16 %v1287, %v1275
        %v1396 = vpack.c.b16 %v1288, %v1276
        %v1397 = vpack.c.b16 %v1289, %v1277
        %v1398 = vpack.c.b16 %v1290, %v1278
        %v1399 = vpack.c.b16 %v1291, %v1279
        %v1400 = vpack.c.b16 %v1292, %v1280
        %v1401 = vpack.c.b16 %v1293, %v1281
        %v1402 = vpack.c.b16 %v1294, %v1282
        %v1403 = vpack.c.b16 %v1307, %v1295
        %v1404 = vpack.c.b16 %v1308, %v1296
        %v1405 = vpack.c.b16 %v1309, %v1297
        %v1406 = vpack.c.b16 %v1310, %v1298
        %v1407 = vpack.c.b16 %v1311, %v1299
        %v1408 = vpack.c.b16 %v1312, %v1300
        %v1409 = vpack.c.b16 %v1313, %v1301
        %v1410 = vpack.c.b16 %v1314, %v1302
        %v1411 = vpack.c.b16 %v1315, %v1303
        %v1412 = vpack.c.b16 %v1316, %v1304
        %v1413 = vpack.c.b16 %v1317, %v1305
        %v1414 = vpack.c.b16 %v1318, %v1306
        %1511 = vmatprep.subr.bf16.mxu0 %v1320
        %1512 = vmatpush1.bf16.msra.mxu0 %v1319
        %1513 = vmatprep.subr.bf16.mxu0 %v1332
        %1514 = vmatpush1.bf16.msra.mxu0 %v1331
        %1515 = vmatprep.subr.bf16.mxu0 %v1344
        %1516 = vmatpush1.bf16.msra.mxu0 %v1343
        %1517 = vmatprep.subr.bf16.mxu0 %v1356
        %1518 = vmatpush1.bf16.msra.mxu0 %v1355
        %1519 = vmatprep.subr.bf16.mxu0 %v1368
        %1520 = vmatpush1.bf16.msra.mxu0 %v1367
        %1521 = vmatprep.subr.bf16.mxu0 %v1380
        %1522 = vmatpush1.bf16.msra.mxu0 %v1379
        %1523 = vmatprep.subr.bf16.mxu0 %v1392
        %1524 = vmatpush1.bf16.msra.mxu0 %v1391
        %1525 = vmatprep.subr.bf16.mxu0 %v1404
        %1526 = vmatpush1.bf16.msra.mxu0 %v1403
        %1527 = vmatprep.subr.bf16.mxu0 0
        %1528 = vmatpush1.bf16.msra.mxu0 0
        %1529 = vmatprep.subr.bf16.mxu0 0
        %1530 = vmatpush1.bf16.msra.mxu0 0
        %1531 = vmatprep.subr.bf16.mxu0 0
        %1532 = vmatpush1.bf16.msra.mxu0 0
        %1533 = vmatprep.subr.bf16.mxu0 0
        %1534 = vmatpush1.bf16.msra.mxu0 0
        %1535 = vmatprep.subr.bf16.mxu0 0
        %1536 = vmatpush1.bf16.msra.mxu0 0
        %1537 = vmatprep.subr.bf16.mxu0 0
        %1538 = vmatpush1.bf16.msra.mxu0 0
        %1539 = vmatprep.subr.bf16.mxu0 0
        %1540 = vmatpush1.bf16.msra.mxu0 0
        %1541 = vmatprep.subr.bf16.mxu0 0
        %1542 = vmatpush1.bf16.msra.mxu0 0
        %1543 = vmatprep.mubr.bf16.mxu0 0
        %1544 = vmatmul.mubr.bf16.gmra.mrb[0].mxu0 %v870
        %v1545 = vpop.f32.mrb[0].mxu0
        %v1546 = vadd.f32 %v974, %v1545
        %v1547 = vpop.f32.mrb[0].mxu0
        %v1548 = vadd.f32 %v978, %v1547
        %v1549 = vpop.f32.mrb[0].mxu0
        %v1550 = vadd.f32 %v974, %v1549
        %v1551 = vpop.f32.mrb[0].mxu0
        %v1552 = vadd.f32 %v978, %v1551
        %1553 = vdwg.mxu0
        %1554 = vmatprep.subr.bf16.mxu0 %v1322
        %1555 = vmatpush1.bf16.msra.mxu0 %v1321
        %1556 = vmatprep.subr.bf16.mxu0 %v1334
        %1557 = vmatpush1.bf16.msra.mxu0 %v1333
        %1558 = vmatprep.subr.bf16.mxu0 %v1346
        %1559 = vmatpush1.bf16.msra.mxu0 %v1345
        %1560 = vmatprep.subr.bf16.mxu0 %v1358
        %1561 = vmatpush1.bf16.msra.mxu0 %v1357
        %1562 = vmatprep.subr.bf16.mxu0 %v1370
        %1563 = vmatpush1.bf16.msra.mxu0 %v1369
        %1564 = vmatprep.subr.bf16.mxu0 %v1382
        %1565 = vmatpush1.bf16.msra.mxu0 %v1381
        %1566 = vmatprep.subr.bf16.mxu0 %v1394
        %1567 = vmatpush1.bf16.msra.mxu0 %v1393
        %1568 = vmatprep.subr.bf16.mxu0 %v1406
        %1569 = vmatpush1.bf16.msra.mxu0 %v1405
        %1570 = vmatprep.subr.bf16.mxu0 0
        %1571 = vmatpush1.bf16.msra.mxu0 0
        %1572 = vmatprep.subr.bf16.mxu0 0
        %1573 = vmatpush1.bf16.msra.mxu0 0
        %1574 = vmatprep.subr.bf16.mxu0 0
        %1575 = vmatpush1.bf16.msra.mxu0 0
        %1576 = vmatprep.subr.bf16.mxu0 0
        %1577 = vmatpush1.bf16.msra.mxu0 0
        %1578 = vmatprep.subr.bf16.mxu0 0
        %1579 = vmatpush1.bf16.msra.mxu0 0
        %1580 = vmatprep.subr.bf16.mxu0 0
        %1581 = vmatpush1.bf16.msra.mxu0 0
        %1582 = vmatprep.subr.bf16.mxu0 0
        %1583 = vmatpush1.bf16.msra.mxu0 0
        %1584 = vmatprep.subr.bf16.mxu0 0
        %1585 = vmatpush1.bf16.msra.mxu0 0
        %1586 = vmatprep.mubr.bf16.mxu0 0
        %1587 = vmatmul.mubr.bf16.gmra.mrb[0].mxu0 %v870
        %v1588 = vpop.f32.mrb[0].mxu0
        %v1589 = vadd.f32 %v982, %v1588
        %v1590 = vpop.f32.mrb[0].mxu0
        %v1591 = vadd.f32 %v986, %v1590
        %v1592 = vpop.f32.mrb[0].mxu0
        %v1593 = vadd.f32 %v982, %v1592
        %v1594 = vpop.f32.mrb[0].mxu0
        %v1595 = vadd.f32 %v986, %v1594
        %1596 = vdwg.mxu0
        %1597 = vmatprep.subr.bf16.mxu0 %v1324
        %1598 = vmatpush1.bf16.msra.mxu0 %v1323
        %1599 = vmatprep.subr.bf16.mxu0 %v1336
        %1600 = vmatpush1.bf16.msra.mxu0 %v1335
        %1601 = vmatprep.subr.bf16.mxu0 %v1348
        %1602 = vmatpush1.bf16.msra.mxu0 %v1347
        %1603 = vmatprep.subr.bf16.mxu0 %v1360
        %1604 = vmatpush1.bf16.msra.mxu0 %v1359
        %1605 = vmatprep.subr.bf16.mxu0 %v1372
        %1606 = vmatpush1.bf16.msra.mxu0 %v1371
        %1607 = vmatprep.subr.bf16.mxu0 %v1384
        %1608 = vmatpush1.bf16.msra.mxu0 %v1383
        %1609 = vmatprep.subr.bf16.mxu0 %v1396
        %1610 = vmatpush1.bf16.msra.mxu0 %v1395
        %1611 = vmatprep.subr.bf16.mxu0 %v1408
        %1612 = vmatpush1.bf16.msra.mxu0 %v1407
        %1613 = vmatprep.subr.bf16.mxu0 0
        %1614 = vmatpush1.bf16.msra.mxu0 0
        %1615 = vmatprep.subr.bf16.mxu0 0
        %1616 = vmatpush1.bf16.msra.mxu0 0
        %1617 = vmatprep.subr.bf16.mxu0 0
        %1618 = vmatpush1.bf16.msra.mxu0 0
        %1619 = vmatprep.subr.bf16.mxu0 0
        %1620 = vmatpush1.bf16.msra.mxu0 0
        %1621 = vmatprep.subr.bf16.mxu0 0
        %1622 = vmatpush1.bf16.msra.mxu0 0
        %1623 = vmatprep.subr.bf16.mxu0 0
        %1624 = vmatpush1.bf16.msra.mxu0 0
        %1625 = vmatprep.subr.bf16.mxu0 0
        %1626 = vmatpush1.bf16.msra.mxu0 0
        %1627 = vmatprep.subr.bf16.mxu0 0
        %1628 = vmatpush1.bf16.msra.mxu0 0
        %1629 = vmatprep.mubr.bf16.mxu0 0
        %1630 = vmatmul.mubr.bf16.gmra.mrb[0].mxu0 %v870
        %v1631 = vpop.f32.mrb[0].mxu0
        %v1632 = vadd.f32 %v990, %v1631
        %v1633 = vpop.f32.mrb[0].mxu0
        %v1634 = vadd.f32 %v994, %v1633
        %v1635 = vpop.f32.mrb[0].mxu0
        %v1636 = vadd.f32 %v990, %v1635
        %v1637 = vpop.f32.mrb[0].mxu0
        %v1638 = vadd.f32 %v994, %v1637
        %1639 = vdwg.mxu0
        %1640 = vmatprep.subr.bf16.mxu0 %v1326
        %1641 = vmatpush1.bf16.msra.mxu0 %v1325
        %1642 = vmatprep.subr.bf16.mxu0 %v1338
        %1643 = vmatpush1.bf16.msra.mxu0 %v1337
        %1644 = vmatprep.subr.bf16.mxu0 %v1350
        %1645 = vmatpush1.bf16.msra.mxu0 %v1349
        %1646 = vmatprep.subr.bf16.mxu0 %v1362
        %1647 = vmatpush1.bf16.msra.mxu0 %v1361
        %1648 = vmatprep.subr.bf16.mxu0 %v1374
        %1649 = vmatpush1.bf16.msra.mxu0 %v1373
        %1650 = vmatprep.subr.bf16.mxu0 %v1386
        %1651 = vmatpush1.bf16.msra.mxu0 %v1385
        %1652 = vmatprep.subr.bf16.mxu0 %v1398
        %1653 = vmatpush1.bf16.msra.mxu0 %v1397
        %1654 = vmatprep.subr.bf16.mxu0 %v1410
        %1655 = vmatpush1.bf16.msra.mxu0 %v1409
        %1656 = vmatprep.subr.bf16.mxu0 0
        %1657 = vmatpush1.bf16.msra.mxu0 0
        %1658 = vmatprep.subr.bf16.mxu0 0
        %1659 = vmatpush1.bf16.msra.mxu0 0
        %1660 = vmatprep.subr.bf16.mxu0 0
        %1661 = vmatpush1.bf16.msra.mxu0 0
        %1662 = vmatprep.subr.bf16.mxu0 0
        %1663 = vmatpush1.bf16.msra.mxu0 0
        %1664 = vmatprep.subr.bf16.mxu0 0
        %1665 = vmatpush1.bf16.msra.mxu0 0
        %1666 = vmatprep.subr.bf16.mxu0 0
        %1667 = vmatpush1.bf16.msra.mxu0 0
        %1668 = vmatprep.subr.bf16.mxu0 0
        %1669 = vmatpush1.bf16.msra.mxu0 0
        %1670 = vmatprep.subr.bf16.mxu0 0
        %1671 = vmatpush1.bf16.msra.mxu0 0
        %1672 = vmatprep.mubr.bf16.mxu0 0
        %1673 = vmatmul.mubr.bf16.gmra.mrb[0].mxu0 %v870
        %v1674 = vpop.f32.mrb[0].mxu0
        %v1675 = vadd.f32 %v998, %v1674
        %v1676 = vpop.f32.mrb[0].mxu0
        %v1677 = vadd.f32 %v1002, %v1676
        %v1678 = vpop.f32.mrb[0].mxu0
        %v1679 = vadd.f32 %v998, %v1678
        %v1680 = vpop.f32.mrb[0].mxu0
        %v1681 = vadd.f32 %v1002, %v1680
        %1682 = vdwg.mxu0
        %1683 = vmatprep.subr.bf16.mxu0 %v1328
        %1684 = vmatpush1.bf16.msra.mxu0 %v1327
        %1685 = vmatprep.subr.bf16.mxu0 %v1340
        %1686 = vmatpush1.bf16.msra.mxu0 %v1339
        %1687 = vmatprep.subr.bf16.mxu0 %v1352
        %1688 = vmatpush1.bf16.msra.mxu0 %v1351
        %1689 = vmatprep.subr.bf16.mxu0 %v1364
        %1690 = vmatpush1.bf16.msra.mxu0 %v1363
        %1691 = vmatprep.subr.bf16.mxu0 %v1376
        %1692 = vmatpush1.bf16.msra.mxu0 %v1375
        %1693 = vmatprep.subr.bf16.mxu0 %v1388
        %1694 = vmatpush1.bf16.msra.mxu0 %v1387
        %1695 = vmatprep.subr.bf16.mxu0 %v1400
        %1696 = vmatpush1.bf16.msra.mxu0 %v1399
        %1697 = vmatprep.subr.bf16.mxu0 %v1412
        %1698 = vmatpush1.bf16.msra.mxu0 %v1411
        %1699 = vmatprep.subr.bf16.mxu0 0
        %1700 = vmatpush1.bf16.msra.mxu0 0
        %1701 = vmatprep.subr.bf16.mxu0 0
        %1702 = vmatpush1.bf16.msra.mxu0 0
        %1703 = vmatprep.subr.bf16.mxu0 0
        %1704 = vmatpush1.bf16.msra.mxu0 0
        %1705 = vmatprep.subr.bf16.mxu0 0
        %1706 = vmatpush1.bf16.msra.mxu0 0
        %1707 = vmatprep.subr.bf16.mxu0 0
        %1708 = vmatpush1.bf16.msra.mxu0 0
        %1709 = vmatprep.subr.bf16.mxu0 0
        %1710 = vmatpush1.bf16.msra.mxu0 0
        %1711 = vmatprep.subr.bf16.mxu0 0
        %1712 = vmatpush1.bf16.msra.mxu0 0
        %1713 = vmatprep.subr.bf16.mxu0 0
        %1714 = vmatpush1.bf16.msra.mxu0 0
        %1715 = vmatprep.mubr.bf16.mxu0 0
        %1716 = vmatmul.mubr.bf16.gmra.mrb[0].mxu0 %v870
        %v1717 = vpop.f32.mrb[0].mxu0
        %v1718 = vadd.f32 %v1006, %v1717
        %v1719 = vpop.f32.mrb[0].mxu0
        %v1720 = vadd.f32 %v1010, %v1719
        %v1721 = vpop.f32.mrb[0].mxu0
        %v1722 = vadd.f32 %v1006, %v1721
        %v1723 = vpop.f32.mrb[0].mxu0
        %v1724 = vadd.f32 %v1010, %v1723
        %1725 = vdwg.mxu0
        %1726 = vmatprep.subr.bf16.mxu0 %v1330
        %1727 = vmatpush1.bf16.msra.mxu0 %v1329
        %1728 = vmatprep.subr.bf16.mxu0 %v1342
        %1729 = vmatpush1.bf16.msra.mxu0 %v1341
        %1730 = vmatprep.subr.bf16.mxu0 %v1354
        %1731 = vmatpush1.bf16.msra.mxu0 %v1353
        %1732 = vmatprep.subr.bf16.mxu0 %v1366
        %1733 = vmatpush1.bf16.msra.mxu0 %v1365
        %1734 = vmatprep.subr.bf16.mxu0 %v1378
        %1735 = vmatpush1.bf16.msra.mxu0 %v1377
        %1736 = vmatprep.subr.bf16.mxu0 %v1390
        %1737 = vmatpush1.bf16.msra.mxu0 %v1389
        %1738 = vmatprep.subr.bf16.mxu0 %v1402
        %1739 = vmatpush1.bf16.msra.mxu0 %v1401
        %1740 = vmatprep.subr.bf16.mxu0 %v1414
        %1741 = vmatpush1.bf16.msra.mxu0 %v1413
        %1742 = vmatprep.subr.bf16.mxu0 0
        %1743 = vmatpush1.bf16.msra.mxu0 0
        %1744 = vmatprep.subr.bf16.mxu0 0
        %1745 = vmatpush1.bf16.msra.mxu0 0
        %1746 = vmatprep.subr.bf16.mxu0 0
        %1747 = vmatpush1.bf16.msra.mxu0 0
        %1748 = vmatprep.subr.bf16.mxu0 0
        %1749 = vmatpush1.bf16.msra.mxu0 0
        %1750 = vmatprep.subr.bf16.mxu0 0
        %1751 = vmatpush1.bf16.msra.mxu0 0
        %1752 = vmatprep.subr.bf16.mxu0 0
        %1753 = vmatpush1.bf16.msra.mxu0 0
        %1754 = vmatprep.subr.bf16.mxu0 0
        %1755 = vmatpush1.bf16.msra.mxu0 0
        %1756 = vmatprep.subr.bf16.mxu0 0
        %1757 = vmatpush1.bf16.msra.mxu0 0
        %1758 = vmatprep.mubr.bf16.mxu0 0
        %1759 = vmatmul.mubr.bf16.gmra.mrb[0].mxu0 %v870
        %v1760 = vpop.f32.mrb[0].mxu0
        %v1761 = vadd.f32 %v1014, %v1760
        %v1762 = vpop.f32.mrb[0].mxu0
        %v1763 = vadd.f32 %v1018, %v1762
        %v1764 = vpop.f32.mrb[0].mxu0
        %v1765 = vadd.f32 %v1014, %v1764
        %v1766 = vpop.f32.mrb[0].mxu0
        %v1767 = vadd.f32 %v1018, %v1766
        %1768 = vdwg.mxu0
        %v1769 = vpack.c.bf16 %v1550, %v1546
        %v1770 = vpack.c.bf16 %v1552, %v1548
        %v1771 = vpack.c.bf16 %v1593, %v1589
        %v1772 = vpack.c.bf16 %v1595, %v1591
        %v1773 = vpack.c.bf16 %v1636, %v1632
        %v1774 = vpack.c.bf16 %v1638, %v1634
        %v1775 = vpack.c.bf16 %v1679, %v1675
        %v1776 = vpack.c.bf16 %v1681, %v1677
        %v1777 = vpack.c.bf16 %v1722, %v1718
        %v1778 = vpack.c.bf16 %v1724, %v1720
        %v1779 = vpack.c.bf16 %v1765, %v1761
        %v1780 = vpack.c.bf16 %v1767, %v1763
        %1781 = vmatprep.subr.bf16.mxu0 0
        %1782 = vmatpush1.bf16.xpose.msra.mxu0 %v1773
        %1783 = vmatprep.subr.bf16.mxu0 0
        %1784 = vmatpush1.bf16.xpose.msra.mxu0 0
        %1785 = vmatprep.subr.bf16.mxu0 0
        %1786 = vmatpush1.bf16.xpose.msra.mxu0 0
        %1787 = vmatprep.subr.bf16.mxu0 0
        %1788 = vmatpush1.bf16.xpose.msra.mxu0 0
        %1789 = vmatprep.subr.bf16.mxu0 0
        %1790 = vmatpush1.bf16.xpose.msra.mxu0 0
        %1791 = vmatprep.subr.bf16.mxu0 0
        %1792 = vmatpush1.bf16.xpose.msra.mxu0 0
        %1793 = vmatprep.subr.bf16.mxu0 0
        %1794 = vmatpush1.bf16.xpose.msra.mxu0 0
        %1795 = vmatprep.subr.bf16.mxu0 0
        %1796 = vmatpush1.bf16.xpose.msra.mxu0 0
        %1797 = vmatprep.subr.bf16.mxu0 0
        %1798 = vmatpush1.bf16.xpose.msra.mxu0 0
        %1799 = vmatprep.subr.bf16.mxu0 0
        %1800 = vmatpush1.bf16.xpose.msra.mxu0 0
        %1801 = vmatprep.subr.bf16.mxu0 0
        %1802 = vmatpush1.bf16.xpose.msra.mxu0 0
        %1803 = vmatprep.subr.bf16.mxu0 0
        %1804 = vmatpush1.bf16.xpose.msra.mxu0 0
        %1805 = vmatprep.subr.bf16.mxu0 0
        %1806 = vmatpush1.bf16.xpose.msra.mxu0 0
        %1807 = vmatprep.subr.bf16.mxu0 0
        %1808 = vmatpush1.bf16.xpose.msra.mxu0 0
        %1809 = vmatprep.subr.bf16.mxu0 0
        %1810 = vmatpush1.bf16.xpose.msra.mxu0 0
        %1811 = vmatprep.subr.bf16.mxu0 0
        %1812 = vmatpush1.bf16.xpose.msra.mxu0 0
        %1813 = vmatprep.mubr.bf16.mxu0 0
        %1814 = vmatmul.mubr.bf16.gmra.mrb[0].mxu0 %v1769
        %v1815 = vpop.f32.mrb[0].mxu0
        %v1816 = vadd.f32 0.0, %v1815
        %v1817 = vpop.f32.mrb[0].mxu0
        %v1818 = vpop.f32.mrb[0].mxu0
        %v1819 = vadd.f32 0.0, %v1818
        %v1820 = vpop.f32.mrb[0].mxu0
        %1821 = vdwg.mxu0
        %v1822 = vmul.f32 %v1816, 0.25
        %v1823 = vmul.f32 %v1819, 0.25
        %v1824 = vadd.f32 %v1822, %v702
        %v1825 = vadd.f32 %v1823, %v703
        %vm1826 = vcmask 130048
        %v1827 = vsel %vm1826, %v1824, -inf
        %1828 = vmax.xlane.f32.xlu0 %v1827
        %v1829 = vpop.xlane.xlu0 %1828
        %v1830 = vsel %vm1826, %v1825, -inf
        %1831 = vmax.xlane.f32.xlu0 %v1830
        %v1832 = vpop.xlane.xlu0 %1831
        %v1833 = vsub.f32 %v1824, %v1829
        %v1834 = vsub.f32 %v1825, %v1832
        %v1835 = vmul.f32 %v1833, 1.442695
        %v1836 = vpow.pop %v1835
        %v1837 = vmul.f32 %v1834, 1.442695
        %v1838 = vpow.pop %v1837
        %v1839 = vsel %vm1826, %v1836, 0.0
        %1840 = vadd.xlane.f32.xlu0 %v1839
        %v1841 = vpop.xlane.xlu0 %1840
        %v1842 = vsel %vm1826, %v1838, 0.0
        %1843 = vadd.xlane.f32.xlu0 %v1842
        %v1844 = vpop.xlane.xlu0 %1843
        %v1845 = vpack.c.bf16 %v1838, %v1836
        %v1847 = vsel %vm1826, %v1845, 0
        %1849 = vmatprep.subr.bf16.mxu0 0
        %1850 = vmatpush1.bf16.msra.mxu0 %v1777
        %1851 = vmatprep.subr.bf16.mxu0 0
        %1852 = vmatpush1.bf16.msra.mxu0 0
        %1853 = vmatprep.subr.bf16.mxu0 0
        %1854 = vmatpush1.bf16.msra.mxu0 0
        %1855 = vmatprep.subr.bf16.mxu0 0
        %1856 = vmatpush1.bf16.msra.mxu0 0
        %1857 = vmatprep.subr.bf16.mxu0 0
        %1858 = vmatpush1.bf16.msra.mxu0 0
        %1859 = vmatprep.subr.bf16.mxu0 0
        %1860 = vmatpush1.bf16.msra.mxu0 0
        %1861 = vmatprep.subr.bf16.mxu0 0
        %1862 = vmatpush1.bf16.msra.mxu0 0
        %1863 = vmatprep.subr.bf16.mxu0 0
        %1864 = vmatpush1.bf16.msra.mxu0 0
        %1865 = vmatprep.subr.bf16.mxu0 0
        %1866 = vmatpush1.bf16.msra.mxu0 0
        %1867 = vmatprep.subr.bf16.mxu0 0
        %1868 = vmatpush1.bf16.msra.mxu0 0
        %1869 = vmatprep.subr.bf16.mxu0 0
        %1870 = vmatpush1.bf16.msra.mxu0 0
        %1871 = vmatprep.subr.bf16.mxu0 0
        %1872 = vmatpush1.bf16.msra.mxu0 0
        %1873 = vmatprep.subr.bf16.mxu0 0
        %1874 = vmatpush1.bf16.msra.mxu0 0
        %1875 = vmatprep.subr.bf16.mxu0 0
        %1876 = vmatpush1.bf16.msra.mxu0 0
        %1877 = vmatprep.subr.bf16.mxu0 0
        %1878 = vmatpush1.bf16.msra.mxu0 0
        %1879 = vmatprep.subr.bf16.mxu0 0
        %1880 = vmatpush1.bf16.msra.mxu0 0
        %1881 = vmatprep.mubr.bf16.mxu0 0
        %1882 = vmatmul.mubr.bf16.gmra.mrb[0].mxu0 %v1847
        %v1883 = vpop.f32.mrb[0].mxu0
        %v1884 = vadd.f32 0.0, %v1883
        %v1885 = vpop.f32.mrb[0].mxu0
        %v1886 = vpop.f32.mrb[0].mxu0
        %v1887 = vadd.f32 0.0, %v1886
        %v1888 = vpop.f32.mrb[0].mxu0
        %1889 = vdwg.mxu0
        %v1890 = vrcp.pop %v1841
        %v1891 = vrcp.pop %v1844
        %v1892 = vmul.f32 %v1884, %v1890
        %v1893 = vmul.f32 %v1887, %v1891
        %1894 = vmatprep.subr.bf16.mxu0 0
        %1895 = vmatpush1.bf16.xpose.msra.mxu0 %v1774
        %1896 = vmatprep.subr.bf16.mxu0 0
        %1897 = vmatpush1.bf16.xpose.msra.mxu0 0
        %1898 = vmatprep.subr.bf16.mxu0 0
        %1899 = vmatpush1.bf16.xpose.msra.mxu0 0
        %1900 = vmatprep.subr.bf16.mxu0 0
        %1901 = vmatpush1.bf16.xpose.msra.mxu0 0
        %1902 = vmatprep.subr.bf16.mxu0 0
        %1903 = vmatpush1.bf16.xpose.msra.mxu0 0
        %1904 = vmatprep.subr.bf16.mxu0 0
        %1905 = vmatpush1.bf16.xpose.msra.mxu0 0
        %1906 = vmatprep.subr.bf16.mxu0 0
        %1907 = vmatpush1.bf16.xpose.msra.mxu0 0
        %1908 = vmatprep.subr.bf16.mxu0 0
        %1909 = vmatpush1.bf16.xpose.msra.mxu0 0
        %1910 = vmatprep.subr.bf16.mxu0 0
        %1911 = vmatpush1.bf16.xpose.msra.mxu0 0
        %1912 = vmatprep.subr.bf16.mxu0 0
        %1913 = vmatpush1.bf16.xpose.msra.mxu0 0
        %1914 = vmatprep.subr.bf16.mxu0 0
        %1915 = vmatpush1.bf16.xpose.msra.mxu0 0
        %1916 = vmatprep.subr.bf16.mxu0 0
        %1917 = vmatpush1.bf16.xpose.msra.mxu0 0
        %1918 = vmatprep.subr.bf16.mxu0 0
        %1919 = vmatpush1.bf16.xpose.msra.mxu0 0
        %1920 = vmatprep.subr.bf16.mxu0 0
        %1921 = vmatpush1.bf16.xpose.msra.mxu0 0
        %1922 = vmatprep.subr.bf16.mxu0 0
        %1923 = vmatpush1.bf16.xpose.msra.mxu0 0
        %1924 = vmatprep.subr.bf16.mxu0 0
        %1925 = vmatpush1.bf16.xpose.msra.mxu0 0
        %1926 = vmatprep.mubr.bf16.mxu0 0
        %1927 = vmatmul.mubr.bf16.gmra.mrb[0].mxu0 %v1770
        %v1928 = vpop.f32.mrb[0].mxu0
        %v1929 = vadd.f32 0.0, %v1928
        %v1930 = vpop.f32.mrb[0].mxu0
        %v1931 = vpop.f32.mrb[0].mxu0
        %v1932 = vadd.f32 0.0, %v1931
        %v1933 = vpop.f32.mrb[0].mxu0
        %1934 = vdwg.mxu0
        %v1935 = vmul.f32 %v1929, 0.25
        %v1936 = vmul.f32 %v1932, 0.25
        %v1937 = vadd.f32 %v1935, %v702
        %v1938 = vadd.f32 %v1936, %v703
        %v1939 = vsel %vm1826, %v1937, -inf
        %1940 = vmax.xlane.f32.xlu0 %v1939
        %v1941 = vpop.xlane.xlu0 %1940
        %v1942 = vsel %vm1826, %v1938, -inf
        %1943 = vmax.xlane.f32.xlu0 %v1942
        %v1944 = vpop.xlane.xlu0 %1943
        %v1945 = vsub.f32 %v1937, %v1941
        %v1946 = vsub.f32 %v1938, %v1944
        %v1947 = vmul.f32 %v1945, 1.442695
        %v1948 = vpow.pop %v1947
        %v1949 = vmul.f32 %v1946, 1.442695
        %v1950 = vpow.pop %v1949
        %v1951 = vsel %vm1826, %v1948, 0.0
        %1952 = vadd.xlane.f32.xlu0 %v1951
        %v1953 = vpop.xlane.xlu0 %1952
        %v1954 = vsel %vm1826, %v1950, 0.0
        %1955 = vadd.xlane.f32.xlu0 %v1954
        %v1956 = vpop.xlane.xlu0 %1955
        %v1957 = vpack.c.bf16 %v1950, %v1948
        %v1959 = vsel %vm1826, %v1957, 0
        %1961 = vmatprep.subr.bf16.mxu0 0
        %1962 = vmatpush1.bf16.msra.mxu0 %v1778
        %1963 = vmatprep.subr.bf16.mxu0 0
        %1964 = vmatpush1.bf16.msra.mxu0 0
        %1965 = vmatprep.subr.bf16.mxu0 0
        %1966 = vmatpush1.bf16.msra.mxu0 0
        %1967 = vmatprep.subr.bf16.mxu0 0
        %1968 = vmatpush1.bf16.msra.mxu0 0
        %1969 = vmatprep.subr.bf16.mxu0 0
        %1970 = vmatpush1.bf16.msra.mxu0 0
        %1971 = vmatprep.subr.bf16.mxu0 0
        %1972 = vmatpush1.bf16.msra.mxu0 0
        %1973 = vmatprep.subr.bf16.mxu0 0
        %1974 = vmatpush1.bf16.msra.mxu0 0
        %1975 = vmatprep.subr.bf16.mxu0 0
        %1976 = vmatpush1.bf16.msra.mxu0 0
        %1977 = vmatprep.subr.bf16.mxu0 0
        %1978 = vmatpush1.bf16.msra.mxu0 0
        %1979 = vmatprep.subr.bf16.mxu0 0
        %1980 = vmatpush1.bf16.msra.mxu0 0
        %1981 = vmatprep.subr.bf16.mxu0 0
        %1982 = vmatpush1.bf16.msra.mxu0 0
        %1983 = vmatprep.subr.bf16.mxu0 0
        %1984 = vmatpush1.bf16.msra.mxu0 0
        %1985 = vmatprep.subr.bf16.mxu0 0
        %1986 = vmatpush1.bf16.msra.mxu0 0
        %1987 = vmatprep.subr.bf16.mxu0 0
        %1988 = vmatpush1.bf16.msra.mxu0 0
        %1989 = vmatprep.subr.bf16.mxu0 0
        %1990 = vmatpush1.bf16.msra.mxu0 0
        %1991 = vmatprep.subr.bf16.mxu0 0
        %1992 = vmatpush1.bf16.msra.mxu0 0
        %1993 = vmatprep.mubr.bf16.mxu0 0
        %1994 = vmatmul.mubr.bf16.gmra.mrb[0].mxu0 %v1959
        %v1995 = vpop.f32.mrb[0].mxu0
        %v1996 = vadd.f32 0.0, %v1995
        %v1997 = vpop.f32.mrb[0].mxu0
        %v1998 = vpop.f32.mrb[0].mxu0
        %v1999 = vadd.f32 0.0, %v1998
        %v2000 = vpop.f32.mrb[0].mxu0
        %2001 = vdwg.mxu0
        %v2002 = vrcp.pop %v1953
        %v2003 = vrcp.pop %v1956
        %v2004 = vmul.f32 %v1996, %v2002
        %v2005 = vmul.f32 %v1999, %v2003
        %2006 = vmatprep.subr.bf16.mxu0 0
        %2007 = vmatpush1.bf16.xpose.msra.mxu0 %v1775
        %2008 = vmatprep.subr.bf16.mxu0 0
        %2009 = vmatpush1.bf16.xpose.msra.mxu0 0
        %2010 = vmatprep.subr.bf16.mxu0 0
        %2011 = vmatpush1.bf16.xpose.msra.mxu0 0
        %2012 = vmatprep.subr.bf16.mxu0 0
        %2013 = vmatpush1.bf16.xpose.msra.mxu0 0
        %2014 = vmatprep.subr.bf16.mxu0 0
        %2015 = vmatpush1.bf16.xpose.msra.mxu0 0
        %2016 = vmatprep.subr.bf16.mxu0 0
        %2017 = vmatpush1.bf16.xpose.msra.mxu0 0
        %2018 = vmatprep.subr.bf16.mxu0 0
        %2019 = vmatpush1.bf16.xpose.msra.mxu0 0
        %2020 = vmatprep.subr.bf16.mxu0 0
        %2021 = vmatpush1.bf16.xpose.msra.mxu0 0
        %2022 = vmatprep.subr.bf16.mxu0 0
        %2023 = vmatpush1.bf16.xpose.msra.mxu0 0
        %2024 = vmatprep.subr.bf16.mxu0 0
        %2025 = vmatpush1.bf16.xpose.msra.mxu0 0
        %2026 = vmatprep.subr.bf16.mxu0 0
        %2027 = vmatpush1.bf16.xpose.msra.mxu0 0
        %2028 = vmatprep.subr.bf16.mxu0 0
        %2029 = vmatpush1.bf16.xpose.msra.mxu0 0
        %2030 = vmatprep.subr.bf16.mxu0 0
        %2031 = vmatpush1.bf16.xpose.msra.mxu0 0
        %2032 = vmatprep.subr.bf16.mxu0 0
        %2033 = vmatpush1.bf16.xpose.msra.mxu0 0
        %2034 = vmatprep.subr.bf16.mxu0 0
        %2035 = vmatpush1.bf16.xpose.msra.mxu0 0
        %2036 = vmatprep.subr.bf16.mxu0 0
        %2037 = vmatpush1.bf16.xpose.msra.mxu0 0
        %2038 = vmatprep.mubr.bf16.mxu0 0
        %2039 = vmatmul.mubr.bf16.gmra.mrb[0].mxu0 %v1771
        %v2040 = vpop.f32.mrb[0].mxu0
        %v2041 = vadd.f32 0.0, %v2040
        %v2042 = vpop.f32.mrb[0].mxu0
        %v2043 = vpop.f32.mrb[0].mxu0
        %v2044 = vadd.f32 0.0, %v2043
        %v2045 = vpop.f32.mrb[0].mxu0
        %2046 = vdwg.mxu0
        %v2047 = vmul.f32 %v2041, 0.25
        %v2048 = vmul.f32 %v2044, 0.25
        %v2049 = vadd.f32 %v2047, %v702
        %v2050 = vadd.f32 %v2048, %v703
        %v2051 = vsel %vm1826, %v2049, -inf
        %2052 = vmax.xlane.f32.xlu0 %v2051
        %v2053 = vpop.xlane.xlu0 %2052
        %v2054 = vsel %vm1826, %v2050, -inf
        %2055 = vmax.xlane.f32.xlu0 %v2054
        %v2056 = vpop.xlane.xlu0 %2055
        %v2057 = vsub.f32 %v2049, %v2053
        %v2058 = vsub.f32 %v2050, %v2056
        %v2059 = vmul.f32 %v2057, 1.442695
        %v2060 = vpow.pop %v2059
        %v2061 = vmul.f32 %v2058, 1.442695
        %v2062 = vpow.pop %v2061
        %v2063 = vsel %vm1826, %v2060, 0.0
        %2064 = vadd.xlane.f32.xlu0 %v2063
        %v2065 = vpop.xlane.xlu0 %2064
        %v2066 = vsel %vm1826, %v2062, 0.0
        %2067 = vadd.xlane.f32.xlu0 %v2066
        %v2068 = vpop.xlane.xlu0 %2067
        %v2069 = vpack.c.bf16 %v2062, %v2060
        %v2071 = vsel %vm1826, %v2069, 0
        %2073 = vmatprep.subr.bf16.mxu0 0
        %2074 = vmatpush1.bf16.msra.mxu0 %v1779
        %2075 = vmatprep.subr.bf16.mxu0 0
        %2076 = vmatpush1.bf16.msra.mxu0 0
        %2077 = vmatprep.subr.bf16.mxu0 0
        %2078 = vmatpush1.bf16.msra.mxu0 0
        %2079 = vmatprep.subr.bf16.mxu0 0
        %2080 = vmatpush1.bf16.msra.mxu0 0
        %2081 = vmatprep.subr.bf16.mxu0 0
        %2082 = vmatpush1.bf16.msra.mxu0 0
        %2083 = vmatprep.subr.bf16.mxu0 0
        %2084 = vmatpush1.bf16.msra.mxu0 0
        %2085 = vmatprep.subr.bf16.mxu0 0
        %2086 = vmatpush1.bf16.msra.mxu0 0
        %2087 = vmatprep.subr.bf16.mxu0 0
        %2088 = vmatpush1.bf16.msra.mxu0 0
        %2089 = vmatprep.subr.bf16.mxu0 0
        %2090 = vmatpush1.bf16.msra.mxu0 0
        %2091 = vmatprep.subr.bf16.mxu0 0
        %2092 = vmatpush1.bf16.msra.mxu0 0
        %2093 = vmatprep.subr.bf16.mxu0 0
        %2094 = vmatpush1.bf16.msra.mxu0 0
        %2095 = vmatprep.subr.bf16.mxu0 0
        %2096 = vmatpush1.bf16.msra.mxu0 0
        %2097 = vmatprep.subr.bf16.mxu0 0
        %2098 = vmatpush1.bf16.msra.mxu0 0
        %2099 = vmatprep.subr.bf16.mxu0 0
        %2100 = vmatpush1.bf16.msra.mxu0 0
        %2101 = vmatprep.subr.bf16.mxu0 0
        %2102 = vmatpush1.bf16.msra.mxu0 0
        %2103 = vmatprep.subr.bf16.mxu0 0
        %2104 = vmatpush1.bf16.msra.mxu0 0
        %2105 = vmatprep.mubr.bf16.mxu0 0
        %2106 = vmatmul.mubr.bf16.gmra.mrb[0].mxu0 %v2071
        %v2107 = vpop.f32.mrb[0].mxu0
        %v2108 = vadd.f32 0.0, %v2107
        %v2109 = vpop.f32.mrb[0].mxu0
        %v2110 = vpop.f32.mrb[0].mxu0
        %v2111 = vadd.f32 0.0, %v2110
        %v2112 = vpop.f32.mrb[0].mxu0
        %2113 = vdwg.mxu0
        %v2114 = vrcp.pop %v2065
        %v2115 = vrcp.pop %v2068
        %v2116 = vmul.f32 %v2108, %v2114
        %v2117 = vmul.f32 %v2111, %v2115
        %2118 = vmatprep.subr.bf16.mxu0 0
        %2119 = vmatpush1.bf16.xpose.msra.mxu0 %v1776
        %2120 = vmatprep.subr.bf16.mxu0 0
        %2121 = vmatpush1.bf16.xpose.msra.mxu0 0
        %2122 = vmatprep.subr.bf16.mxu0 0
        %2123 = vmatpush1.bf16.xpose.msra.mxu0 0
        %2124 = vmatprep.subr.bf16.mxu0 0
        %2125 = vmatpush1.bf16.xpose.msra.mxu0 0
        %2126 = vmatprep.subr.bf16.mxu0 0
        %2127 = vmatpush1.bf16.xpose.msra.mxu0 0
        %2128 = vmatprep.subr.bf16.mxu0 0
        %2129 = vmatpush1.bf16.xpose.msra.mxu0 0
        %2130 = vmatprep.subr.bf16.mxu0 0
        %2131 = vmatpush1.bf16.xpose.msra.mxu0 0
        %2132 = vmatprep.subr.bf16.mxu0 0
        %2133 = vmatpush1.bf16.xpose.msra.mxu0 0
        %2134 = vmatprep.subr.bf16.mxu0 0
        %2135 = vmatpush1.bf16.xpose.msra.mxu0 0
        %2136 = vmatprep.subr.bf16.mxu0 0
        %2137 = vmatpush1.bf16.xpose.msra.mxu0 0
        %2138 = vmatprep.subr.bf16.mxu0 0
        %2139 = vmatpush1.bf16.xpose.msra.mxu0 0
        %2140 = vmatprep.subr.bf16.mxu0 0
        %2141 = vmatpush1.bf16.xpose.msra.mxu0 0
        %2142 = vmatprep.subr.bf16.mxu0 0
        %2143 = vmatpush1.bf16.xpose.msra.mxu0 0
        %2144 = vmatprep.subr.bf16.mxu0 0
        %2145 = vmatpush1.bf16.xpose.msra.mxu0 0
        %2146 = vmatprep.subr.bf16.mxu0 0
        %2147 = vmatpush1.bf16.xpose.msra.mxu0 0
        %2148 = vmatprep.subr.bf16.mxu0 0
        %2149 = vmatpush1.bf16.xpose.msra.mxu0 0
        %2150 = vmatprep.mubr.bf16.mxu0 0
        %2151 = vmatmul.mubr.bf16.gmra.mrb[0].mxu0 %v1772
        %v2152 = vpop.f32.mrb[0].mxu0
        %v2153 = vadd.f32 0.0, %v2152
        %v2154 = vpop.f32.mrb[0].mxu0
        %v2155 = vpop.f32.mrb[0].mxu0
        %v2156 = vadd.f32 0.0, %v2155
        %v2157 = vpop.f32.mrb[0].mxu0
        %2158 = vdwg.mxu0
        %v2159 = vmul.f32 %v2153, 0.25
        %v2160 = vmul.f32 %v2156, 0.25
        %v2161 = vadd.f32 %v2159, %v702
        %v2162 = vadd.f32 %v2160, %v703
        %v2163 = vsel %vm1826, %v2161, -inf
        %2164 = vmax.xlane.f32.xlu0 %v2163
        %v2165 = vpop.xlane.xlu0 %2164
        %v2166 = vsel %vm1826, %v2162, -inf
        %2167 = vmax.xlane.f32.xlu0 %v2166
        %v2168 = vpop.xlane.xlu0 %2167
        %v2169 = vsub.f32 %v2161, %v2165
        %v2170 = vsub.f32 %v2162, %v2168
        %v2171 = vmul.f32 %v2169, 1.442695
        %v2172 = vpow.pop %v2171
        %v2173 = vmul.f32 %v2170, 1.442695
        %v2174 = vpow.pop %v2173
        %v2175 = vsel %vm1826, %v2172, 0.0
        %2176 = vadd.xlane.f32.xlu0 %v2175
        %v2177 = vpop.xlane.xlu0 %2176
        %v2178 = vsel %vm1826, %v2174, 0.0
        %2179 = vadd.xlane.f32.xlu0 %v2178
        %v2180 = vpop.xlane.xlu0 %2179
        %v2181 = vpack.c.bf16 %v2174, %v2172
        %v2183 = vsel %vm1826, %v2181, 0
        %2185 = vmatprep.subr.bf16.mxu0 0
        %2186 = vmatpush1.bf16.msra.mxu0 %v1780
        %2187 = vmatprep.subr.bf16.mxu0 0
        %2188 = vmatpush1.bf16.msra.mxu0 0
        %2189 = vmatprep.subr.bf16.mxu0 0
        %2190 = vmatpush1.bf16.msra.mxu0 0
        %2191 = vmatprep.subr.bf16.mxu0 0
        %2192 = vmatpush1.bf16.msra.mxu0 0
        %2193 = vmatprep.subr.bf16.mxu0 0
        %2194 = vmatpush1.bf16.msra.mxu0 0
        %2195 = vmatprep.subr.bf16.mxu0 0
        %2196 = vmatpush1.bf16.msra.mxu0 0
        %2197 = vmatprep.subr.bf16.mxu0 0
        %2198 = vmatpush1.bf16.msra.mxu0 0
        %2199 = vmatprep.subr.bf16.mxu0 0
        %2200 = vmatpush1.bf16.msra.mxu0 0
        %2201 = vmatprep.subr.bf16.mxu0 0
        %2202 = vmatpush1.bf16.msra.mxu0 0
        %2203 = vmatprep.subr.bf16.mxu0 0
        %2204 = vmatpush1.bf16.msra.mxu0 0
        %2205 = vmatprep.subr.bf16.mxu0 0
        %2206 = vmatpush1.bf16.msra.mxu0 0
        %2207 = vmatprep.subr.bf16.mxu0 0
        %2208 = vmatpush1.bf16.msra.mxu0 0
        %2209 = vmatprep.subr.bf16.mxu0 0
        %2210 = vmatpush1.bf16.msra.mxu0 0
        %2211 = vmatprep.subr.bf16.mxu0 0
        %2212 = vmatpush1.bf16.msra.mxu0 0
        %2213 = vmatprep.subr.bf16.mxu0 0
        %2214 = vmatpush1.bf16.msra.mxu0 0
        %2215 = vmatprep.subr.bf16.mxu0 0
        %2216 = vmatpush1.bf16.msra.mxu0 0
        %2217 = vmatprep.mubr.bf16.mxu0 0
        %2218 = vmatmul.mubr.bf16.gmra.mrb[0].mxu0 %v2183
        %v2219 = vpop.f32.mrb[0].mxu0
        %v2220 = vadd.f32 0.0, %v2219
        %v2221 = vpop.f32.mrb[0].mxu0
        %v2222 = vpop.f32.mrb[0].mxu0
        %v2223 = vadd.f32 0.0, %v2222
        %v2224 = vpop.f32.mrb[0].mxu0
        %2225 = vdwg.mxu0
        %v2226 = vrcp.pop %v2177
        %v2227 = vrcp.pop %v2180
        %v2228 = vmul.f32 %v2220, %v2226
        %v2229 = vmul.f32 %v2223, %v2227
        %v2230 = vpack.c.bf16 %v1893, %v1892
        %v2231 = vpack.c.bf16 %v2005, %v2004
        %v2232 = vpack.c.bf16 %v2117, %v2116
        %v2233 = vpack.c.bf16 %v2229, %v2228
        %v2234 = vld [vmem:[#allocation5] sm:$0xf]
        %v2235 = vld [vmem:[#allocation5 + $0x4] sm:$0xf]
        %v2236 = vld [vmem:[#allocation5 + $0x8] sm:$0xf]
        %v2237 = vld [vmem:[#allocation5 + $0xc] sm:$0xf]
        %v2238 = vld [vmem:[#allocation5 + $0x10] sm:$0xf]
        %v2239 = vld [vmem:[#allocation5 + $0x14] sm:$0xf]
        %v2240 = vld [vmem:[#allocation5 + $0x18] sm:$0xf]
        %v2241 = vld [vmem:[#allocation5 + $0x1c] sm:$0xf]
        %v2242 = vld [vmem:[#allocation5 + $0x20] sm:$0xf]
        %v2243 = vld [vmem:[#allocation5 + $0x24] sm:$0xf]
        %v2244 = vld [vmem:[#allocation5 + $0x28] sm:$0xf]
        %v2245 = vld [vmem:[#allocation5 + $0x2c] sm:$0xf]
        %v2246 = vld [vmem:[#allocation5 + $0x30] sm:$0xf]
        %v2247 = vld [vmem:[#allocation5 + $0x34] sm:$0xf]
        %v2248 = vld [vmem:[#allocation5 + $0x38] sm:$0xf]
        %v2249 = vld [vmem:[#allocation5 + $0x3c] sm:$0xf]
        %v2250 = vld [vmem:[#allocation5 + $0x40] sm:$0xf]
        %v2251 = vld [vmem:[#allocation5 + $0x44] sm:$0xf]
        %v2252 = vld [vmem:[#allocation5 + $0x48] sm:$0xf]
        %v2253 = vld [vmem:[#allocation5 + $0x4c] sm:$0xf]
        %v2254 = vld [vmem:[#allocation5 + $0x50] sm:$0xf]
        %v2255 = vld [vmem:[#allocation5 + $0x54] sm:$0xf]
        %v2256 = vld [vmem:[#allocation5 + $0x58] sm:$0xf]
        %v2257 = vld [vmem:[#allocation5 + $0x5c] sm:$0xf]
        %v2258 = vld [vmem:[#allocation5 + $0x60] sm:$0xf]
        %v2259 = vld [vmem:[#allocation5 + $0x64] sm:$0xf]
        %v2260 = vld [vmem:[#allocation5 + $0x68] sm:$0xf]
        %v2261 = vld [vmem:[#allocation5 + $0x6c] sm:$0xf]
        %v2262 = vld [vmem:[#allocation5 + $0x70] sm:$0xf]
        %v2263 = vld [vmem:[#allocation5 + $0x74] sm:$0xf]
        %v2264 = vld [vmem:[#allocation5 + $0x78] sm:$0xf]
        %v2265 = vld [vmem:[#allocation5 + $0x7c] sm:$0xf]
        %v2266 = vld [vmem:[#allocation5 + $0x80] sm:$0xf]
        %v2267 = vld [vmem:[#allocation5 + $0x84] sm:$0xf]
        %v2268 = vld [vmem:[#allocation5 + $0x88] sm:$0xf]
        %v2269 = vld [vmem:[#allocation5 + $0x8c] sm:$0xf]
        %v2270 = vld [vmem:[#allocation5 + $0x90] sm:$0xf]
        %v2271 = vld [vmem:[#allocation5 + $0x94] sm:$0xf]
        %v2272 = vld [vmem:[#allocation5 + $0x98] sm:$0xf]
        %v2273 = vld [vmem:[#allocation5 + $0x9c] sm:$0xf]
        %v2274 = vld [vmem:[#allocation5 + $0xa0] sm:$0xf]
        %v2275 = vld [vmem:[#allocation5 + $0xa4] sm:$0xf]
        %v2276 = vld [vmem:[#allocation5 + $0xa8] sm:$0xf]
        %v2277 = vld [vmem:[#allocation5 + $0xac] sm:$0xf]
        %v2278 = vld [vmem:[#allocation5 + $0xb0] sm:$0xf]
        %v2279 = vld [vmem:[#allocation5 + $0xb4] sm:$0xf]
        %v2280 = vld [vmem:[#allocation5 + $0xb8] sm:$0xf]
        %v2281 = vld [vmem:[#allocation5 + $0xbc] sm:$0xf]
        %v2282 = vld [vmem:[#allocation5 + $0xc0] sm:$0xf]
        %v2283 = vld [vmem:[#allocation5 + $0xc4] sm:$0xf]
        %v2284 = vld [vmem:[#allocation5 + $0xc8] sm:$0xf]
        %v2285 = vld [vmem:[#allocation5 + $0xcc] sm:$0xf]
        %v2286 = vld [vmem:[#allocation5 + $0xd0] sm:$0xf]
        %v2287 = vld [vmem:[#allocation5 + $0xd4] sm:$0xf]
        %v2288 = vld [vmem:[#allocation5 + $0xd8] sm:$0xf]
        %v2289 = vld [vmem:[#allocation5 + $0xdc] sm:$0xf]
        %v2290 = vld [vmem:[#allocation5 + $0xe0] sm:$0xf]
        %v2291 = vld [vmem:[#allocation5 + $0xe4] sm:$0xf]
        %v2292 = vld [vmem:[#allocation5 + $0xe8] sm:$0xf]
        %v2293 = vld [vmem:[#allocation5 + $0xec] sm:$0xf]
        %v2294 = vld [vmem:[#allocation5 + $0xf0] sm:$0xf]
        %v2295 = vld [vmem:[#allocation5 + $0xf4] sm:$0xf]
        %v2296 = vld [vmem:[#allocation5 + $0xf8] sm:$0xf]
        %v2297 = vld [vmem:[#allocation5 + $0xfc] sm:$0xf]
        %v2362 = vunpack.c.l.b16 %v2234
        %v2363 = vunpack.c.l.b16 %v2235
        %v2364 = vunpack.c.l.b16 %v2236
        %v2365 = vunpack.c.l.b16 %v2237
        %v2366 = vunpack.c.l.b16 %v2238
        %v2367 = vunpack.c.l.b16 %v2239
        %v2368 = vunpack.c.l.b16 %v2240
        %v2369 = vunpack.c.l.b16 %v2241
        %v2370 = vunpack.c.l.b16 %v2242
        %v2371 = vunpack.c.l.b16 %v2243
        %v2372 = vunpack.c.l.b16 %v2244
        %v2373 = vunpack.c.l.b16 %v2245
        %v2374 = vunpack.c.l.b16 %v2246
        %v2375 = vunpack.c.l.b16 %v2247
        %v2376 = vunpack.c.l.b16 %v2248
        %v2377 = vunpack.c.l.b16 %v2249
        %v2378 = vunpack.c.l.b16 %v2250
        %v2379 = vunpack.c.l.b16 %v2251
        %v2380 = vunpack.c.l.b16 %v2252
        %v2381 = vunpack.c.l.b16 %v2253
        %v2382 = vunpack.c.l.b16 %v2254
        %v2383 = vunpack.c.l.b16 %v2255
        %v2384 = vunpack.c.l.b16 %v2256
        %v2385 = vunpack.c.l.b16 %v2257
        %v2386 = vunpack.c.l.b16 %v2258
        %v2387 = vunpack.c.l.b16 %v2259
        %v2388 = vunpack.c.l.b16 %v2260
        %v2389 = vunpack.c.l.b16 %v2261
        %v2390 = vunpack.c.l.b16 %v2262
        %v2391 = vunpack.c.l.b16 %v2263
        %v2392 = vunpack.c.l.b16 %v2264
        %v2393 = vunpack.c.l.b16 %v2265
        %v2394 = vunpack.c.l.b16 %v2266
        %v2395 = vunpack.c.l.b16 %v2267
        %v2396 = vunpack.c.l.b16 %v2268
        %v2397 = vunpack.c.l.b16 %v2269
        %v2398 = vunpack.c.l.b16 %v2270
        %v2399 = vunpack.c.l.b16 %v2271
        %v2400 = vunpack.c.l.b16 %v2272
        %v2401 = vunpack.c.l.b16 %v2273
        %v2402 = vunpack.c.l.b16 %v2274
        %v2403 = vunpack.c.l.b16 %v2275
        %v2404 = vunpack.c.l.b16 %v2276
        %v2405 = vunpack.c.l.b16 %v2277
        %v2406 = vunpack.c.l.b16 %v2278
        %v2407 = vunpack.c.l.b16 %v2279
        %v2408 = vunpack.c.l.b16 %v2280
        %v2409 = vunpack.c.l.b16 %v2281
        %v2410 = vunpack.c.l.b16 %v2282
        %v2411 = vunpack.c.l.b16 %v2283
        %v2412 = vunpack.c.l.b16 %v2284
        %v2413 = vunpack.c.l.b16 %v2285
        %v2414 = vunpack.c.l.b16 %v2286
        %v2415 = vunpack.c.l.b16 %v2287
        %v2416 = vunpack.c.l.b16 %v2288
        %v2417 = vunpack.c.l.b16 %v2289
        %v2418 = vunpack.c.l.b16 %v2290
        %v2419 = vunpack.c.l.b16 %v2291
        %v2420 = vunpack.c.l.b16 %v2292
        %v2421 = vunpack.c.l.b16 %v2293
        %v2422 = vunpack.c.l.b16 %v2294
        %v2423 = vunpack.c.l.b16 %v2295
        %v2424 = vunpack.c.l.b16 %v2296
        %v2425 = vunpack.c.l.b16 %v2297
        %v2426 = vpack.c.b16 %v2363, %v2362
        %v2427 = vpack.c.b16 %v2365, %v2364
        %v2428 = vpack.c.b16 %v2367, %v2366
        %v2429 = vpack.c.b16 %v2369, %v2368
        %v2430 = vpack.c.b16 %v2371, %v2370
        %v2431 = vpack.c.b16 %v2373, %v2372
        %v2432 = vpack.c.b16 %v2375, %v2374
        %v2433 = vpack.c.b16 %v2377, %v2376
        %v2434 = vpack.c.b16 %v2379, %v2378
        %v2435 = vpack.c.b16 %v2381, %v2380
        %v2436 = vpack.c.b16 %v2383, %v2382
        %v2437 = vpack.c.b16 %v2385, %v2384
        %v2438 = vpack.c.b16 %v2387, %v2386
        %v2439 = vpack.c.b16 %v2389, %v2388
        %v2440 = vpack.c.b16 %v2391, %v2390
        %v2441 = vpack.c.b16 %v2393, %v2392
        %v2442 = vpack.c.b16 %v2395, %v2394
        %v2443 = vpack.c.b16 %v2397, %v2396
        %v2444 = vpack.c.b16 %v2399, %v2398
        %v2445 = vpack.c.b16 %v2401, %v2400
        %v2446 = vpack.c.b16 %v2403, %v2402
        %v2447 = vpack.c.b16 %v2405, %v2404
        %v2448 = vpack.c.b16 %v2407, %v2406
        %v2449 = vpack.c.b16 %v2409, %v2408
        %v2450 = vpack.c.b16 %v2411, %v2410
        %v2451 = vpack.c.b16 %v2413, %v2412
        %v2452 = vpack.c.b16 %v2415, %v2414
        %v2453 = vpack.c.b16 %v2417, %v2416
        %v2454 = vpack.c.b16 %v2419, %v2418
        %v2455 = vpack.c.b16 %v2421, %v2420
        %v2456 = vpack.c.b16 %v2423, %v2422
        %v2457 = vpack.c.b16 %v2425, %v2424
        %2490 = vmatprep.subr.bf16.mxu0 0
        %2491 = vmatpush1.bf16.msra.mxu0 %v2426
        %2492 = vmatprep.subr.bf16.mxu0 0
        %2493 = vmatpush1.bf16.msra.mxu0 %v2427
        %2494 = vmatprep.subr.bf16.mxu0 0
        %2495 = vmatpush1.bf16.msra.mxu0 %v2428
        %2496 = vmatprep.subr.bf16.mxu0 0
        %2497 = vmatpush1.bf16.msra.mxu0 %v2429
        %2498 = vmatprep.subr.bf16.mxu0 0
        %2499 = vmatpush1.bf16.msra.mxu0 %v2430
        %2500 = vmatprep.subr.bf16.mxu0 0
        %2501 = vmatpush1.bf16.msra.mxu0 %v2431
        %2502 = vmatprep.subr.bf16.mxu0 0
        %2503 = vmatpush1.bf16.msra.mxu0 %v2432
        %2504 = vmatprep.subr.bf16.mxu0 0
        %2505 = vmatpush1.bf16.msra.mxu0 %v2433
        %2506 = vmatprep.subr.bf16.mxu0 0
        %2507 = vmatpush1.bf16.msra.mxu0 %v2434
        %2508 = vmatprep.subr.bf16.mxu0 0
        %2509 = vmatpush1.bf16.msra.mxu0 %v2435
        %2510 = vmatprep.subr.bf16.mxu0 0
        %2511 = vmatpush1.bf16.msra.mxu0 %v2436
        %2512 = vmatprep.subr.bf16.mxu0 0
        %2513 = vmatpush1.bf16.msra.mxu0 %v2437
        %2514 = vmatprep.subr.bf16.mxu0 0
        %2515 = vmatpush1.bf16.msra.mxu0 %v2438
        %2516 = vmatprep.subr.bf16.mxu0 0
        %2517 = vmatpush1.bf16.msra.mxu0 %v2439
        %2518 = vmatprep.subr.bf16.mxu0 0
        %2519 = vmatpush1.bf16.msra.mxu0 %v2440
        %2520 = vmatprep.subr.bf16.mxu0 0
        %2521 = vmatpush1.bf16.msra.mxu0 %v2441
        %2522 = vmatprep.mubr.bf16.mxu0 %v2231
        %2523 = vmatmul.mubr.bf16.gmra.mrb[0].mxu0 %v2230
        %v2524 = vpop.f32.mrb[0].mxu0
        %v2525 = vadd.f32 0.0, %v2524
        %v2526 = vpop.f32.mrb[0].mxu0
        %v2527 = vpop.f32.mrb[0].mxu0
        %v2528 = vadd.f32 0.0, %v2527
        %v2529 = vpop.f32.mrb[0].mxu0
        %2530 = vdwg.mxu0
        %2531 = vmatprep.subr.bf16.mxu0 0
        %2532 = vmatpush1.bf16.msra.mxu0 %v2442
        %2533 = vmatprep.subr.bf16.mxu0 0
        %2534 = vmatpush1.bf16.msra.mxu0 %v2443
        %2535 = vmatprep.subr.bf16.mxu0 0
        %2536 = vmatpush1.bf16.msra.mxu0 %v2444
        %2537 = vmatprep.subr.bf16.mxu0 0
        %2538 = vmatpush1.bf16.msra.mxu0 %v2445
        %2539 = vmatprep.subr.bf16.mxu0 0
        %2540 = vmatpush1.bf16.msra.mxu0 %v2446
        %2541 = vmatprep.subr.bf16.mxu0 0
        %2542 = vmatpush1.bf16.msra.mxu0 %v2447
        %2543 = vmatprep.subr.bf16.mxu0 0
        %2544 = vmatpush1.bf16.msra.mxu0 %v2448
        %2545 = vmatprep.subr.bf16.mxu0 0
        %2546 = vmatpush1.bf16.msra.mxu0 %v2449
        %2547 = vmatprep.subr.bf16.mxu0 0
        %2548 = vmatpush1.bf16.msra.mxu0 %v2450
        %2549 = vmatprep.subr.bf16.mxu0 0
        %2550 = vmatpush1.bf16.msra.mxu0 %v2451
        %2551 = vmatprep.subr.bf16.mxu0 0
        %2552 = vmatpush1.bf16.msra.mxu0 %v2452
        %2553 = vmatprep.subr.bf16.mxu0 0
        %2554 = vmatpush1.bf16.msra.mxu0 %v2453
        %2555 = vmatprep.subr.bf16.mxu0 0
        %2556 = vmatpush1.bf16.msra.mxu0 %v2454
        %2557 = vmatprep.subr.bf16.mxu0 0
        %2558 = vmatpush1.bf16.msra.mxu0 %v2455
        %2559 = vmatprep.subr.bf16.mxu0 0
        %2560 = vmatpush1.bf16.msra.mxu0 %v2456
        %2561 = vmatprep.subr.bf16.mxu0 0
        %2562 = vmatpush1.bf16.msra.mxu0 %v2457
        %2563 = vmatprep.mubr.bf16.mxu0 %v2233
        %2564 = vmatmul.mubr.bf16.gmra.mrb[0].mxu0 %v2232
        %v2565 = vpop.f32.mrb[0].mxu0
        %v2566 = vadd.f32 %v2525, %v2565
        %v2567 = vpop.f32.mrb[0].mxu0
        %v2568 = vpop.f32.mrb[0].mxu0
        %v2569 = vadd.f32 %v2528, %v2568
        %v2570 = vpop.f32.mrb[0].mxu0
        %2571 = vdwg.mxu0
        %v2572 = vadd.f32 %v826, %v2566
        %v2573 = vadd.f32 %v827, %v2569
        %v2574 = vld [vmem:[%s9] sm:$0x1]
        %v2576 = vlaneseq
        %v2577 = vshrl.u32 %v2576, 7
        %v2578 = vsub.s32 0, %v2577
        %v2579 = vrot.slane %v2574, %v2578
        %v2581 = vadd.f32 %v2572, %v2579
        %v2582 = vadd.f32 %v2573, %v2579
        %v2583 = vld [vmem:[%s10] sm:$0x1]
        %v2584 = vld [vmem:[%s11] sm:$0x1]
        %2585 = vadd.xlane.f32.xlu0 %v2581
        %v2586 = vpop.xlane.xlu0 %2585
        %2587 = vadd.xlane.f32.xlu0 %v2582
        %v2588 = vpop.xlane.xlu0 %2587
        %v2589 = vmul.f32 %v2586, 0.015625
        %v2590 = vmul.f32 %v2588, 0.015625
        %v2591 = vsub.f32 %v2581, %v2589
        %v2592 = vsub.f32 %v2582, %v2590
        %v2593 = vmul.f32 %v2591, %v696
        %v2594 = vmul.f32 %v2592, %v696
        %v2595 = vmul.f32 %v2593, %v2593
        %v2596 = vmul.f32 %v2594, %v2594
        %2597 = vadd.xlane.f32.xlu0 %v2595
        %v2598 = vpop.xlane.xlu0 %2597
        %2599 = vadd.xlane.f32.xlu0 %v2596
        %v2600 = vpop.xlane.xlu0 %2599
        %v2601 = vmul.f32 %v2598, 0.015625
        %v2602 = vmul.f32 %v2600, 0.015625
        %v2603 = vadd.f32 %v2601, 1e-05
        %v2604 = vadd.f32 %v2602, 1e-05
        %v2605 = vrsqrt.pop %v2603
        %v2606 = vrsqrt.pop %v2604
        %v2607 = vmul.f32 %v2593, %v2605
        %v2608 = vmul.f32 %v2594, %v2606
        %v2610 = vlaneseq
        %v2611 = vshrl.u32 %v2610, 7
        %v2612 = vsub.s32 0, %v2611
        %v2613 = vrot.slane %v2583, %v2612
        %v2615 = vmul.f32 %v2607, %v2613
        %v2616 = vmul.f32 %v2608, %v2613
        %v2618 = vlaneseq
        %v2619 = vshrl.u32 %v2618, 7
        %v2620 = vsub.s32 0, %v2619
        %v2621 = vrot.slane %v2584, %v2620
        %v2623 = vadd.f32 %v2615, %v2621
        %v2624 = vadd.f32 %v2616, %v2621
        %v2625 = vpack.c.bf16 %v2624, %v2623
        %v2626 = vld [vmem:[#allocation7] sm:$0xff]
        %v2627 = vld [vmem:[#allocation7 + $0x8] sm:$0xff]
        %v2628 = vld [vmem:[#allocation7 + $0x10] sm:$0xff]
        %v2629 = vld [vmem:[#allocation7 + $0x18] sm:$0xff]
        %v2630 = vld [vmem:[#allocation7 + $0x20] sm:$0xff]
        %v2631 = vld [vmem:[#allocation7 + $0x28] sm:$0xff]
        %v2632 = vld [vmem:[#allocation7 + $0x30] sm:$0xff]
        %v2633 = vld [vmem:[#allocation7 + $0x38] sm:$0xff]
        %v2634 = vld [vmem:[#allocation7 + $0x40] sm:$0xff]
        %v2635 = vld [vmem:[#allocation7 + $0x48] sm:$0xff]
        %v2636 = vld [vmem:[#allocation7 + $0x50] sm:$0xff]
        %v2637 = vld [vmem:[#allocation7 + $0x58] sm:$0xff]
        %v2638 = vld [vmem:[#allocation7 + $0x60] sm:$0xff]
        %v2639 = vld [vmem:[#allocation7 + $0x68] sm:$0xff]
        %v2640 = vld [vmem:[#allocation7 + $0x70] sm:$0xff]
        %v2641 = vld [vmem:[#allocation7 + $0x78] sm:$0xff]
        %v2642 = vld [vmem:[%s13] sm:$0x3]
        %v2644 = vlaneseq
        %v2645 = vshrl.u32 %v2644, 7
        %v2646 = vsub.s32 0, %v2645
        %v2647 = vrot.slane %v2642, %v2646
        %v2648 = vlaneseq
        %v2649 = vshrl.u32 %v2648, 7
        %v2650 = vsub.s32 1, %v2649
        %v2651 = vrot.slane %v2642, %v2650
        %v2670 = vunpack.c.l.b16 %v2626
        %v2671 = vunpack.c.h.b16 %v2626
        %v2672 = vunpack.c.l.b16 %v2627
        %v2673 = vunpack.c.h.b16 %v2627
        %v2674 = vunpack.c.l.b16 %v2628
        %v2675 = vunpack.c.h.b16 %v2628
        %v2676 = vunpack.c.l.b16 %v2629
        %v2677 = vunpack.c.h.b16 %v2629
        %v2678 = vunpack.c.l.b16 %v2630
        %v2679 = vunpack.c.h.b16 %v2630
        %v2680 = vunpack.c.l.b16 %v2631
        %v2681 = vunpack.c.h.b16 %v2631
        %v2682 = vunpack.c.l.b16 %v2632
        %v2683 = vunpack.c.h.b16 %v2632
        %v2684 = vunpack.c.l.b16 %v2633
        %v2685 = vunpack.c.h.b16 %v2633
        %v2686 = vunpack.c.l.b16 %v2634
        %v2687 = vunpack.c.h.b16 %v2634
        %v2688 = vunpack.c.l.b16 %v2635
        %v2689 = vunpack.c.h.b16 %v2635
        %v2690 = vunpack.c.l.b16 %v2636
        %v2691 = vunpack.c.h.b16 %v2636
        %v2692 = vunpack.c.l.b16 %v2637
        %v2693 = vunpack.c.h.b16 %v2637
        %v2694 = vunpack.c.l.b16 %v2638
        %v2695 = vunpack.c.h.b16 %v2638
        %v2696 = vunpack.c.l.b16 %v2639
        %v2697 = vunpack.c.h.b16 %v2639
        %v2698 = vunpack.c.l.b16 %v2640
        %v2699 = vunpack.c.h.b16 %v2640
        %v2700 = vunpack.c.l.b16 %v2641
        %v2701 = vunpack.c.h.b16 %v2641
        %v2702 = vpack.c.b16 %v2672, %v2670
        %v2703 = vpack.c.b16 %v2673, %v2671
        %v2704 = vpack.c.b16 %v2676, %v2674
        %v2705 = vpack.c.b16 %v2677, %v2675
        %v2706 = vpack.c.b16 %v2680, %v2678
        %v2707 = vpack.c.b16 %v2681, %v2679
        %v2708 = vpack.c.b16 %v2684, %v2682
        %v2709 = vpack.c.b16 %v2685, %v2683
        %v2710 = vpack.c.b16 %v2688, %v2686
        %v2711 = vpack.c.b16 %v2689, %v2687
        %v2712 = vpack.c.b16 %v2692, %v2690
        %v2713 = vpack.c.b16 %v2693, %v2691
        %v2714 = vpack.c.b16 %v2696, %v2694
        %v2715 = vpack.c.b16 %v2697, %v2695
        %v2716 = vpack.c.b16 %v2700, %v2698
        %v2717 = vpack.c.b16 %v2701, %v2699
        %2734 = vmatprep.subr.bf16.mxu0 %v2703
        %2735 = vmatpush1.bf16.msra.mxu0 %v2702
        %2736 = vmatprep.subr.bf16.mxu0 %v2705
        %2737 = vmatpush1.bf16.msra.mxu0 %v2704
        %2738 = vmatprep.subr.bf16.mxu0 %v2707
        %2739 = vmatpush1.bf16.msra.mxu0 %v2706
        %2740 = vmatprep.subr.bf16.mxu0 %v2709
        %2741 = vmatpush1.bf16.msra.mxu0 %v2708
        %2742 = vmatprep.subr.bf16.mxu0 %v2711
        %2743 = vmatpush1.bf16.msra.mxu0 %v2710
        %2744 = vmatprep.subr.bf16.mxu0 %v2713
        %2745 = vmatpush1.bf16.msra.mxu0 %v2712
        %2746 = vmatprep.subr.bf16.mxu0 %v2715
        %2747 = vmatpush1.bf16.msra.mxu0 %v2714
        %2748 = vmatprep.subr.bf16.mxu0 %v2717
        %2749 = vmatpush1.bf16.msra.mxu0 %v2716
        %2750 = vmatprep.subr.bf16.mxu0 0
        %2751 = vmatpush1.bf16.msra.mxu0 0
        %2752 = vmatprep.subr.bf16.mxu0 0
        %2753 = vmatpush1.bf16.msra.mxu0 0
        %2754 = vmatprep.subr.bf16.mxu0 0
        %2755 = vmatpush1.bf16.msra.mxu0 0
        %2756 = vmatprep.subr.bf16.mxu0 0
        %2757 = vmatpush1.bf16.msra.mxu0 0
        %2758 = vmatprep.subr.bf16.mxu0 0
        %2759 = vmatpush1.bf16.msra.mxu0 0
        %2760 = vmatprep.subr.bf16.mxu0 0
        %2761 = vmatpush1.bf16.msra.mxu0 0
        %2762 = vmatprep.subr.bf16.mxu0 0
        %2763 = vmatpush1.bf16.msra.mxu0 0
        %2764 = vmatprep.subr.bf16.mxu0 0
        %2765 = vmatpush1.bf16.msra.mxu0 0
        %2766 = vmatprep.mubr.bf16.mxu0 0
        %2767 = vmatmul.mubr.bf16.gmra.mrb[0].mxu0 %v2625
        %v2768 = vpop.f32.mrb[0].mxu0
        %v2769 = vadd.f32 %v2647, %v2768
        %v2770 = vpop.f32.mrb[0].mxu0
        %v2771 = vadd.f32 %v2651, %v2770
        %v2772 = vpop.f32.mrb[0].mxu0
        %v2773 = vadd.f32 %v2647, %v2772
        %v2774 = vpop.f32.mrb[0].mxu0
        %v2775 = vadd.f32 %v2651, %v2774
        %2776 = vdwg.mxu0
        %v2777 = vmul.f32 %v2769, %v2769
        %v2778 = vmul.f32 %v2771, %v2771
        %v2779 = vmul.f32 %v2773, %v2773
        %v2780 = vmul.f32 %v2775, %v2775
        %v2781 = vmul.f32 %v2769, %v2777
        %v2782 = vmul.f32 %v2771, %v2778
        %v2783 = vmul.f32 %v2773, %v2779
        %v2784 = vmul.f32 %v2775, %v2780
        %v2785 = vmul.f32 %v2781, 0.044715
        %v2786 = vmul.f32 %v2782, 0.044715
        %v2787 = vmul.f32 %v2783, 0.044715
        %v2788 = vmul.f32 %v2784, 0.044715
        %v2789 = vadd.f32 %v2769, %v2785
        %v2790 = vadd.f32 %v2771, %v2786
        %v2791 = vadd.f32 %v2773, %v2787
        %v2792 = vadd.f32 %v2775, %v2788
        %v2793 = vmul.f32 %v2789, 0.7978846
        %v2794 = vmul.f32 %v2790, 0.7978846
        %v2795 = vmul.f32 %v2791, 0.7978846
        %v2796 = vmul.f32 %v2792, 0.7978846
        %v2797 = vtanh.pop %v2793
        %v2798 = vtanh.pop %v2794
        %v2799 = vtanh.pop %v2795
        %v2800 = vtanh.pop %v2796
        %v2801 = vadd.f32 %v2797, 1.0
        %v2802 = vadd.f32 %v2798, 1.0
        %v2803 = vadd.f32 %v2799, 1.0
        %v2804 = vadd.f32 %v2800, 1.0
        %v2805 = vmul.f32 %v2801, 0.5
        %v2806 = vmul.f32 %v2802, 0.5
        %v2807 = vmul.f32 %v2803, 0.5
        %v2808 = vmul.f32 %v2804, 0.5
        %v2809 = vmul.f32 %v2769, %v2805
        %v2810 = vmul.f32 %v2771, %v2806
        %v2811 = vmul.f32 %v2773, %v2807
        %v2812 = vmul.f32 %v2775, %v2808
        %v2813 = vpack.c.bf16 %v2811, %v2809
        %v2814 = vpack.c.bf16 %v2812, %v2810
        %v2815 = vld [vmem:[#allocation8] sm:$0xf]
        %v2816 = vld [vmem:[#allocation8 + $0x4] sm:$0xf]
        %v2817 = vld [vmem:[#allocation8 + $0x8] sm:$0xf]
        %v2818 = vld [vmem:[#allocation8 + $0xc] sm:$0xf]
        %v2819 = vld [vmem:[#allocation8 + $0x10] sm:$0xf]
        %v2820 = vld [vmem:[#allocation8 + $0x14] sm:$0xf]
        %v2821 = vld [vmem:[#allocation8 + $0x18] sm:$0xf]
        %v2822 = vld [vmem:[#allocation8 + $0x1c] sm:$0xf]
        %v2823 = vld [vmem:[#allocation8 + $0x20] sm:$0xf]
        %v2824 = vld [vmem:[#allocation8 + $0x24] sm:$0xf]
        %v2825 = vld [vmem:[#allocation8 + $0x28] sm:$0xf]
        %v2826 = vld [vmem:[#allocation8 + $0x2c] sm:$0xf]
        %v2827 = vld [vmem:[#allocation8 + $0x30] sm:$0xf]
        %v2828 = vld [vmem:[#allocation8 + $0x34] sm:$0xf]
        %v2829 = vld [vmem:[#allocation8 + $0x38] sm:$0xf]
        %v2830 = vld [vmem:[#allocation8 + $0x3c] sm:$0xf]
        %v2831 = vld [vmem:[#allocation8 + $0x40] sm:$0xf]
        %v2832 = vld [vmem:[#allocation8 + $0x44] sm:$0xf]
        %v2833 = vld [vmem:[#allocation8 + $0x48] sm:$0xf]
        %v2834 = vld [vmem:[#allocation8 + $0x4c] sm:$0xf]
        %v2835 = vld [vmem:[#allocation8 + $0x50] sm:$0xf]
        %v2836 = vld [vmem:[#allocation8 + $0x54] sm:$0xf]
        %v2837 = vld [vmem:[#allocation8 + $0x58] sm:$0xf]
        %v2838 = vld [vmem:[#allocation8 + $0x5c] sm:$0xf]
        %v2839 = vld [vmem:[#allocation8 + $0x60] sm:$0xf]
        %v2840 = vld [vmem:[#allocation8 + $0x64] sm:$0xf]
        %v2841 = vld [vmem:[#allocation8 + $0x68] sm:$0xf]
        %v2842 = vld [vmem:[#allocation8 + $0x6c] sm:$0xf]
        %v2843 = vld [vmem:[#allocation8 + $0x70] sm:$0xf]
        %v2844 = vld [vmem:[#allocation8 + $0x74] sm:$0xf]
        %v2845 = vld [vmem:[#allocation8 + $0x78] sm:$0xf]
        %v2846 = vld [vmem:[#allocation8 + $0x7c] sm:$0xf]
        %v2879 = vunpack.c.l.b16 %v2815
        %v2880 = vunpack.c.l.b16 %v2816
        %v2881 = vunpack.c.l.b16 %v2817
        %v2882 = vunpack.c.l.b16 %v2818
        %v2883 = vunpack.c.l.b16 %v2819
        %v2884 = vunpack.c.l.b16 %v2820
        %v2885 = vunpack.c.l.b16 %v2821
        %v2886 = vunpack.c.l.b16 %v2822
        %v2887 = vunpack.c.l.b16 %v2823
        %v2888 = vunpack.c.l.b16 %v2824
        %v2889 = vunpack.c.l.b16 %v2825
        %v2890 = vunpack.c.l.b16 %v2826
        %v2891 = vunpack.c.l.b16 %v2827
        %v2892 = vunpack.c.l.b16 %v2828
        %v2893 = vunpack.c.l.b16 %v2829
        %v2894 = vunpack.c.l.b16 %v2830
        %v2895 = vunpack.c.l.b16 %v2831
        %v2896 = vunpack.c.l.b16 %v2832
        %v2897 = vunpack.c.l.b16 %v2833
        %v2898 = vunpack.c.l.b16 %v2834
        %v2899 = vunpack.c.l.b16 %v2835
        %v2900 = vunpack.c.l.b16 %v2836
        %v2901 = vunpack.c.l.b16 %v2837
        %v2902 = vunpack.c.l.b16 %v2838
        %v2903 = vunpack.c.l.b16 %v2839
        %v2904 = vunpack.c.l.b16 %v2840
        %v2905 = vunpack.c.l.b16 %v2841
        %v2906 = vunpack.c.l.b16 %v2842
        %v2907 = vunpack.c.l.b16 %v2843
        %v2908 = vunpack.c.l.b16 %v2844
        %v2909 = vunpack.c.l.b16 %v2845
        %v2910 = vunpack.c.l.b16 %v2846
        %v2911 = vpack.c.b16 %v2880, %v2879
        %v2912 = vpack.c.b16 %v2882, %v2881
        %v2913 = vpack.c.b16 %v2884, %v2883
        %v2914 = vpack.c.b16 %v2886, %v2885
        %v2915 = vpack.c.b16 %v2888, %v2887
        %v2916 = vpack.c.b16 %v2890, %v2889
        %v2917 = vpack.c.b16 %v2892, %v2891
        %v2918 = vpack.c.b16 %v2894, %v2893
        %v2919 = vpack.c.b16 %v2896, %v2895
        %v2920 = vpack.c.b16 %v2898, %v2897
        %v2921 = vpack.c.b16 %v2900, %v2899
        %v2922 = vpack.c.b16 %v2902, %v2901
        %v2923 = vpack.c.b16 %v2904, %v2903
        %v2924 = vpack.c.b16 %v2906, %v2905
        %v2925 = vpack.c.b16 %v2908, %v2907
        %v2926 = vpack.c.b16 %v2910, %v2909
        %2943 = vmatprep.subr.bf16.mxu0 0
        %2944 = vmatpush1.bf16.msra.mxu0 %v2911
        %2945 = vmatprep.subr.bf16.mxu0 0
        %2946 = vmatpush1.bf16.msra.mxu0 %v2912
        %2947 = vmatprep.subr.bf16.mxu0 0
        %2948 = vmatpush1.bf16.msra.mxu0 %v2913
        %2949 = vmatprep.subr.bf16.mxu0 0
        %2950 = vmatpush1.bf16.msra.mxu0 %v2914
        %2951 = vmatprep.subr.bf16.mxu0 0
        %2952 = vmatpush1.bf16.msra.mxu0 %v2915
        %2953 = vmatprep.subr.bf16.mxu0 0
        %2954 = vmatpush1.bf16.msra.mxu0 %v2916
        %2955 = vmatprep.subr.bf16.mxu0 0
        %2956 = vmatpush1.bf16.msra.mxu0 %v2917
        %2957 = vmatprep.subr.bf16.mxu0 0
        %2958 = vmatpush1.bf16.msra.mxu0 %v2918
        %2959 = vmatprep.subr.bf16.mxu0 0
        %2960 = vmatpush1.bf16.msra.mxu0 %v2919
        %2961 = vmatprep.subr.bf16.mxu0 0
        %2962 = vmatpush1.bf16.msra.mxu0 %v2920
        %2963 = vmatprep.subr.bf16.mxu0 0
        %2964 = vmatpush1.bf16.msra.mxu0 %v2921
        %2965 = vmatprep.subr.bf16.mxu0 0
        %2966 = vmatpush1.bf16.msra.mxu0 %v2922
        %2967 = vmatprep.subr.bf16.mxu0 0
        %2968 = vmatpush1.bf16.msra.mxu0 %v2923
        %2969 = vmatprep.subr.bf16.mxu0 0
        %2970 = vmatpush1.bf16.msra.mxu0 %v2924
        %2971 = vmatprep.subr.bf16.mxu0 0
        %2972 = vmatpush1.bf16.msra.mxu0 %v2925
        %2973 = vmatprep.subr.bf16.mxu0 0
        %2974 = vmatpush1.bf16.msra.mxu0 %v2926
        %2975 = vmatprep.mubr.bf16.mxu0 %v2814
        %2976 = vmatmul.mubr.bf16.gmra.mrb[0].mxu0 %v2813
        %v2977 = vpop.f32.mrb[0].mxu0
        %v2978 = vadd.f32 0.0, %v2977
        %v2979 = vpop.f32.mrb[0].mxu0
        %v2980 = vpop.f32.mrb[0].mxu0
        %v2981 = vadd.f32 0.0, %v2980
        %v2982 = vpop.f32.mrb[0].mxu0
        %2983 = vdwg.mxu0
        %v2984 = vadd.f32 %v2581, %v2978
        %v2985 = vadd.f32 %v2582, %v2981
        %v2986 = vld [vmem:[%s15] sm:$0x1]
        %v2988 = vlaneseq
        %v2989 = vshrl.u32 %v2988, 7
        %v2990 = vsub.s32 0, %v2989
        %v2991 = vrot.slane %v2986, %v2990
        %v2993 = vadd.f32 %v2984, %v2991
        %v2994 = vadd.f32 %v2985, %v2991
        %s2995 = scalar_lea.vmem %s4, 1
        %v2996 = vld [vmem:[%s2995] sm:$0x1]
        %s2997 = scalar_lea.vmem %s5, 1
        %v2998 = vld [vmem:[%s2997] sm:$0x1]
        %2999 = vadd.xlane.f32.xlu0 %v2993
        %v3000 = vpop.xlane.xlu0 %2999
        %3001 = vadd.xlane.f32.xlu0 %v2994
        %v3002 = vpop.xlane.xlu0 %3001
        %v3003 = vmul.f32 %v3000, 0.015625
        %v3004 = vmul.f32 %v3002, 0.015625
        %v3005 = vsub.f32 %v2993, %v3003
        %v3006 = vsub.f32 %v2994, %v3004
        %v3007 = vmul.f32 %v3005, %v696
        %v3008 = vmul.f32 %v3006, %v696
        %v3009 = vmul.f32 %v3007, %v3007
        %v3010 = vmul.f32 %v3008, %v3008
        %3011 = vadd.xlane.f32.xlu0 %v3009
        %v3012 = vpop.xlane.xlu0 %3011
        %3013 = vadd.xlane.f32.xlu0 %v3010
        %v3014 = vpop.xlane.xlu0 %3013
        %v3015 = vmul.f32 %v3012, 0.015625
        %v3016 = vmul.f32 %v3014, 0.015625
        %v3017 = vadd.f32 %v3015, 1e-05
        %v3018 = vadd.f32 %v3016, 1e-05
        %v3019 = vrsqrt.pop %v3017
        %v3020 = vrsqrt.pop %v3018
        %v3021 = vmul.f32 %v3007, %v3019
        %v3022 = vmul.f32 %v3008, %v3020
        %v3024 = vlaneseq
        %v3025 = vshrl.u32 %v3024, 7
        %v3026 = vsub.s32 0, %v3025
        %v3027 = vrot.slane %v2996, %v3026
        %v3029 = vmul.f32 %v3021, %v3027
        %v3030 = vmul.f32 %v3022, %v3027
        %v3032 = vlaneseq
        %v3033 = vshrl.u32 %v3032, 7
        %v3034 = vsub.s32 0, %v3033
        %v3035 = vrot.slane %v2998, %v3034
        %v3037 = vadd.f32 %v3029, %v3035
        %v3038 = vadd.f32 %v3030, %v3035
        %v3039 = vpack.c.bf16 %v3038, %v3037
        %s3040 = scalar_lea.vmem [#allocation3], 768
        %v3041 = vld [vmem:[%s3040] sm:$0xff]
        %v3042 = vld [vmem:[%s3040 + $0x8] sm:$0xff]
        %v3043 = vld [vmem:[%s3040 + $0x10] sm:$0xff]
        %v3044 = vld [vmem:[%s3040 + $0x18] sm:$0xff]
        %v3045 = vld [vmem:[%s3040 + $0x20] sm:$0xff]
        %v3046 = vld [vmem:[%s3040 + $0x28] sm:$0xff]
        %v3047 = vld [vmem:[%s3040 + $0x30] sm:$0xff]
        %v3048 = vld [vmem:[%s3040 + $0x38] sm:$0xff]
        %v3049 = vld [vmem:[%s3040 + $0x40] sm:$0xff]
        %v3050 = vld [vmem:[%s3040 + $0x48] sm:$0xff]
        %v3051 = vld [vmem:[%s3040 + $0x50] sm:$0xff]
        %v3052 = vld [vmem:[%s3040 + $0x58] sm:$0xff]
        %v3053 = vld [vmem:[%s3040 + $0x60] sm:$0xff]
        %v3054 = vld [vmem:[%s3040 + $0x68] sm:$0xff]
        %v3055 = vld [vmem:[%s3040 + $0x70] sm:$0xff]
        %v3056 = vld [vmem:[%s3040 + $0x78] sm:$0xff]
        %v3057 = vld [vmem:[%s3040 + $0x80] sm:$0xff]
        %v3058 = vld [vmem:[%s3040 + $0x88] sm:$0xff]
        %v3059 = vld [vmem:[%s3040 + $0x90] sm:$0xff]
        %v3060 = vld [vmem:[%s3040 + $0x98] sm:$0xff]
        %v3061 = vld [vmem:[%s3040 + $0xa0] sm:$0xff]
        %v3062 = vld [vmem:[%s3040 + $0xa8] sm:$0xff]
        %v3063 = vld [vmem:[%s3040 + $0xb0] sm:$0xff]
        %v3064 = vld [vmem:[%s3040 + $0xb8] sm:$0xff]
        %v3065 = vld [vmem:[%s3040 + $0xc0] sm:$0xff]
        %v3066 = vld [vmem:[%s3040 + $0xc8] sm:$0xff]
        %v3067 = vld [vmem:[%s3040 + $0xd0] sm:$0xff]
        %v3068 = vld [vmem:[%s3040 + $0xd8] sm:$0xff]
        %v3069 = vld [vmem:[%s3040 + $0xe0] sm:$0xff]
        %v3070 = vld [vmem:[%s3040 + $0xe8] sm:$0xff]
        %v3071 = vld [vmem:[%s3040 + $0xf0] sm:$0xff]
        %v3072 = vld [vmem:[%s3040 + $0xf8] sm:$0xff]
        %v3073 = vld [vmem:[%s3040 + $0x100] sm:$0xff]
        %v3074 = vld [vmem:[%s3040 + $0x108] sm:$0xff]
        %v3075 = vld [vmem:[%s3040 + $0x110] sm:$0xff]
        %v3076 = vld [vmem:[%s3040 + $0x118] sm:$0xff]
        %v3077 = vld [vmem:[%s3040 + $0x120] sm:$0xff]
        %v3078 = vld [vmem:[%s3040 + $0x128] sm:$0xff]
        %v3079 = vld [vmem:[%s3040 + $0x130] sm:$0xff]
        %v3080 = vld [vmem:[%s3040 + $0x138] sm:$0xff]
        %v3081 = vld [vmem:[%s3040 + $0x140] sm:$0xff]
        %v3082 = vld [vmem:[%s3040 + $0x148] sm:$0xff]
        %v3083 = vld [vmem:[%s3040 + $0x150] sm:$0xff]
        %v3084 = vld [vmem:[%s3040 + $0x158] sm:$0xff]
        %v3085 = vld [vmem:[%s3040 + $0x160] sm:$0xff]
        %v3086 = vld [vmem:[%s3040 + $0x168] sm:$0xff]
        %v3087 = vld [vmem:[%s3040 + $0x170] sm:$0xff]
        %v3088 = vld [vmem:[%s3040 + $0x178] sm:$0xff]
        %v3089 = vld [vmem:[%s3040 + $0x180] sm:$0xff]
        %v3090 = vld [vmem:[%s3040 + $0x188] sm:$0xff]
        %v3091 = vld [vmem:[%s3040 + $0x190] sm:$0xff]
        %v3092 = vld [vmem:[%s3040 + $0x198] sm:$0xff]
        %v3093 = vld [vmem:[%s3040 + $0x1a0] sm:$0xff]
        %v3094 = vld [vmem:[%s3040 + $0x1a8] sm:$0xff]
        %v3095 = vld [vmem:[%s3040 + $0x1b0] sm:$0xff]
        %v3096 = vld [vmem:[%s3040 + $0x1b8] sm:$0xff]
        %v3097 = vld [vmem:[%s3040 + $0x1c0] sm:$0xff]
        %v3098 = vld [vmem:[%s3040 + $0x1c8] sm:$0xff]
        %v3099 = vld [vmem:[%s3040 + $0x1d0] sm:$0xff]
        %v3100 = vld [vmem:[%s3040 + $0x1d8] sm:$0xff]
        %v3101 = vld [vmem:[%s3040 + $0x1e0] sm:$0xff]
        %v3102 = vld [vmem:[%s3040 + $0x1e8] sm:$0xff]
        %v3103 = vld [vmem:[%s3040 + $0x1f0] sm:$0xff]
        %v3104 = vld [vmem:[%s3040 + $0x1f8] sm:$0xff]
        %v3105 = vld [vmem:[%s3040 + $0x200] sm:$0xff]
        %v3106 = vld [vmem:[%s3040 + $0x208] sm:$0xff]
        %v3107 = vld [vmem:[%s3040 + $0x210] sm:$0xff]
        %v3108 = vld [vmem:[%s3040 + $0x218] sm:$0xff]
        %v3109 = vld [vmem:[%s3040 + $0x220] sm:$0xff]
        %v3110 = vld [vmem:[%s3040 + $0x228] sm:$0xff]
        %v3111 = vld [vmem:[%s3040 + $0x230] sm:$0xff]
        %v3112 = vld [vmem:[%s3040 + $0x238] sm:$0xff]
        %v3113 = vld [vmem:[%s3040 + $0x240] sm:$0xff]
        %v3114 = vld [vmem:[%s3040 + $0x248] sm:$0xff]
        %v3115 = vld [vmem:[%s3040 + $0x250] sm:$0xff]
        %v3116 = vld [vmem:[%s3040 + $0x258] sm:$0xff]
        %v3117 = vld [vmem:[%s3040 + $0x260] sm:$0xff]
        %v3118 = vld [vmem:[%s3040 + $0x268] sm:$0xff]
        %v3119 = vld [vmem:[%s3040 + $0x270] sm:$0xff]
        %v3120 = vld [vmem:[%s3040 + $0x278] sm:$0xff]
        %v3121 = vld [vmem:[%s3040 + $0x280] sm:$0xff]
        %v3122 = vld [vmem:[%s3040 + $0x288] sm:$0xff]
        %v3123 = vld [vmem:[%s3040 + $0x290] sm:$0xff]
        %v3124 = vld [vmem:[%s3040 + $0x298] sm:$0xff]
        %v3125 = vld [vmem:[%s3040 + $0x2a0] sm:$0xff]
        %v3126 = vld [vmem:[%s3040 + $0x2a8] sm:$0xff]
        %v3127 = vld [vmem:[%s3040 + $0x2b0] sm:$0xff]
        %v3128 = vld [vmem:[%s3040 + $0x2b8] sm:$0xff]
        %v3129 = vld [vmem:[%s3040 + $0x2c0] sm:$0xff]
        %v3130 = vld [vmem:[%s3040 + $0x2c8] sm:$0xff]
        %v3131 = vld [vmem:[%s3040 + $0x2d0] sm:$0xff]
        %v3132 = vld [vmem:[%s3040 + $0x2d8] sm:$0xff]
        %v3133 = vld [vmem:[%s3040 + $0x2e0] sm:$0xff]
        %v3134 = vld [vmem:[%s3040 + $0x2e8] sm:$0xff]
        %v3135 = vld [vmem:[%s3040 + $0x2f0] sm:$0xff]
        %v3136 = vld [vmem:[%s3040 + $0x2f8] sm:$0xff]
        %s3137 = scalar_lea.vmem %s7, 12
        %v3138 = vld [vmem:[%s3137] sm:$0xff]
        %v3139 = vld [vmem:[%s3137 + $0x8] sm:$0xf]
        %v3142 = vlaneseq
        %v3143 = vshrl.u32 %v3142, 7
        %v3144 = vsub.s32 0, %v3143
        %v3145 = vrot.slane %v3138, %v3144
        %v3146 = vlaneseq
        %v3147 = vshrl.u32 %v3146, 7
        %v3148 = vsub.s32 1, %v3147
        %v3149 = vrot.slane %v3138, %v3148
        %v3150 = vlaneseq
        %v3151 = vshrl.u32 %v3150, 7
        %v3152 = vsub.s32 2, %v3151
        %v3153 = vrot.slane %v3138, %v3152
        %v3154 = vlaneseq
        %v3155 = vshrl.u32 %v3154, 7
        %v3156 = vsub.s32 3, %v3155
        %v3157 = vrot.slane %v3138, %v3156
        %v3158 = vlaneseq
        %v3159 = vshrl.u32 %v3158, 7
        %v3160 = vsub.s32 4, %v3159
        %v3161 = vrot.slane %v3138, %v3160
        %v3162 = vlaneseq
        %v3163 = vshrl.u32 %v3162, 7
        %v3164 = vsub.s32 5, %v3163
        %v3165 = vrot.slane %v3138, %v3164
        %v3166 = vlaneseq
        %v3167 = vshrl.u32 %v3166, 7
        %v3168 = vsub.s32 6, %v3167
        %v3169 = vrot.slane %v3138, %v3168
        %v3170 = vlaneseq
        %v3171 = vshrl.u32 %v3170, 7
        %v3172 = vsub.s32 7, %v3171
        %v3173 = vrot.slane %v3138, %v3172
        %v3174 = vlaneseq
        %v3175 = vshrl.u32 %v3174, 7
        %v3176 = vsub.s32 0, %v3175
        %v3177 = vrot.slane %v3139, %v3176
        %v3178 = vlaneseq
        %v3179 = vshrl.u32 %v3178, 7
        %v3180 = vsub.s32 1, %v3179
        %v3181 = vrot.slane %v3139, %v3180
        %v3182 = vlaneseq
        %v3183 = vshrl.u32 %v3182, 7
        %v3184 = vsub.s32 2, %v3183
        %v3185 = vrot.slane %v3139, %v3184
        %v3186 = vlaneseq
        %v3187 = vshrl.u32 %v3186, 7
        %v3188 = vsub.s32 3, %v3187
        %v3189 = vrot.slane %v3139, %v3188
        %v3298 = vunpack.c.l.b16 %v3041
        %v3299 = vunpack.c.h.b16 %v3041
        %v3300 = vunpack.c.l.b16 %v3042
        %v3301 = vunpack.c.h.b16 %v3042
        %v3302 = vunpack.c.l.b16 %v3043
        %v3303 = vunpack.c.h.b16 %v3043
        %v3304 = vunpack.c.l.b16 %v3044
        %v3305 = vunpack.c.h.b16 %v3044
        %v3306 = vunpack.c.l.b16 %v3045
        %v3307 = vunpack.c.h.b16 %v3045
        %v3308 = vunpack.c.l.b16 %v3046
        %v3309 = vunpack.c.h.b16 %v3046
        %v3310 = vunpack.c.l.b16 %v3047
        %v3311 = vunpack.c.h.b16 %v3047
        %v3312 = vunpack.c.l.b16 %v3048
        %v3313 = vunpack.c.h.b16 %v3048
        %v3314 = vunpack.c.l.b16 %v3049
        %v3315 = vunpack.c.h.b16 %v3049
        %v3316 = vunpack.c.l.b16 %v3050
        %v3317 = vunpack.c.h.b16 %v3050
        %v3318 = vunpack.c.l.b16 %v3051
        %v3319 = vunpack.c.h.b16 %v3051
        %v3320 = vunpack.c.l.b16 %v3052
        %v3321 = vunpack.c.h.b16 %v3052
        %v3322 = vunpack.c.l.b16 %v3053
        %v3323 = vunpack.c.h.b16 %v3053
        %v3324 = vunpack.c.l.b16 %v3054
        %v3325 = vunpack.c.h.b16 %v3054
        %v3326 = vunpack.c.l.b16 %v3055
        %v3327 = vunpack.c.h.b16 %v3055
        %v3328 = vunpack.c.l.b16 %v3056
        %v3329 = vunpack.c.h.b16 %v3056
        %v3330 = vunpack.c.l.b16 %v3057
        %v3331 = vunpack.c.h.b16 %v3057
        %v3332 = vunpack.c.l.b16 %v3058
        %v3333 = vunpack.c.h.b16 %v3058
        %v3334 = vunpack.c.l.b16 %v3059
        %v3335 = vunpack.c.h.b16 %v3059
        %v3336 = vunpack.c.l.b16 %v3060
        %v3337 = vunpack.c.h.b16 %v3060
        %v3338 = vunpack.c.l.b16 %v3061
        %v3339 = vunpack.c.h.b16 %v3061
        %v3340 = vunpack.c.l.b16 %v3062
        %v3341 = vunpack.c.h.b16 %v3062
        %v3342 = vunpack.c.l.b16 %v3063
        %v3343 = vunpack.c.h.b16 %v3063
        %v3344 = vunpack.c.l.b16 %v3064
        %v3345 = vunpack.c.h.b16 %v3064
        %v3346 = vunpack.c.l.b16 %v3065
        %v3347 = vunpack.c.h.b16 %v3065
        %v3348 = vunpack.c.l.b16 %v3066
        %v3349 = vunpack.c.h.b16 %v3066
        %v3350 = vunpack.c.l.b16 %v3067
        %v3351 = vunpack.c.h.b16 %v3067
        %v3352 = vunpack.c.l.b16 %v3068
        %v3353 = vunpack.c.h.b16 %v3068
        %v3354 = vunpack.c.l.b16 %v3069
        %v3355 = vunpack.c.h.b16 %v3069
        %v3356 = vunpack.c.l.b16 %v3070
        %v3357 = vunpack.c.h.b16 %v3070
        %v3358 = vunpack.c.l.b16 %v3071
        %v3359 = vunpack.c.h.b16 %v3071
        %v3360 = vunpack.c.l.b16 %v3072
        %v3361 = vunpack.c.h.b16 %v3072
        %v3362 = vunpack.c.l.b16 %v3073
        %v3363 = vunpack.c.h.b16 %v3073
        %v3364 = vunpack.c.l.b16 %v3074
        %v3365 = vunpack.c.h.b16 %v3074
        %v3366 = vunpack.c.l.b16 %v3075
        %v3367 = vunpack.c.h.b16 %v3075
        %v3368 = vunpack.c.l.b16 %v3076
        %v3369 = vunpack.c.h.b16 %v3076
        %v3370 = vunpack.c.l.b16 %v3077
        %v3371 = vunpack.c.h.b16 %v3077
        %v3372 = vunpack.c.l.b16 %v3078
        %v3373 = vunpack.c.h.b16 %v3078
        %v3374 = vunpack.c.l.b16 %v3079
        %v3375 = vunpack.c.h.b16 %v3079
        %v3376 = vunpack.c.l.b16 %v3080
        %v3377 = vunpack.c.h.b16 %v3080
        %v3378 = vunpack.c.l.b16 %v3081
        %v3379 = vunpack.c.h.b16 %v3081
        %v3380 = vunpack.c.l.b16 %v3082
        %v3381 = vunpack.c.h.b16 %v3082
        %v3382 = vunpack.c.l.b16 %v3083
        %v3383 = vunpack.c.h.b16 %v3083
        %v3384 = vunpack.c.l.b16 %v3084
        %v3385 = vunpack.c.h.b16 %v3084
        %v3386 = vunpack.c.l.b16 %v3085
        %v3387 = vunpack.c.h.b16 %v3085
        %v3388 = vunpack.c.l.b16 %v3086
        %v3389 = vunpack.c.h.b16 %v3086
        %v3390 = vunpack.c.l.b16 %v3087
        %v3391 = vunpack.c.h.b16 %v3087
        %v3392 = vunpack.c.l.b16 %v3088
        %v3393 = vunpack.c.h.b16 %v3088
        %v3394 = vunpack.c.l.b16 %v3089
        %v3395 = vunpack.c.h.b16 %v3089
        %v3396 = vunpack.c.l.b16 %v3090
        %v3397 = vunpack.c.h.b16 %v3090
        %v3398 = vunpack.c.l.b16 %v3091
        %v3399 = vunpack.c.h.b16 %v3091
        %v3400 = vunpack.c.l.b16 %v3092
        %v3401 = vunpack.c.h.b16 %v3092
        %v3402 = vunpack.c.l.b16 %v3093
        %v3403 = vunpack.c.h.b16 %v3093
        %v3404 = vunpack.c.l.b16 %v3094
        %v3405 = vunpack.c.h.b16 %v3094
        %v3406 = vunpack.c.l.b16 %v3095
        %v3407 = vunpack.c.h.b16 %v3095
        %v3408 = vunpack.c.l.b16 %v3096
        %v3409 = vunpack.c.h.b16 %v3096
        %v3410 = vunpack.c.l.b16 %v3097
        %v3411 = vunpack.c.h.b16 %v3097
        %v3412 = vunpack.c.l.b16 %v3098
        %v3413 = vunpack.c.h.b16 %v3098
        %v3414 = vunpack.c.l.b16 %v3099
        %v3415 = vunpack.c.h.b16 %v3099
        %v3416 = vunpack.c.l.b16 %v3100
        %v3417 = vunpack.c.h.b16 %v3100
        %v3418 = vunpack.c.l.b16 %v3101
        %v3419 = vunpack.c.h.b16 %v3101
        %v3420 = vunpack.c.l.b16 %v3102
        %v3421 = vunpack.c.h.b16 %v3102
        %v3422 = vunpack.c.l.b16 %v3103
        %v3423 = vunpack.c.h.b16 %v3103
        %v3424 = vunpack.c.l.b16 %v3104
        %v3425 = vunpack.c.h.b16 %v3104
        %v3426 = vunpack.c.l.b16 %v3105
        %v3427 = vunpack.c.h.b16 %v3105
        %v3428 = vunpack.c.l.b16 %v3106
        %v3429 = vunpack.c.h.b16 %v3106
        %v3430 = vunpack.c.l.b16 %v3107
        %v3431 = vunpack.c.h.b16 %v3107
        %v3432 = vunpack.c.l.b16 %v3108
        %v3433 = vunpack.c.h.b16 %v3108
        %v3434 = vunpack.c.l.b16 %v3109
        %v3435 = vunpack.c.h.b16 %v3109
        %v3436 = vunpack.c.l.b16 %v3110
        %v3437 = vunpack.c.h.b16 %v3110
        %v3438 = vunpack.c.l.b16 %v3111
        %v3439 = vunpack.c.h.b16 %v3111
        %v3440 = vunpack.c.l.b16 %v3112
        %v3441 = vunpack.c.h.b16 %v3112
        %v3442 = vunpack.c.l.b16 %v3113
        %v3443 = vunpack.c.h.b16 %v3113
        %v3444 = vunpack.c.l.b16 %v3114
        %v3445 = vunpack.c.h.b16 %v3114
        %v3446 = vunpack.c.l.b16 %v3115
        %v3447 = vunpack.c.h.b16 %v3115
        %v3448 = vunpack.c.l.b16 %v3116
        %v3449 = vunpack.c.h.b16 %v3116
        %v3450 = vunpack.c.l.b16 %v3117
        %v3451 = vunpack.c.h.b16 %v3117
        %v3452 = vunpack.c.l.b16 %v3118
        %v3453 = vunpack.c.h.b16 %v3118
        %v3454 = vunpack.c.l.b16 %v3119
        %v3455 = vunpack.c.h.b16 %v3119
        %v3456 = vunpack.c.l.b16 %v3120
        %v3457 = vunpack.c.h.b16 %v3120
        %v3458 = vunpack.c.l.b16 %v3121
        %v3459 = vunpack.c.h.b16 %v3121
        %v3460 = vunpack.c.l.b16 %v3122
        %v3461 = vunpack.c.h.b16 %v3122
        %v3462 = vunpack.c.l.b16 %v3123
        %v3463 = vunpack.c.h.b16 %v3123
        %v3464 = vunpack.c.l.b16 %v3124
        %v3465 = vunpack.c.h.b16 %v3124
        %v3466 = vunpack.c.l.b16 %v3125
        %v3467 = vunpack.c.h.b16 %v3125
        %v3468 = vunpack.c.l.b16 %v3126
        %v3469 = vunpack.c.h.b16 %v3126
        %v3470 = vunpack.c.l.b16 %v3127
        %v3471 = vunpack.c.h.b16 %v3127
        %v3472 = vunpack.c.l.b16 %v3128
        %v3473 = vunpack.c.h.b16 %v3128
        %v3474 = vunpack.c.l.b16 %v3129
        %v3475 = vunpack.c.h.b16 %v3129
        %v3476 = vunpack.c.l.b16 %v3130
        %v3477 = vunpack.c.h.b16 %v3130
        %v3478 = vunpack.c.l.b16 %v3131
        %v3479 = vunpack.c.h.b16 %v3131
        %v3480 = vunpack.c.l.b16 %v3132
        %v3481 = vunpack.c.h.b16 %v3132
        %v3482 = vunpack.c.l.b16 %v3133
        %v3483 = vunpack.c.h.b16 %v3133
        %v3484 = vunpack.c.l.b16 %v3134
        %v3485 = vunpack.c.h.b16 %v3134
        %v3486 = vunpack.c.l.b16 %v3135
        %v3487 = vunpack.c.h.b16 %v3135
        %v3488 = vunpack.c.l.b16 %v3136
        %v3489 = vunpack.c.h.b16 %v3136
        %v3490 = vpack.c.b16 %v3310, %v3298
        %v3491 = vpack.c.b16 %v3311, %v3299
        %v3492 = vpack.c.b16 %v3312, %v3300
        %v3493 = vpack.c.b16 %v3313, %v3301
        %v3494 = vpack.c.b16 %v3314, %v3302
        %v3495 = vpack.c.b16 %v3315, %v3303
        %v3496 = vpack.c.b16 %v3316, %v3304
        %v3497 = vpack.c.b16 %v3317, %v3305
        %v3498 = vpack.c.b16 %v3318, %v3306
        %v3499 = vpack.c.b16 %v3319, %v3307
        %v3500 = vpack.c.b16 %v3320, %v3308
        %v3501 = vpack.c.b16 %v3321, %v3309
        %v3502 = vpack.c.b16 %v3334, %v3322
        %v3503 = vpack.c.b16 %v3335, %v3323
        %v3504 = vpack.c.b16 %v3336, %v3324
        %v3505 = vpack.c.b16 %v3337, %v3325
        %v3506 = vpack.c.b16 %v3338, %v3326
        %v3507 = vpack.c.b16 %v3339, %v3327
        %v3508 = vpack.c.b16 %v3340, %v3328
        %v3509 = vpack.c.b16 %v3341, %v3329
        %v3510 = vpack.c.b16 %v3342, %v3330
        %v3511 = vpack.c.b16 %v3343, %v3331
        %v3512 = vpack.c.b16 %v3344, %v3332
        %v3513 = vpack.c.b16 %v3345, %v3333
        %v3514 = vpack.c.b16 %v3358, %v3346
        %v3515 = vpack.c.b16 %v3359, %v3347
        %v3516 = vpack.c.b16 %v3360, %v3348
        %v3517 = vpack.c.b16 %v3361, %v3349
        %v3518 = vpack.c.b16 %v3362, %v3350
        %v3519 = vpack.c.b16 %v3363, %v3351
        %v3520 = vpack.c.b16 %v3364, %v3352
        %v3521 = vpack.c.b16 %v3365, %v3353
        %v3522 = vpack.c.b16 %v3366, %v3354
        %v3523 = vpack.c.b16 %v3367, %v3355
        %v3524 = vpack.c.b16 %v3368, %v3356
        %v3525 = vpack.c.b16 %v3369, %v3357
        %v3526 = vpack.c.b16 %v3382, %v3370
        %v3527 = vpack.c.b16 %v3383, %v3371
        %v3528 = vpack.c.b16 %v3384, %v3372
        %v3529 = vpack.c.b16 %v3385, %v3373
        %v3530 = vpack.c.b16 %v3386, %v3374
        %v3531 = vpack.c.b16 %v3387, %v3375
        %v3532 = vpack.c.b16 %v3388, %v3376
        %v3533 = vpack.c.b16 %v3389, %v3377
        %v3534 = vpack.c.b16 %v3390, %v3378
        %v3535 = vpack.c.b16 %v3391, %v3379
        %v3536 = vpack.c.b16 %v3392, %v3380
        %v3537 = vpack.c.b16 %v3393, %v3381
        %v3538 = vpack.c.b16 %v3406, %v3394
        %v3539 = vpack.c.b16 %v3407, %v3395
        %v3540 = vpack.c.b16 %v3408, %v3396
        %v3541 = vpack.c.b16 %v3409, %v3397
        %v3542 = vpack.c.b16 %v3410, %v3398
        %v3543 = vpack.c.b16 %v3411, %v3399
        %v3544 = vpack.c.b16 %v3412, %v3400
        %v3545 = vpack.c.b16 %v3413, %v3401
        %v3546 = vpack.c.b16 %v3414, %v3402
        %v3547 = vpack.c.b16 %v3415, %v3403
        %v3548 = vpack.c.b16 %v3416, %v3404
        %v3549 = vpack.c.b16 %v3417, %v3405
        %v3550 = vpack.c.b16 %v3430, %v3418
        %v3551 = vpack.c.b16 %v3431, %v3419
        %v3552 = vpack.c.b16 %v3432, %v3420
        %v3553 = vpack.c.b16 %v3433, %v3421
        %v3554 = vpack.c.b16 %v3434, %v3422
        %v3555 = vpack.c.b16 %v3435, %v3423
        %v3556 = vpack.c.b16 %v3436, %v3424
        %v3557 = vpack.c.b16 %v3437, %v3425
        %v3558 = vpack.c.b16 %v3438, %v3426
        %v3559 = vpack.c.b16 %v3439, %v3427
        %v3560 = vpack.c.b16 %v3440, %v3428
        %v3561 = vpack.c.b16 %v3441, %v3429
        %v3562 = vpack.c.b16 %v3454, %v3442
        %v3563 = vpack.c.b16 %v3455, %v3443
        %v3564 = vpack.c.b16 %v3456, %v3444
        %v3565 = vpack.c.b16 %v3457, %v3445
        %v3566 = vpack.c.b16 %v3458, %v3446
        %v3567 = vpack.c.b16 %v3459, %v3447
        %v3568 = vpack.c.b16 %v3460, %v3448
        %v3569 = vpack.c.b16 %v3461, %v3449
        %v3570 = vpack.c.b16 %v3462, %v3450
        %v3571 = vpack.c.b16 %v3463, %v3451
        %v3572 = vpack.c.b16 %v3464, %v3452
        %v3573 = vpack.c.b16 %v3465, %v3453
        %v3574 = vpack.c.b16 %v3478, %v3466
        %v3575 = vpack.c.b16 %v3479, %v3467
        %v3576 = vpack.c.b16 %v3480, %v3468
        %v3577 = vpack.c.b16 %v3481, %v3469
        %v3578 = vpack.c.b16 %v3482, %v3470
        %v3579 = vpack.c.b16 %v3483, %v3471
        %v3580 = vpack.c.b16 %v3484, %v3472
        %v3581 = vpack.c.b16 %v3485, %v3473
        %v3582 = vpack.c.b16 %v3486, %v3474
        %v3583 = vpack.c.b16 %v3487, %v3475
        %v3584 = vpack.c.b16 %v3488, %v3476
        %v3585 = vpack.c.b16 %v3489, %v3477
        %3682 = vmatprep.subr.bf16.mxu0 %v3491
        %3683 = vmatpush1.bf16.msra.mxu0 %v3490
        %3684 = vmatprep.subr.bf16.mxu0 %v3503
        %3685 = vmatpush1.bf16.msra.mxu0 %v3502
        %3686 = vmatprep.subr.bf16.mxu0 %v3515
        %3687 = vmatpush1.bf16.msra.mxu0 %v3514
        %3688 = vmatprep.subr.bf16.mxu0 %v3527
        %3689 = vmatpush1.bf16.msra.mxu0 %v3526
        %3690 = vmatprep.subr.bf16.mxu0 %v3539
        %3691 = vmatpush1.bf16.msra.mxu0 %v3538
        %3692 = vmatprep.subr.bf16.mxu0 %v3551
        %3693 = vmatpush1.bf16.msra.mxu0 %v3550
        %3694 = vmatprep.subr.bf16.mxu0 %v3563
        %3695 = vmatpush1.bf16.msra.mxu0 %v3562
        %3696 = vmatprep.subr.bf16.mxu0 %v3575
        %3697 = vmatpush1.bf16.msra.mxu0 %v3574
        %3698 = vmatprep.subr.bf16.mxu0 0
        %3699 = vmatpush1.bf16.msra.mxu0 0
        %3700 = vmatprep.subr.bf16.mxu0 0
        %3701 = vmatpush1.bf16.msra.mxu0 0
        %3702 = vmatprep.subr.bf16.mxu0 0
        %3703 = vmatpush1.bf16.msra.mxu0 0
        %3704 = vmatprep.subr.bf16.mxu0 0
        %3705 = vmatpush1.bf16.msra.mxu0 0
        %3706 = vmatprep.subr.bf16.mxu0 0
        %3707 = vmatpush1.bf16.msra.mxu0 0
        %3708 = vmatprep.subr.bf16.mxu0 0
        %3709 = vmatpush1.bf16.msra.mxu0 0
        %3710 = vmatprep.subr.bf16.mxu0 0
        %3711 = vmatpush1.bf16.msra.mxu0 0
        %3712 = vmatprep.subr.bf16.mxu0 0
        %3713 = vmatpush1.bf16.msra.mxu0 0
        %3714 = vmatprep.mubr.bf16.mxu0 0
        %3715 = vmatmul.mubr.bf16.gmra.mrb[0].mxu0 %v3039
        %v3716 = vpop.f32.mrb[0].mxu0
        %v3717 = vadd.f32 %v3145, %v3716
        %v3718 = vpop.f32.mrb[0].mxu0
        %v3719 = vadd.f32 %v3149, %v3718
        %v3720 = vpop.f32.mrb[0].mxu0
        %v3721 = vadd.f32 %v3145, %v3720
        %v3722 = vpop.f32.mrb[0].mxu0
        %v3723 = vadd.f32 %v3149, %v3722
        %3724 = vdwg.mxu0
        %3725 = vmatprep.subr.bf16.mxu0 %v3493
        %3726 = vmatpush1.bf16.msra.mxu0 %v3492
        %3727 = vmatprep.subr.bf16.mxu0 %v3505
        %3728 = vmatpush1.bf16.msra.mxu0 %v3504
        %3729 = vmatprep.subr.bf16.mxu0 %v3517
        %3730 = vmatpush1.bf16.msra.mxu0 %v3516
        %3731 = vmatprep.subr.bf16.mxu0 %v3529
        %3732 = vmatpush1.bf16.msra.mxu0 %v3528
        %3733 = vmatprep.subr.bf16.mxu0 %v3541
        %3734 = vmatpush1.bf16.msra.mxu0 %v3540
        %3735 = vmatprep.subr.bf16.mxu0 %v3553
        %3736 = vmatpush1.bf16.msra.mxu0 %v3552
        %3737 = vmatprep.subr.bf16.mxu0 %v3565
        %3738 = vmatpush1.bf16.msra.mxu0 %v3564
        %3739 = vmatprep.subr.bf16.mxu0 %v3577
        %3740 = vmatpush1.bf16.msra.mxu0 %v3576
        %3741 = vmatprep.subr.bf16.mxu0 0
        %3742 = vmatpush1.bf16.msra.mxu0 0
        %3743 = vmatprep.subr.bf16.mxu0 0
        %3744 = vmatpush1.bf16.msra.mxu0 0
        %3745 = vmatprep.subr.bf16.mxu0 0
        %3746 = vmatpush1.bf16.msra.mxu0 0
        %3747 = vmatprep.subr.bf16.mxu0 0
        %3748 = vmatpush1.bf16.msra.mxu0 0
        %3749 = vmatprep.subr.bf16.mxu0 0
        %3750 = vmatpush1.bf16.msra.mxu0 0
        %3751 = vmatprep.subr.bf16.mxu0 0
        %3752 = vmatpush1.bf16.msra.mxu0 0
        %3753 = vmatprep.subr.bf16.mxu0 0
        %3754 = vmatpush1.bf16.msra.mxu0 0
        %3755 = vmatprep.subr.bf16.mxu0 0
        %3756 = vmatpush1.bf16.msra.mxu0 0
        %3757 = vmatprep.mubr.bf16.mxu0 0
        %3758 = vmatmul.mubr.bf16.gmra.mrb[0].mxu0 %v3039
        %v3759 = vpop.f32.mrb[0].mxu0
        %v3760 = vadd.f32 %v3153, %v3759
        %v3761 = vpop.f32.mrb[0].mxu0
        %v3762 = vadd.f32 %v3157, %v3761
        %v3763 = vpop.f32.mrb[0].mxu0
        %v3764 = vadd.f32 %v3153, %v3763
        %v3765 = vpop.f32.mrb[0].mxu0
        %v3766 = vadd.f32 %v3157, %v3765
        %3767 = vdwg.mxu0
        %3768 = vmatprep.subr.bf16.mxu0 %v3495
        %3769 = vmatpush1.bf16.msra.mxu0 %v3494
        %3770 = vmatprep.subr.bf16.mxu0 %v3507
        %3771 = vmatpush1.bf16.msra.mxu0 %v3506
        %3772 = vmatprep.subr.bf16.mxu0 %v3519
        %3773 = vmatpush1.bf16.msra.mxu0 %v3518
        %3774 = vmatprep.subr.bf16.mxu0 %v3531
        %3775 = vmatpush1.bf16.msra.mxu0 %v3530
        %3776 = vmatprep.subr.bf16.mxu0 %v3543
        %3777 = vmatpush1.bf16.msra.mxu0 %v3542
        %3778 = vmatprep.subr.bf16.mxu0 %v3555
        %3779 = vmatpush1.bf16.msra.mxu0 %v3554
        %3780 = vmatprep.subr.bf16.mxu0 %v3567
        %3781 = vmatpush1.bf16.msra.mxu0 %v3566
        %3782 = vmatprep.subr.bf16.mxu0 %v3579
        %3783 = vmatpush1.bf16.msra.mxu0 %v3578
        %3784 = vmatprep.subr.bf16.mxu0 0
        %3785 = vmatpush1.bf16.msra.mxu0 0
        %3786 = vmatprep.subr.bf16.mxu0 0
        %3787 = vmatpush1.bf16.msra.mxu0 0
        %3788 = vmatprep.subr.bf16.mxu0 0
        %3789 = vmatpush1.bf16.msra.mxu0 0
        %3790 = vmatprep.subr.bf16.mxu0 0
        %3791 = vmatpush1.bf16.msra.mxu0 0
        %3792 = vmatprep.subr.bf16.mxu0 0
        %3793 = vmatpush1.bf16.msra.mxu0 0
        %3794 = vmatprep.subr.bf16.mxu0 0
        %3795 = vmatpush1.bf16.msra.mxu0 0
        %3796 = vmatprep.subr.bf16.mxu0 0
        %3797 = vmatpush1.bf16.msra.mxu0 0
        %3798 = vmatprep.subr.bf16.mxu0 0
        %3799 = vmatpush1.bf16.msra.mxu0 0
        %3800 = vmatprep.mubr.bf16.mxu0 0
        %3801 = vmatmul.mubr.bf16.gmra.mrb[0].mxu0 %v3039
        %v3802 = vpop.f32.mrb[0].mxu0
        %v3803 = vadd.f32 %v3161, %v3802
        %v3804 = vpop.f32.mrb[0].mxu0
        %v3805 = vadd.f32 %v3165, %v3804
        %v3806 = vpop.f32.mrb[0].mxu0
        %v3807 = vadd.f32 %v3161, %v3806
        %v3808 = vpop.f32.mrb[0].mxu0
        %v3809 = vadd.f32 %v3165, %v3808
        %3810 = vdwg.mxu0
        %3811 = vmatprep.subr.bf16.mxu0 %v3497
        %3812 = vmatpush1.bf16.msra.mxu0 %v3496
        %3813 = vmatprep.subr.bf16.mxu0 %v3509
        %3814 = vmatpush1.bf16.msra.mxu0 %v3508
        %3815 = vmatprep.subr.bf16.mxu0 %v3521
        %3816 = vmatpush1.bf16.msra.mxu0 %v3520
        %3817 = vmatprep.subr.bf16.mxu0 %v3533
        %3818 = vmatpush1.bf16.msra.mxu0 %v3532
        %3819 = vmatprep.subr.bf16.mxu0 %v3545
        %3820 = vmatpush1.bf16.msra.mxu0 %v3544
        %3821 = vmatprep.subr.bf16.mxu0 %v3557
        %3822 = vmatpush1.bf16.msra.mxu0 %v3556
        %3823 = vmatprep.subr.bf16.mxu0 %v3569
        %3824 = vmatpush1.bf16.msra.mxu0 %v3568
        %3825 = vmatprep.subr.bf16.mxu0 %v3581
        %3826 = vmatpush1.bf16.msra.mxu0 %v3580
        %3827 = vmatprep.subr.bf16.mxu0 0
        %3828 = vmatpush1.bf16.msra.mxu0 0
        %3829 = vmatprep.subr.bf16.mxu0 0
        %3830 = vmatpush1.bf16.msra.mxu0 0
        %3831 = vmatprep.subr.bf16.mxu0 0
        %3832 = vmatpush1.bf16.msra.mxu0 0
        %3833 = vmatprep.subr.bf16.mxu0 0
        %3834 = vmatpush1.bf16.msra.mxu0 0
        %3835 = vmatprep.subr.bf16.mxu0 0
        %3836 = vmatpush1.bf16.msra.mxu0 0
        %3837 = vmatprep.subr.bf16.mxu0 0
        %3838 = vmatpush1.bf16.msra.mxu0 0
        %3839 = vmatprep.subr.bf16.mxu0 0
        %3840 = vmatpush1.bf16.msra.mxu0 0
        %3841 = vmatprep.subr.bf16.mxu0 0
        %3842 = vmatpush1.bf16.msra.mxu0 0
        %3843 = vmatprep.mubr.bf16.mxu0 0
        %3844 = vmatmul.mubr.bf16.gmra.mrb[0].mxu0 %v3039
        %v3845 = vpop.f32.mrb[0].mxu0
        %v3846 = vadd.f32 %v3169, %v3845
        %v3847 = vpop.f32.mrb[0].mxu0
        %v3848 = vadd.f32 %v3173, %v3847
        %v3849 = vpop.f32.mrb[0].mxu0
        %v3850 = vadd.f32 %v3169, %v3849
        %v3851 = vpop.f32.mrb[0].mxu0
        %v3852 = vadd.f32 %v3173, %v3851
        %3853 = vdwg.mxu0
        %3854 = vmatprep.subr.bf16.mxu0 %v3499
        %3855 = vmatpush1.bf16.msra.mxu0 %v3498
        %3856 = vmatprep.subr.bf16.mxu0 %v3511
        %3857 = vmatpush1.bf16.msra.mxu0 %v3510
        %3858 = vmatprep.subr.bf16.mxu0 %v3523
        %3859 = vmatpush1.bf16.msra.mxu0 %v3522
        %3860 = vmatprep.subr.bf16.mxu0 %v3535
        %3861 = vmatpush1.bf16.msra.mxu0 %v3534
        %3862 = vmatprep.subr.bf16.mxu0 %v3547
        %3863 = vmatpush1.bf16.msra.mxu0 %v3546
        %3864 = vmatprep.subr.bf16.mxu0 %v3559
        %3865 = vmatpush1.bf16.msra.mxu0 %v3558
        %3866 = vmatprep.subr.bf16.mxu0 %v3571
        %3867 = vmatpush1.bf16.msra.mxu0 %v3570
        %3868 = vmatprep.subr.bf16.mxu0 %v3583
        %3869 = vmatpush1.bf16.msra.mxu0 %v3582
        %3870 = vmatprep.subr.bf16.mxu0 0
        %3871 = vmatpush1.bf16.msra.mxu0 0
        %3872 = vmatprep.subr.bf16.mxu0 0
        %3873 = vmatpush1.bf16.msra.mxu0 0
        %3874 = vmatprep.subr.bf16.mxu0 0
        %3875 = vmatpush1.bf16.msra.mxu0 0
        %3876 = vmatprep.subr.bf16.mxu0 0
        %3877 = vmatpush1.bf16.msra.mxu0 0
        %3878 = vmatprep.subr.bf16.mxu0 0
        %3879 = vmatpush1.bf16.msra.mxu0 0
        %3880 = vmatprep.subr.bf16.mxu0 0
        %3881 = vmatpush1.bf16.msra.mxu0 0
        %3882 = vmatprep.subr.bf16.mxu0 0
        %3883 = vmatpush1.bf16.msra.mxu0 0
        %3884 = vmatprep.subr.bf16.mxu0 0
        %3885 = vmatpush1.bf16.msra.mxu0 0
        %3886 = vmatprep.mubr.bf16.mxu0 0
        %3887 = vmatmul.mubr.bf16.gmra.mrb[0].mxu0 %v3039
        %v3888 = vpop.f32.mrb[0].mxu0
        %v3889 = vadd.f32 %v3177, %v3888
        %v3890 = vpop.f32.mrb[0].mxu0
        %v3891 = vadd.f32 %v3181, %v3890
        %v3892 = vpop.f32.mrb[0].mxu0
        %v3893 = vadd.f32 %v3177, %v3892
        %v3894 = vpop.f32.mrb[0].mxu0
        %v3895 = vadd.f32 %v3181, %v3894
        %3896 = vdwg.mxu0
        %3897 = vmatprep.subr.bf16.mxu0 %v3501
        %3898 = vmatpush1.bf16.msra.mxu0 %v3500
        %3899 = vmatprep.subr.bf16.mxu0 %v3513
        %3900 = vmatpush1.bf16.msra.mxu0 %v3512
        %3901 = vmatprep.subr.bf16.mxu0 %v3525
        %3902 = vmatpush1.bf16.msra.mxu0 %v3524
        %3903 = vmatprep.subr.bf16.mxu0 %v3537
        %3904 = vmatpush1.bf16.msra.mxu0 %v3536
        %3905 = vmatprep.subr.bf16.mxu0 %v3549
        %3906 = vmatpush1.bf16.msra.mxu0 %v3548
        %3907 = vmatprep.subr.bf16.mxu0 %v3561
        %3908 = vmatpush1.bf16.msra.mxu0 %v3560
        %3909 = vmatprep.subr.bf16.mxu0 %v3573
        %3910 = vmatpush1.bf16.msra.mxu0 %v3572
        %3911 = vmatprep.subr.bf16.mxu0 %v3585
        %3912 = vmatpush1.bf16.msra.mxu0 %v3584
        %3913 = vmatprep.subr.bf16.mxu0 0
        %3914 = vmatpush1.bf16.msra.mxu0 0
        %3915 = vmatprep.subr.bf16.mxu0 0
        %3916 = vmatpush1.bf16.msra.mxu0 0
        %3917 = vmatprep.subr.bf16.mxu0 0
        %3918 = vmatpush1.bf16.msra.mxu0 0
        %3919 = vmatprep.subr.bf16.mxu0 0
        %3920 = vmatpush1.bf16.msra.mxu0 0
        %3921 = vmatprep.subr.bf16.mxu0 0
        %3922 = vmatpush1.bf16.msra.mxu0 0
        %3923 = vmatprep.subr.bf16.mxu0 0
        %3924 = vmatpush1.bf16.msra.mxu0 0
        %3925 = vmatprep.subr.bf16.mxu0 0
        %3926 = vmatpush1.bf16.msra.mxu0 0
        %3927 = vmatprep.subr.bf16.mxu0 0
        %3928 = vmatpush1.bf16.msra.mxu0 0
        %3929 = vmatprep.mubr.bf16.mxu0 0
        %3930 = vmatmul.mubr.bf16.gmra.mrb[0].mxu0 %v3039
        %v3931 = vpop.f32.mrb[0].mxu0
        %v3932 = vadd.f32 %v3185, %v3931
        %v3933 = vpop.f32.mrb[0].mxu0
        %v3934 = vadd.f32 %v3189, %v3933
        %v3935 = vpop.f32.mrb[0].mxu0
        %v3936 = vadd.f32 %v3185, %v3935
        %v3937 = vpop.f32.mrb[0].mxu0
        %v3938 = vadd.f32 %v3189, %v3937
        %3939 = vdwg.mxu0
        %v3940 = vpack.c.bf16 %v3721, %v3717
        %v3941 = vpack.c.bf16 %v3723, %v3719
        %v3942 = vpack.c.bf16 %v3764, %v3760
        %v3943 = vpack.c.bf16 %v3766, %v3762
        %v3944 = vpack.c.bf16 %v3807, %v3803
        %v3945 = vpack.c.bf16 %v3809, %v3805
        %v3946 = vpack.c.bf16 %v3850, %v3846
        %v3947 = vpack.c.bf16 %v3852, %v3848
        %v3948 = vpack.c.bf16 %v3893, %v3889
        %v3949 = vpack.c.bf16 %v3895, %v3891
        %v3950 = vpack.c.bf16 %v3936, %v3932
        %v3951 = vpack.c.bf16 %v3938, %v3934
        %3952 = vmatprep.subr.bf16.mxu0 0
        %3953 = vmatpush1.bf16.xpose.msra.mxu0 %v3944
        %3954 = vmatprep.subr.bf16.mxu0 0
        %3955 = vmatpush1.bf16.xpose.msra.mxu0 0
        %3956 = vmatprep.subr.bf16.mxu0 0
        %3957 = vmatpush1.bf16.xpose.msra.mxu0 0
        %3958 = vmatprep.subr.bf16.mxu0 0
        %3959 = vmatpush1.bf16.xpose.msra.mxu0 0
        %3960 = vmatprep.subr.bf16.mxu0 0
        %3961 = vmatpush1.bf16.xpose.msra.mxu0 0
        %3962 = vmatprep.subr.bf16.mxu0 0
        %3963 = vmatpush1.bf16.xpose.msra.mxu0 0
        %3964 = vmatprep.subr.bf16.mxu0 0
        %3965 = vmatpush1.bf16.xpose.msra.mxu0 0
        %3966 = vmatprep.subr.bf16.mxu0 0
        %3967 = vmatpush1.bf16.xpose.msra.mxu0 0
        %3968 = vmatprep.subr.bf16.mxu0 0
        %3969 = vmatpush1.bf16.xpose.msra.mxu0 0
        %3970 = vmatprep.subr.bf16.mxu0 0
        %3971 = vmatpush1.bf16.xpose.msra.mxu0 0
        %3972 = vmatprep.subr.bf16.mxu0 0
        %3973 = vmatpush1.bf16.xpose.msra.mxu0 0
        %3974 = vmatprep.subr.bf16.mxu0 0
        %3975 = vmatpush1.bf16.xpose.msra.mxu0 0
        %3976 = vmatprep.subr.bf16.mxu0 0
        %3977 = vmatpush1.bf16.xpose.msra.mxu0 0
        %3978 = vmatprep.subr.bf16.mxu0 0
        %3979 = vmatpush1.bf16.xpose.msra.mxu0 0
        %3980 = vmatprep.subr.bf16.mxu0 0
        %3981 = vmatpush1.bf16.xpose.msra.mxu0 0
        %3982 = vmatprep.subr.bf16.mxu0 0
        %3983 = vmatpush1.bf16.xpose.msra.mxu0 0
        %3984 = vmatprep.mubr.bf16.mxu0 0
        %3985 = vmatmul.mubr.bf16.gmra.mrb[0].mxu0 %v3940
        %v3986 = vpop.f32.mrb[0].mxu0
        %v3987 = vadd.f32 0.0, %v3986
        %v3988 = vpop.f32.mrb[0].mxu0
        %v3989 = vpop.f32.mrb[0].mxu0
        %v3990 = vadd.f32 0.0, %v3989
        %v3991 = vpop.f32.mrb[0].mxu0
        %3992 = vdwg.mxu0
        %v3993 = vmul.f32 %v3987, 0.25
        %v3994 = vmul.f32 %v3990, 0.25
        %v3995 = vadd.f32 %v3993, %v702
        %v3996 = vadd.f32 %v3994, %v703
        %v3997 = vsel %vm1826, %v3995, -inf
        %3998 = vmax.xlane.f32.xlu0 %v3997
        %v3999 = vpop.xlane.xlu0 %3998
        %v4000 = vsel %vm1826, %v3996, -inf
        %4001 = vmax.xlane.f32.xlu0 %v4000
        %v4002 = vpop.xlane.xlu0 %4001
        %v4003 = vsub.f32 %v3995, %v3999
        %v4004 = vsub.f32 %v3996, %v4002
        %v4005 = vmul.f32 %v4003, 1.442695
        %v4006 = vpow.pop %v4005
        %v4007 = vmul.f32 %v4004, 1.442695
        %v4008 = vpow.pop %v4007
        %v4009 = vsel %vm1826, %v4006, 0.0
        %4010 = vadd.xlane.f32.xlu0 %v4009
        %v4011 = vpop.xlane.xlu0 %4010
        %v4012 = vsel %vm1826, %v4008, 0.0
        %4013 = vadd.xlane.f32.xlu0 %v4012
        %v4014 = vpop.xlane.xlu0 %4013
        %v4015 = vpack.c.bf16 %v4008, %v4006
        %v4017 = vsel %vm1826, %v4015, 0
        %4019 = vmatprep.subr.bf16.mxu0 0
        %4020 = vmatpush1.bf16.msra.mxu0 %v3948
        %4021 = vmatprep.subr.bf16.mxu0 0
        %4022 = vmatpush1.bf16.msra.mxu0 0
        %4023 = vmatprep.subr.bf16.mxu0 0
        %4024 = vmatpush1.bf16.msra.mxu0 0
        %4025 = vmatprep.subr.bf16.mxu0 0
        %4026 = vmatpush1.bf16.msra.mxu0 0
        %4027 = vmatprep.subr.bf16.mxu0 0
        %4028 = vmatpush1.bf16.msra.mxu0 0
        %4029 = vmatprep.subr.bf16.mxu0 0
        %4030 = vmatpush1.bf16.msra.mxu0 0
        %4031 = vmatprep.subr.bf16.mxu0 0
        %4032 = vmatpush1.bf16.msra.mxu0 0
        %4033 = vmatprep.subr.bf16.mxu0 0
        %4034 = vmatpush1.bf16.msra.mxu0 0
        %4035 = vmatprep.subr.bf16.mxu0 0
        %4036 = vmatpush1.bf16.msra.mxu0 0
        %4037 = vmatprep.subr.bf16.mxu0 0
        %4038 = vmatpush1.bf16.msra.mxu0 0
        %4039 = vmatprep.subr.bf16.mxu0 0
        %4040 = vmatpush1.bf16.msra.mxu0 0
        %4041 = vmatprep.subr.bf16.mxu0 0
        %4042 = vmatpush1.bf16.msra.mxu0 0
        %4043 = vmatprep.subr.bf16.mxu0 0
        %4044 = vmatpush1.bf16.msra.mxu0 0
        %4045 = vmatprep.subr.bf16.mxu0 0
        %4046 = vmatpush1.bf16.msra.mxu0 0
        %4047 = vmatprep.subr.bf16.mxu0 0
        %4048 = vmatpush1.bf16.msra.mxu0 0
        %4049 = vmatprep.subr.bf16.mxu0 0
        %4050 = vmatpush1.bf16.msra.mxu0 0
        %4051 = vmatprep.mubr.bf16.mxu0 0
        %4052 = vmatmul.mubr.bf16.gmra.mrb[0].mxu0 %v4017
        %v4053 = vpop.f32.mrb[0].mxu0
        %v4054 = vadd.f32 0.0, %v4053
        %v4055 = vpop.f32.mrb[0].mxu0
        %v4056 = vpop.f32.mrb[0].mxu0
        %v4057 = vadd.f32 0.0, %v4056
        %v4058 = vpop.f32.mrb[0].mxu0
        %4059 = vdwg.mxu0
        %v4060 = vrcp.pop %v4011
        %v4061 = vrcp.pop %v4014
        %v4062 = vmul.f32 %v4054, %v4060
        %v4063 = vmul.f32 %v4057, %v4061
        %4064 = vmatprep.subr.bf16.mxu0 0
        %4065 = vmatpush1.bf16.xpose.msra.mxu0 %v3945
        %4066 = vmatprep.subr.bf16.mxu0 0
        %4067 = vmatpush1.bf16.xpose.msra.mxu0 0
        %4068 = vmatprep.subr.bf16.mxu0 0
        %4069 = vmatpush1.bf16.xpose.msra.mxu0 0
        %4070 = vmatprep.subr.bf16.mxu0 0
        %4071 = vmatpush1.bf16.xpose.msra.mxu0 0
        %4072 = vmatprep.subr.bf16.mxu0 0
        %4073 = vmatpush1.bf16.xpose.msra.mxu0 0
        %4074 = vmatprep.subr.bf16.mxu0 0
        %4075 = vmatpush1.bf16.xpose.msra.mxu0 0
        %4076 = vmatprep.subr.bf16.mxu0 0
        %4077 = vmatpush1.bf16.xpose.msra.mxu0 0
        %4078 = vmatprep.subr.bf16.mxu0 0
        %4079 = vmatpush1.bf16.xpose.msra.mxu0 0
        %4080 = vmatprep.subr.bf16.mxu0 0
        %4081 = vmatpush1.bf16.xpose.msra.mxu0 0
        %4082 = vmatprep.subr.bf16.mxu0 0
        %4083 = vmatpush1.bf16.xpose.msra.mxu0 0
        %4084 = vmatprep.subr.bf16.mxu0 0
        %4085 = vmatpush1.bf16.xpose.msra.mxu0 0
        %4086 = vmatprep.subr.bf16.mxu0 0
        %4087 = vmatpush1.bf16.xpose.msra.mxu0 0
        %4088 = vmatprep.subr.bf16.mxu0 0
        %4089 = vmatpush1.bf16.xpose.msra.mxu0 0
        %4090 = vmatprep.subr.bf16.mxu0 0
        %4091 = vmatpush1.bf16.xpose.msra.mxu0 0
        %4092 = vmatprep.subr.bf16.mxu0 0
        %4093 = vmatpush1.bf16.xpose.msra.mxu0 0
        %4094 = vmatprep.subr.bf16.mxu0 0
        %4095 = vmatpush1.bf16.xpose.msra.mxu0 0
        %4096 = vmatprep.mubr.bf16.mxu0 0
        %4097 = vmatmul.mubr.bf16.gmra.mrb[0].mxu0 %v3941
        %v4098 = vpop.f32.mrb[0].mxu0
        %v4099 = vadd.f32 0.0, %v4098
        %v4100 = vpop.f32.mrb[0].mxu0
        %v4101 = vpop.f32.mrb[0].mxu0
        %v4102 = vadd.f32 0.0, %v4101
        %v4103 = vpop.f32.mrb[0].mxu0
        %4104 = vdwg.mxu0
        %v4105 = vmul.f32 %v4099, 0.25
        %v4106 = vmul.f32 %v4102, 0.25
        %v4107 = vadd.f32 %v4105, %v702
        %v4108 = vadd.f32 %v4106, %v703
        %v4109 = vsel %vm1826, %v4107, -inf
        %4110 = vmax.xlane.f32.xlu0 %v4109
        %v4111 = vpop.xlane.xlu0 %4110
        %v4112 = vsel %vm1826, %v4108, -inf
        %4113 = vmax.xlane.f32.xlu0 %v4112
        %v4114 = vpop.xlane.xlu0 %4113
        %v4115 = vsub.f32 %v4107, %v4111
        %v4116 = vsub.f32 %v4108, %v4114
        %v4117 = vmul.f32 %v4115, 1.442695
        %v4118 = vpow.pop %v4117
        %v4119 = vmul.f32 %v4116, 1.442695
        %v4120 = vpow.pop %v4119
        %v4121 = vsel %vm1826, %v4118, 0.0
        %4122 = vadd.xlane.f32.xlu0 %v4121
        %v4123 = vpop.xlane.xlu0 %4122
        %v4124 = vsel %vm1826, %v4120, 0.0
        %4125 = vadd.xlane.f32.xlu0 %v4124
        %v4126 = vpop.xlane.xlu0 %4125
        %v4127 = vpack.c.bf16 %v4120, %v4118
        %v4129 = vsel %vm1826, %v4127, 0
        %4131 = vmatprep.subr.bf16.mxu0 0
        %4132 = vmatpush1.bf16.msra.mxu0 %v3949
        %4133 = vmatprep.subr.bf16.mxu0 0
        %4134 = vmatpush1.bf16.msra.mxu0 0
        %4135 = vmatprep.subr.bf16.mxu0 0
        %4136 = vmatpush1.bf16.msra.mxu0 0
        %4137 = vmatprep.subr.bf16.mxu0 0
        %4138 = vmatpush1.bf16.msra.mxu0 0
        %4139 = vmatprep.subr.bf16.mxu0 0
        %4140 = vmatpush1.bf16.msra.mxu0 0
        %4141 = vmatprep.subr.bf16.mxu0 0
        %4142 = vmatpush1.bf16.msra.mxu0 0
        %4143 = vmatprep.subr.bf16.mxu0 0
        %4144 = vmatpush1.bf16.msra.mxu0 0
        %4145 = vmatprep.subr.bf16.mxu0 0
        %4146 = vmatpush1.bf16.msra.mxu0 0
        %4147 = vmatprep.subr.bf16.mxu0 0
        %4148 = vmatpush1.bf16.msra.mxu0 0
        %4149 = vmatprep.subr.bf16.mxu0 0
        %4150 = vmatpush1.bf16.msra.mxu0 0
        %4151 = vmatprep.subr.bf16.mxu0 0
        %4152 = vmatpush1.bf16.msra.mxu0 0
        %4153 = vmatprep.subr.bf16.mxu0 0
        %4154 = vmatpush1.bf16.msra.mxu0 0
        %4155 = vmatprep.subr.bf16.mxu0 0
        %4156 = vmatpush1.bf16.msra.mxu0 0
        %4157 = vmatprep.subr.bf16.mxu0 0
        %4158 = vmatpush1.bf16.msra.mxu0 0
        %4159 = vmatprep.subr.bf16.mxu0 0
        %4160 = vmatpush1.bf16.msra.mxu0 0
        %4161 = vmatprep.subr.bf16.mxu0 0
        %4162 = vmatpush1.bf16.msra.mxu0 0
        %4163 = vmatprep.mubr.bf16.mxu0 0
        %4164 = vmatmul.mubr.bf16.gmra.mrb[0].mxu0 %v4129
        %v4165 = vpop.f32.mrb[0].mxu0
        %v4166 = vadd.f32 0.0, %v4165
        %v4167 = vpop.f32.mrb[0].mxu0
        %v4168 = vpop.f32.mrb[0].mxu0
        %v4169 = vadd.f32 0.0, %v4168
        %v4170 = vpop.f32.mrb[0].mxu0
        %4171 = vdwg.mxu0
        %v4172 = vrcp.pop %v4123
        %v4173 = vrcp.pop %v4126
        %v4174 = vmul.f32 %v4166, %v4172
        %v4175 = vmul.f32 %v4169, %v4173
        %4176 = vmatprep.subr.bf16.mxu0 0
        %4177 = vmatpush1.bf16.xpose.msra.mxu0 %v3946
        %4178 = vmatprep.subr.bf16.mxu0 0
        %4179 = vmatpush1.bf16.xpose.msra.mxu0 0
        %4180 = vmatprep.subr.bf16.mxu0 0
        %4181 = vmatpush1.bf16.xpose.msra.mxu0 0
        %4182 = vmatprep.subr.bf16.mxu0 0
        %4183 = vmatpush1.bf16.xpose.msra.mxu0 0
        %4184 = vmatprep.subr.bf16.mxu0 0
        %4185 = vmatpush1.bf16.xpose.msra.mxu0 0
        %4186 = vmatprep.subr.bf16.mxu0 0
        %4187 = vmatpush1.bf16.xpose.msra.mxu0 0
        %4188 = vmatprep.subr.bf16.mxu0 0
        %4189 = vmatpush1.bf16.xpose.msra.mxu0 0
        %4190 = vmatprep.subr.bf16.mxu0 0
        %4191 = vmatpush1.bf16.xpose.msra.mxu0 0
        %4192 = vmatprep.subr.bf16.mxu0 0
        %4193 = vmatpush1.bf16.xpose.msra.mxu0 0
        %4194 = vmatprep.subr.bf16.mxu0 0
        %4195 = vmatpush1.bf16.xpose.msra.mxu0 0
        %4196 = vmatprep.subr.bf16.mxu0 0
        %4197 = vmatpush1.bf16.xpose.msra.mxu0 0
        %4198 = vmatprep.subr.bf16.mxu0 0
        %4199 = vmatpush1.bf16.xpose.msra.mxu0 0
        %4200 = vmatprep.subr.bf16.mxu0 0
        %4201 = vmatpush1.bf16.xpose.msra.mxu0 0
        %4202 = vmatprep.subr.bf16.mxu0 0
        %4203 = vmatpush1.bf16.xpose.msra.mxu0 0
        %4204 = vmatprep.subr.bf16.mxu0 0
        %4205 = vmatpush1.bf16.xpose.msra.mxu0 0
        %4206 = vmatprep.subr.bf16.mxu0 0
        %4207 = vmatpush1.bf16.xpose.msra.mxu0 0
        %4208 = vmatprep.mubr.bf16.mxu0 0
        %4209 = vmatmul.mubr.bf16.gmra.mrb[0].mxu0 %v3942
        %v4210 = vpop.f32.mrb[0].mxu0
        %v4211 = vadd.f32 0.0, %v4210
        %v4212 = vpop.f32.mrb[0].mxu0
        %v4213 = vpop.f32.mrb[0].mxu0
        %v4214 = vadd.f32 0.0, %v4213
        %v4215 = vpop.f32.mrb[0].mxu0
        %4216 = vdwg.mxu0
        %v4217 = vmul.f32 %v4211, 0.25
        %v4218 = vmul.f32 %v4214, 0.25
        %v4219 = vadd.f32 %v4217, %v702
        %v4220 = vadd.f32 %v4218, %v703
        %v4221 = vsel %vm1826, %v4219, -inf
        %4222 = vmax.xlane.f32.xlu0 %v4221
        %v4223 = vpop.xlane.xlu0 %4222
        %v4224 = vsel %vm1826, %v4220, -inf
        %4225 = vmax.xlane.f32.xlu0 %v4224
        %v4226 = vpop.xlane.xlu0 %4225
        %v4227 = vsub.f32 %v4219, %v4223
        %v4228 = vsub.f32 %v4220, %v4226
        %v4229 = vmul.f32 %v4227, 1.442695
        %v4230 = vpow.pop %v4229
        %v4231 = vmul.f32 %v4228, 1.442695
        %v4232 = vpow.pop %v4231
        %v4233 = vsel %vm1826, %v4230, 0.0
        %4234 = vadd.xlane.f32.xlu0 %v4233
        %v4235 = vpop.xlane.xlu0 %4234
        %v4236 = vsel %vm1826, %v4232, 0.0
        %4237 = vadd.xlane.f32.xlu0 %v4236
        %v4238 = vpop.xlane.xlu0 %4237
        %v4239 = vpack.c.bf16 %v4232, %v4230
        %v4241 = vsel %vm1826, %v4239, 0
        %4243 = vmatprep.subr.bf16.mxu0 0
        %4244 = vmatpush1.bf16.msra.mxu0 %v3950
        %4245 = vmatprep.subr.bf16.mxu0 0
        %4246 = vmatpush1.bf16.msra.mxu0 0
        %4247 = vmatprep.subr.bf16.mxu0 0
        %4248 = vmatpush1.bf16.msra.mxu0 0
        %4249 = vmatprep.subr.bf16.mxu0 0
        %4250 = vmatpush1.bf16.msra.mxu0 0
        %4251 = vmatprep.subr.bf16.mxu0 0
        %4252 = vmatpush1.bf16.msra.mxu0 0
        %4253 = vmatprep.subr.bf16.mxu0 0
        %4254 = vmatpush1.bf16.msra.mxu0 0
        %4255 = vmatprep.subr.bf16.mxu0 0
        %4256 = vmatpush1.bf16.msra.mxu0 0
        %4257 = vmatprep.subr.bf16.mxu0 0
        %4258 = vmatpush1.bf16.msra.mxu0 0
        %4259 = vmatprep.subr.bf16.mxu0 0
        %4260 = vmatpush1.bf16.msra.mxu0 0
        %4261 = vmatprep.subr.bf16.mxu0 0
        %4262 = vmatpush1.bf16.msra.mxu0 0
        %4263 = vmatprep.subr.bf16.mxu0 0
        %4264 = vmatpush1.bf16.msra.mxu0 0
        %4265 = vmatprep.subr.bf16.mxu0 0
        %4266 = vmatpush1.bf16.msra.mxu0 0
        %4267 = vmatprep.subr.bf16.mxu0 0
        %4268 = vmatpush1.bf16.msra.mxu0 0
        %4269 = vmatprep.subr.bf16.mxu0 0
        %4270 = vmatpush1.bf16.msra.mxu0 0
        %4271 = vmatprep.subr.bf16.mxu0 0
        %4272 = vmatpush1.bf16.msra.mxu0 0
        %4273 = vmatprep.subr.bf16.mxu0 0
        %4274 = vmatpush1.bf16.msra.mxu0 0
        %4275 = vmatprep.mubr.bf16.mxu0 0
        %4276 = vmatmul.mubr.bf16.gmra.mrb[0].mxu0 %v4241
        %v4277 = vpop.f32.mrb[0].mxu0
        %v4278 = vadd.f32 0.0, %v4277
        %v4279 = vpop.f32.mrb[0].mxu0
        %v4280 = vpop.f32.mrb[0].mxu0
        %v4281 = vadd.f32 0.0, %v4280
        %v4282 = vpop.f32.mrb[0].mxu0
        %4283 = vdwg.mxu0
        %v4284 = vrcp.pop %v4235
        %v4285 = vrcp.pop %v4238
        %v4286 = vmul.f32 %v4278, %v4284
        %v4287 = vmul.f32 %v4281, %v4285
        %4288 = vmatprep.subr.bf16.mxu0 0
        %4289 = vmatpush1.bf16.xpose.msra.mxu0 %v3947
        %4290 = vmatprep.subr.bf16.mxu0 0
        %4291 = vmatpush1.bf16.xpose.msra.mxu0 0
        %4292 = vmatprep.subr.bf16.mxu0 0
        %4293 = vmatpush1.bf16.xpose.msra.mxu0 0
        %4294 = vmatprep.subr.bf16.mxu0 0
        %4295 = vmatpush1.bf16.xpose.msra.mxu0 0
        %4296 = vmatprep.subr.bf16.mxu0 0
        %4297 = vmatpush1.bf16.xpose.msra.mxu0 0
        %4298 = vmatprep.subr.bf16.mxu0 0
        %4299 = vmatpush1.bf16.xpose.msra.mxu0 0
        %4300 = vmatprep.subr.bf16.mxu0 0
        %4301 = vmatpush1.bf16.xpose.msra.mxu0 0
        %4302 = vmatprep.subr.bf16.mxu0 0
        %4303 = vmatpush1.bf16.xpose.msra.mxu0 0
        %4304 = vmatprep.subr.bf16.mxu0 0
        %4305 = vmatpush1.bf16.xpose.msra.mxu0 0
        %4306 = vmatprep.subr.bf16.mxu0 0
        %4307 = vmatpush1.bf16.xpose.msra.mxu0 0
        %4308 = vmatprep.subr.bf16.mxu0 0
        %4309 = vmatpush1.bf16.xpose.msra.mxu0 0
        %4310 = vmatprep.subr.bf16.mxu0 0
        %4311 = vmatpush1.bf16.xpose.msra.mxu0 0
        %4312 = vmatprep.subr.bf16.mxu0 0
        %4313 = vmatpush1.bf16.xpose.msra.mxu0 0
        %4314 = vmatprep.subr.bf16.mxu0 0
        %4315 = vmatpush1.bf16.xpose.msra.mxu0 0
        %4316 = vmatprep.subr.bf16.mxu0 0
        %4317 = vmatpush1.bf16.xpose.msra.mxu0 0
        %4318 = vmatprep.subr.bf16.mxu0 0
        %4319 = vmatpush1.bf16.xpose.msra.mxu0 0
        %4320 = vmatprep.mubr.bf16.mxu0 0
        %4321 = vmatmul.mubr.bf16.gmra.mrb[0].mxu0 %v3943
        %v4322 = vpop.f32.mrb[0].mxu0
        %v4323 = vadd.f32 0.0, %v4322
        %v4324 = vpop.f32.mrb[0].mxu0
        %v4325 = vpop.f32.mrb[0].mxu0
        %v4326 = vadd.f32 0.0, %v4325
        %v4327 = vpop.f32.mrb[0].mxu0
        %4328 = vdwg.mxu0
        %v4329 = vmul.f32 %v4323, 0.25
        %v4330 = vmul.f32 %v4326, 0.25
        %v4331 = vadd.f32 %v4329, %v702
        %v4332 = vadd.f32 %v4330, %v703
        %v4333 = vsel %vm1826, %v4331, -inf
        %4334 = vmax.xlane.f32.xlu0 %v4333
        %v4335 = vpop.xlane.xlu0 %4334
        %v4336 = vsel %vm1826, %v4332, -inf
        %4337 = vmax.xlane.f32.xlu0 %v4336
        %v4338 = vpop.xlane.xlu0 %4337
        %v4339 = vsub.f32 %v4331, %v4335
        %v4340 = vsub.f32 %v4332, %v4338
        %v4341 = vmul.f32 %v4339, 1.442695
        %v4342 = vpow.pop %v4341
        %v4343 = vmul.f32 %v4340, 1.442695
        %v4344 = vpow.pop %v4343
        %v4345 = vsel %vm1826, %v4342, 0.0
        %4346 = vadd.xlane.f32.xlu0 %v4345
        %v4347 = vpop.xlane.xlu0 %4346
        %v4348 = vsel %vm1826, %v4344, 0.0
        %4349 = vadd.xlane.f32.xlu0 %v4348
        %v4350 = vpop.xlane.xlu0 %4349
        %v4351 = vpack.c.bf16 %v4344, %v4342
        %v4353 = vsel %vm1826, %v4351, 0
        %4355 = vmatprep.subr.bf16.mxu0 0
        %4356 = vmatpush1.bf16.msra.mxu0 %v3951
        %4357 = vmatprep.subr.bf16.mxu0 0
        %4358 = vmatpush1.bf16.msra.mxu0 0
        %4359 = vmatprep.subr.bf16.mxu0 0
        %4360 = vmatpush1.bf16.msra.mxu0 0
        %4361 = vmatprep.subr.bf16.mxu0 0
        %4362 = vmatpush1.bf16.msra.mxu0 0
        %4363 = vmatprep.subr.bf16.mxu0 0
        %4364 = vmatpush1.bf16.msra.mxu0 0
        %4365 = vmatprep.subr.bf16.mxu0 0
        %4366 = vmatpush1.bf16.msra.mxu0 0
        %4367 = vmatprep.subr.bf16.mxu0 0
        %4368 = vmatpush1.bf16.msra.mxu0 0
        %4369 = vmatprep.subr.bf16.mxu0 0
        %4370 = vmatpush1.bf16.msra.mxu0 0
        %4371 = vmatprep.subr.bf16.mxu0 0
        %4372 = vmatpush1.bf16.msra.mxu0 0
        %4373 = vmatprep.subr.bf16.mxu0 0
        %4374 = vmatpush1.bf16.msra.mxu0 0
        %4375 = vmatprep.subr.bf16.mxu0 0
        %4376 = vmatpush1.bf16.msra.mxu0 0
        %4377 = vmatprep.subr.bf16.mxu0 0
        %4378 = vmatpush1.bf16.msra.mxu0 0
        %4379 = vmatprep.subr.bf16.mxu0 0
        %4380 = vmatpush1.bf16.msra.mxu0 0
        %4381 = vmatprep.subr.bf16.mxu0 0
        %4382 = vmatpush1.bf16.msra.mxu0 0
        %4383 = vmatprep.subr.bf16.mxu0 0
        %4384 = vmatpush1.bf16.msra.mxu0 0
        %4385 = vmatprep.subr.bf16.mxu0 0
        %4386 = vmatpush1.bf16.msra.mxu0 0
        %4387 = vmatprep.mubr.bf16.mxu0 0
        %4388 = vmatmul.mubr.bf16.gmra.mrb[0].mxu0 %v4353
        %v4389 = vpop.f32.mrb[0].mxu0
        %v4390 = vadd.f32 0.0, %v4389
        %v4391 = vpop.f32.mrb[0].mxu0
        %v4392 = vpop.f32.mrb[0].mxu0
        %v4393 = vadd.f32 0.0, %v4392
        %v4394 = vpop.f32.mrb[0].mxu0
        %4395 = vdwg.mxu0
        %v4396 = vrcp.pop %v4347
        %v4397 = vrcp.pop %v4350
        %v4398 = vmul.f32 %v4390, %v4396
        %v4399 = vmul.f32 %v4393, %v4397
        %v4400 = vpack.c.bf16 %v4063, %v4062
        %v4401 = vpack.c.bf16 %v4175, %v4174
        %v4402 = vpack.c.bf16 %v4287, %v4286
        %v4403 = vpack.c.bf16 %v4399, %v4398
        %s4404 = scalar_lea.vmem [#allocation5], 256
        %v4405 = vld [vmem:[%s4404] sm:$0xf]
        %v4406 = vld [vmem:[%s4404 + $0x4] sm:$0xf]
        %v4407 = vld [vmem:[%s4404 + $0x8] sm:$0xf]
        %v4408 = vld [vmem:[%s4404 + $0xc] sm:$0xf]
        %v4409 = vld [vmem:[%s4404 + $0x10] sm:$0xf]
        %v4410 = vld [vmem:[%s4404 + $0x14] sm:$0xf]
        %v4411 = vld [vmem:[%s4404 + $0x18] sm:$0xf]
        %v4412 = vld [vmem:[%s4404 + $0x1c] sm:$0xf]
        %v4413 = vld [vmem:[%s4404 + $0x20] sm:$0xf]
        %v4414 = vld [vmem:[%s4404 + $0x24] sm:$0xf]
        %v4415 = vld [vmem:[%s4404 + $0x28] sm:$0xf]
        %v4416 = vld [vmem:[%s4404 + $0x2c] sm:$0xf]
        %v4417 = vld [vmem:[%s4404 + $0x30] sm:$0xf]
        %v4418 = vld [vmem:[%s4404 + $0x34] sm:$0xf]
        %v4419 = vld [vmem:[%s4404 + $0x38] sm:$0xf]
        %v4420 = vld [vmem:[%s4404 + $0x3c] sm:$0xf]
        %v4421 = vld [vmem:[%s4404 + $0x40] sm:$0xf]
        %v4422 = vld [vmem:[%s4404 + $0x44] sm:$0xf]
        %v4423 = vld [vmem:[%s4404 + $0x48] sm:$0xf]
        %v4424 = vld [vmem:[%s4404 + $0x4c] sm:$0xf]
        %v4425 = vld [vmem:[%s4404 + $0x50] sm:$0xf]
        %v4426 = vld [vmem:[%s4404 + $0x54] sm:$0xf]
        %v4427 = vld [vmem:[%s4404 + $0x58] sm:$0xf]
        %v4428 = vld [vmem:[%s4404 + $0x5c] sm:$0xf]
        %v4429 = vld [vmem:[%s4404 + $0x60] sm:$0xf]
        %v4430 = vld [vmem:[%s4404 + $0x64] sm:$0xf]
        %v4431 = vld [vmem:[%s4404 + $0x68] sm:$0xf]
        %v4432 = vld [vmem:[%s4404 + $0x6c] sm:$0xf]
        %v4433 = vld [vmem:[%s4404 + $0x70] sm:$0xf]
        %v4434 = vld [vmem:[%s4404 + $0x74] sm:$0xf]
        %v4435 = vld [vmem:[%s4404 + $0x78] sm:$0xf]
        %v4436 = vld [vmem:[%s4404 + $0x7c] sm:$0xf]
        %v4437 = vld [vmem:[%s4404 + $0x80] sm:$0xf]
        %v4438 = vld [vmem:[%s4404 + $0x84] sm:$0xf]
        %v4439 = vld [vmem:[%s4404 + $0x88] sm:$0xf]
        %v4440 = vld [vmem:[%s4404 + $0x8c] sm:$0xf]
        %v4441 = vld [vmem:[%s4404 + $0x90] sm:$0xf]
        %v4442 = vld [vmem:[%s4404 + $0x94] sm:$0xf]
        %v4443 = vld [vmem:[%s4404 + $0x98] sm:$0xf]
        %v4444 = vld [vmem:[%s4404 + $0x9c] sm:$0xf]
        %v4445 = vld [vmem:[%s4404 + $0xa0] sm:$0xf]
        %v4446 = vld [vmem:[%s4404 + $0xa4] sm:$0xf]
        %v4447 = vld [vmem:[%s4404 + $0xa8] sm:$0xf]
        %v4448 = vld [vmem:[%s4404 + $0xac] sm:$0xf]
        %v4449 = vld [vmem:[%s4404 + $0xb0] sm:$0xf]
        %v4450 = vld [vmem:[%s4404 + $0xb4] sm:$0xf]
        %v4451 = vld [vmem:[%s4404 + $0xb8] sm:$0xf]
        %v4452 = vld [vmem:[%s4404 + $0xbc] sm:$0xf]
        %v4453 = vld [vmem:[%s4404 + $0xc0] sm:$0xf]
        %v4454 = vld [vmem:[%s4404 + $0xc4] sm:$0xf]
        %v4455 = vld [vmem:[%s4404 + $0xc8] sm:$0xf]
        %v4456 = vld [vmem:[%s4404 + $0xcc] sm:$0xf]
        %v4457 = vld [vmem:[%s4404 + $0xd0] sm:$0xf]
        %v4458 = vld [vmem:[%s4404 + $0xd4] sm:$0xf]
        %v4459 = vld [vmem:[%s4404 + $0xd8] sm:$0xf]
        %v4460 = vld [vmem:[%s4404 + $0xdc] sm:$0xf]
        %v4461 = vld [vmem:[%s4404 + $0xe0] sm:$0xf]
        %v4462 = vld [vmem:[%s4404 + $0xe4] sm:$0xf]
        %v4463 = vld [vmem:[%s4404 + $0xe8] sm:$0xf]
        %v4464 = vld [vmem:[%s4404 + $0xec] sm:$0xf]
        %v4465 = vld [vmem:[%s4404 + $0xf0] sm:$0xf]
        %v4466 = vld [vmem:[%s4404 + $0xf4] sm:$0xf]
        %v4467 = vld [vmem:[%s4404 + $0xf8] sm:$0xf]
        %v4468 = vld [vmem:[%s4404 + $0xfc] sm:$0xf]
        %v4533 = vunpack.c.l.b16 %v4405
        %v4534 = vunpack.c.l.b16 %v4406
        %v4535 = vunpack.c.l.b16 %v4407
        %v4536 = vunpack.c.l.b16 %v4408
        %v4537 = vunpack.c.l.b16 %v4409
        %v4538 = vunpack.c.l.b16 %v4410
        %v4539 = vunpack.c.l.b16 %v4411
        %v4540 = vunpack.c.l.b16 %v4412
        %v4541 = vunpack.c.l.b16 %v4413
        %v4542 = vunpack.c.l.b16 %v4414
        %v4543 = vunpack.c.l.b16 %v4415
        %v4544 = vunpack.c.l.b16 %v4416
        %v4545 = vunpack.c.l.b16 %v4417
        %v4546 = vunpack.c.l.b16 %v4418
        %v4547 = vunpack.c.l.b16 %v4419
        %v4548 = vunpack.c.l.b16 %v4420
        %v4549 = vunpack.c.l.b16 %v4421
        %v4550 = vunpack.c.l.b16 %v4422
        %v4551 = vunpack.c.l.b16 %v4423
        %v4552 = vunpack.c.l.b16 %v4424
        %v4553 = vunpack.c.l.b16 %v4425
        %v4554 = vunpack.c.l.b16 %v4426
        %v4555 = vunpack.c.l.b16 %v4427
        %v4556 = vunpack.c.l.b16 %v4428
        %v4557 = vunpack.c.l.b16 %v4429
        %v4558 = vunpack.c.l.b16 %v4430
        %v4559 = vunpack.c.l.b16 %v4431
        %v4560 = vunpack.c.l.b16 %v4432
        %v4561 = vunpack.c.l.b16 %v4433
        %v4562 = vunpack.c.l.b16 %v4434
        %v4563 = vunpack.c.l.b16 %v4435
        %v4564 = vunpack.c.l.b16 %v4436
        %v4565 = vunpack.c.l.b16 %v4437
        %v4566 = vunpack.c.l.b16 %v4438
        %v4567 = vunpack.c.l.b16 %v4439
        %v4568 = vunpack.c.l.b16 %v4440
        %v4569 = vunpack.c.l.b16 %v4441
        %v4570 = vunpack.c.l.b16 %v4442
        %v4571 = vunpack.c.l.b16 %v4443
        %v4572 = vunpack.c.l.b16 %v4444
        %v4573 = vunpack.c.l.b16 %v4445
        %v4574 = vunpack.c.l.b16 %v4446
        %v4575 = vunpack.c.l.b16 %v4447
        %v4576 = vunpack.c.l.b16 %v4448
        %v4577 = vunpack.c.l.b16 %v4449
        %v4578 = vunpack.c.l.b16 %v4450
        %v4579 = vunpack.c.l.b16 %v4451
        %v4580 = vunpack.c.l.b16 %v4452
        %v4581 = vunpack.c.l.b16 %v4453
        %v4582 = vunpack.c.l.b16 %v4454
        %v4583 = vunpack.c.l.b16 %v4455
        %v4584 = vunpack.c.l.b16 %v4456
        %v4585 = vunpack.c.l.b16 %v4457
        %v4586 = vunpack.c.l.b16 %v4458
        %v4587 = vunpack.c.l.b16 %v4459
        %v4588 = vunpack.c.l.b16 %v4460
        %v4589 = vunpack.c.l.b16 %v4461
        %v4590 = vunpack.c.l.b16 %v4462
        %v4591 = vunpack.c.l.b16 %v4463
        %v4592 = vunpack.c.l.b16 %v4464
        %v4593 = vunpack.c.l.b16 %v4465
        %v4594 = vunpack.c.l.b16 %v4466
        %v4595 = vunpack.c.l.b16 %v4467
        %v4596 = vunpack.c.l.b16 %v4468
        %v4597 = vpack.c.b16 %v4534, %v4533
        %v4598 = vpack.c.b16 %v4536, %v4535
        %v4599 = vpack.c.b16 %v4538, %v4537
        %v4600 = vpack.c.b16 %v4540, %v4539
        %v4601 = vpack.c.b16 %v4542, %v4541
        %v4602 = vpack.c.b16 %v4544, %v4543
        %v4603 = vpack.c.b16 %v4546, %v4545
        %v4604 = vpack.c.b16 %v4548, %v4547
        %v4605 = vpack.c.b16 %v4550, %v4549
        %v4606 = vpack.c.b16 %v4552, %v4551
        %v4607 = vpack.c.b16 %v4554, %v4553
        %v4608 = vpack.c.b16 %v4556, %v4555
        %v4609 = vpack.c.b16 %v4558, %v4557
        %v4610 = vpack.c.b16 %v4560, %v4559
        %v4611 = vpack.c.b16 %v4562, %v4561
        %v4612 = vpack.c.b16 %v4564, %v4563
        %v4613 = vpack.c.b16 %v4566, %v4565
        %v4614 = vpack.c.b16 %v4568, %v4567
        %v4615 = vpack.c.b16 %v4570, %v4569
        %v4616 = vpack.c.b16 %v4572, %v4571
        %v4617 = vpack.c.b16 %v4574, %v4573
        %v4618 = vpack.c.b16 %v4576, %v4575
        %v4619 = vpack.c.b16 %v4578, %v4577
        %v4620 = vpack.c.b16 %v4580, %v4579
        %v4621 = vpack.c.b16 %v4582, %v4581
        %v4622 = vpack.c.b16 %v4584, %v4583
        %v4623 = vpack.c.b16 %v4586, %v4585
        %v4624 = vpack.c.b16 %v4588, %v4587
        %v4625 = vpack.c.b16 %v4590, %v4589
        %v4626 = vpack.c.b16 %v4592, %v4591
        %v4627 = vpack.c.b16 %v4594, %v4593
        %v4628 = vpack.c.b16 %v4596, %v4595
        %4661 = vmatprep.subr.bf16.mxu0 0
        %4662 = vmatpush1.bf16.msra.mxu0 %v4597
        %4663 = vmatprep.subr.bf16.mxu0 0
        %4664 = vmatpush1.bf16.msra.mxu0 %v4598
        %4665 = vmatprep.subr.bf16.mxu0 0
        %4666 = vmatpush1.bf16.msra.mxu0 %v4599
        %4667 = vmatprep.subr.bf16.mxu0 0
        %4668 = vmatpush1.bf16.msra.mxu0 %v4600
        %4669 = vmatprep.subr.bf16.mxu0 0
        %4670 = vmatpush1.bf16.msra.mxu0 %v4601
        %4671 = vmatprep.subr.bf16.mxu0 0
        %4672 = vmatpush1.bf16.msra.mxu0 %v4602
        %4673 = vmatprep.subr.bf16.mxu0 0
        %4674 = vmatpush1.bf16.msra.mxu0 %v4603
        %4675 = vmatprep.subr.bf16.mxu0 0
        %4676 = vmatpush1.bf16.msra.mxu0 %v4604
        %4677 = vmatprep.subr.bf16.mxu0 0
        %4678 = vmatpush1.bf16.msra.mxu0 %v4605
        %4679 = vmatprep.subr.bf16.mxu0 0
        %4680 = vmatpush1.bf16.msra.mxu0 %v4606
        %4681 = vmatprep.subr.bf16.mxu0 0
        %4682 = vmatpush1.bf16.msra.mxu0 %v4607
        %4683 = vmatprep.subr.bf16.mxu0 0
        %4684 = vmatpush1.bf16.msra.mxu0 %v4608
        %4685 = vmatprep.subr.bf16.mxu0 0
        %4686 = vmatpush1.bf16.msra.mxu0 %v4609
        %4687 = vmatprep.subr.bf16.mxu0 0
        %4688 = vmatpush1.bf16.msra.mxu0 %v4610
        %4689 = vmatprep.subr.bf16.mxu0 0
        %4690 = vmatpush1.bf16.msra.mxu0 %v4611
        %4691 = vmatprep.subr.bf16.mxu0 0
        %4692 = vmatpush1.bf16.msra.mxu0 %v4612
        %4693 = vmatprep.mubr.bf16.mxu0 %v4401
        %4694 = vmatmul.mubr.bf16.gmra.mrb[0].mxu0 %v4400
        %v4695 = vpop.f32.mrb[0].mxu0
        %v4696 = vadd.f32 0.0, %v4695
        %v4697 = vpop.f32.mrb[0].mxu0
        %v4698 = vpop.f32.mrb[0].mxu0
        %v4699 = vadd.f32 0.0, %v4698
        %v4700 = vpop.f32.mrb[0].mxu0
        %4701 = vdwg.mxu0
        %4702 = vmatprep.subr.bf16.mxu0 0
        %4703 = vmatpush1.bf16.msra.mxu0 %v4613
        %4704 = vmatprep.subr.bf16.mxu0 0
        %4705 = vmatpush1.bf16.msra.mxu0 %v4614
        %4706 = vmatprep.subr.bf16.mxu0 0
        %4707 = vmatpush1.bf16.msra.mxu0 %v4615
        %4708 = vmatprep.subr.bf16.mxu0 0
        %4709 = vmatpush1.bf16.msra.mxu0 %v4616
        %4710 = vmatprep.subr.bf16.mxu0 0
        %4711 = vmatpush1.bf16.msra.mxu0 %v4617
        %4712 = vmatprep.subr.bf16.mxu0 0
        %4713 = vmatpush1.bf16.msra.mxu0 %v4618
        %4714 = vmatprep.subr.bf16.mxu0 0
        %4715 = vmatpush1.bf16.msra.mxu0 %v4619
        %4716 = vmatprep.subr.bf16.mxu0 0
        %4717 = vmatpush1.bf16.msra.mxu0 %v4620
        %4718 = vmatprep.subr.bf16.mxu0 0
        %4719 = vmatpush1.bf16.msra.mxu0 %v4621
        %4720 = vmatprep.subr.bf16.mxu0 0
        %4721 = vmatpush1.bf16.msra.mxu0 %v4622
        %4722 = vmatprep.subr.bf16.mxu0 0
        %4723 = vmatpush1.bf16.msra.mxu0 %v4623
        %4724 = vmatprep.subr.bf16.mxu0 0
        %4725 = vmatpush1.bf16.msra.mxu0 %v4624
        %4726 = vmatprep.subr.bf16.mxu0 0
        %4727 = vmatpush1.bf16.msra.mxu0 %v4625
        %4728 = vmatprep.subr.bf16.mxu0 0
        %4729 = vmatpush1.bf16.msra.mxu0 %v4626
        %4730 = vmatprep.subr.bf16.mxu0 0
        %4731 = vmatpush1.bf16.msra.mxu0 %v4627
        %4732 = vmatprep.subr.bf16.mxu0 0
        %4733 = vmatpush1.bf16.msra.mxu0 %v4628
        %4734 = vmatprep.mubr.bf16.mxu0 %v4403
        %4735 = vmatmul.mubr.bf16.gmra.mrb[0].mxu0 %v4402
        %v4736 = vpop.f32.mrb[0].mxu0
        %v4737 = vadd.f32 %v4696, %v4736
        %v4738 = vpop.f32.mrb[0].mxu0
        %v4739 = vpop.f32.mrb[0].mxu0
        %v4740 = vadd.f32 %v4699, %v4739
        %v4741 = vpop.f32.mrb[0].mxu0
        %4742 = vdwg.mxu0
        %v4743 = vadd.f32 %v2993, %v4737
        %v4744 = vadd.f32 %v2994, %v4740
        %s4745 = scalar_lea.vmem %s9, 1
        %v4746 = vld [vmem:[%s4745] sm:$0x1]
        %v4748 = vlaneseq
        %v4749 = vshrl.u32 %v4748, 7
        %v4750 = vsub.s32 0, %v4749
        %v4751 = vrot.slane %v4746, %v4750
        %v4753 = vadd.f32 %v4743, %v4751
        %v4754 = vadd.f32 %v4744, %v4751
        %s4755 = scalar_lea.vmem %s10, 1
        %v4756 = vld [vmem:[%s4755] sm:$0x1]
        %s4757 = scalar_lea.vmem %s11, 1
        %v4758 = vld [vmem:[%s4757] sm:$0x1]
        %4759 = vadd.xlane.f32.xlu0 %v4753
        %v4760 = vpop.xlane.xlu0 %4759
        %4761 = vadd.xlane.f32.xlu0 %v4754
        %v4762 = vpop.xlane.xlu0 %4761
        %v4763 = vmul.f32 %v4760, 0.015625
        %v4764 = vmul.f32 %v4762, 0.015625
        %v4765 = vsub.f32 %v4753, %v4763
        %v4766 = vsub.f32 %v4754, %v4764
        %v4767 = vmul.f32 %v4765, %v696
        %v4768 = vmul.f32 %v4766, %v696
        %v4769 = vmul.f32 %v4767, %v4767
        %v4770 = vmul.f32 %v4768, %v4768
        %4771 = vadd.xlane.f32.xlu0 %v4769
        %v4772 = vpop.xlane.xlu0 %4771
        %4773 = vadd.xlane.f32.xlu0 %v4770
        %v4774 = vpop.xlane.xlu0 %4773
        %v4775 = vmul.f32 %v4772, 0.015625
        %v4776 = vmul.f32 %v4774, 0.015625
        %v4777 = vadd.f32 %v4775, 1e-05
        %v4778 = vadd.f32 %v4776, 1e-05
        %v4779 = vrsqrt.pop %v4777
        %v4780 = vrsqrt.pop %v4778
        %v4781 = vmul.f32 %v4767, %v4779
        %v4782 = vmul.f32 %v4768, %v4780
        %v4784 = vlaneseq
        %v4785 = vshrl.u32 %v4784, 7
        %v4786 = vsub.s32 0, %v4785
        %v4787 = vrot.slane %v4756, %v4786
        %v4789 = vmul.f32 %v4781, %v4787
        %v4790 = vmul.f32 %v4782, %v4787
        %v4792 = vlaneseq
        %v4793 = vshrl.u32 %v4792, 7
        %v4794 = vsub.s32 0, %v4793
        %v4795 = vrot.slane %v4758, %v4794
        %v4797 = vadd.f32 %v4789, %v4795
        %v4798 = vadd.f32 %v4790, %v4795
        %v4799 = vpack.c.bf16 %v4798, %v4797
        %s4800 = scalar_lea.vmem [#allocation7], 128
        %v4801 = vld [vmem:[%s4800] sm:$0xff]
        %v4802 = vld [vmem:[%s4800 + $0x8] sm:$0xff]
        %v4803 = vld [vmem:[%s4800 + $0x10] sm:$0xff]
        %v4804 = vld [vmem:[%s4800 + $0x18] sm:$0xff]
        %v4805 = vld [vmem:[%s4800 + $0x20] sm:$0xff]
        %v4806 = vld [vmem:[%s4800 + $0x28] sm:$0xff]
        %v4807 = vld [vmem:[%s4800 + $0x30] sm:$0xff]
        %v4808 = vld [vmem:[%s4800 + $0x38] sm:$0xff]
        %v4809 = vld [vmem:[%s4800 + $0x40] sm:$0xff]
        %v4810 = vld [vmem:[%s4800 + $0x48] sm:$0xff]
        %v4811 = vld [vmem:[%s4800 + $0x50] sm:$0xff]
        %v4812 = vld [vmem:[%s4800 + $0x58] sm:$0xff]
        %v4813 = vld [vmem:[%s4800 + $0x60] sm:$0xff]
        %v4814 = vld [vmem:[%s4800 + $0x68] sm:$0xff]
        %v4815 = vld [vmem:[%s4800 + $0x70] sm:$0xff]
        %v4816 = vld [vmem:[%s4800 + $0x78] sm:$0xff]
        %s4817 = scalar_lea.vmem %s13, 2
        %v4818 = vld [vmem:[%s4817] sm:$0x3]
        %v4820 = vlaneseq
        %v4821 = vshrl.u32 %v4820, 7
        %v4822 = vsub.s32 0, %v4821
        %v4823 = vrot.slane %v4818, %v4822
        %v4824 = vlaneseq
        %v4825 = vshrl.u32 %v4824, 7
        %v4826 = vsub.s32 1, %v4825
        %v4827 = vrot.slane %v4818, %v4826
        %v4846 = vunpack.c.l.b16 %v4801
        %v4847 = vunpack.c.h.b16 %v4801
        %v4848 = vunpack.c.l.b16 %v4802
        %v4849 = vunpack.c.h.b16 %v4802
        %v4850 = vunpack.c.l.b16 %v4803
        %v4851 = vunpack.c.h.b16 %v4803
        %v4852 = vunpack.c.l.b16 %v4804
        %v4853 = vunpack.c.h.b16 %v4804
        %v4854 = vunpack.c.l.b16 %v4805
        %v4855 = vunpack.c.h.b16 %v4805
        %v4856 = vunpack.c.l.b16 %v4806
        %v4857 = vunpack.c.h.b16 %v4806
        %v4858 = vunpack.c.l.b16 %v4807
        %v4859 = vunpack.c.h.b16 %v4807
        %v4860 = vunpack.c.l.b16 %v4808
        %v4861 = vunpack.c.h.b16 %v4808
        %v4862 = vunpack.c.l.b16 %v4809
        %v4863 = vunpack.c.h.b16 %v4809
        %v4864 = vunpack.c.l.b16 %v4810
        %v4865 = vunpack.c.h.b16 %v4810
        %v4866 = vunpack.c.l.b16 %v4811
        %v4867 = vunpack.c.h.b16 %v4811
        %v4868 = vunpack.c.l.b16 %v4812
        %v4869 = vunpack.c.h.b16 %v4812
        %v4870 = vunpack.c.l.b16 %v4813
        %v4871 = vunpack.c.h.b16 %v4813
        %v4872 = vunpack.c.l.b16 %v4814
        %v4873 = vunpack.c.h.b16 %v4814
        %v4874 = vunpack.c.l.b16 %v4815
        %v4875 = vunpack.c.h.b16 %v4815
        %v4876 = vunpack.c.l.b16 %v4816
        %v4877 = vunpack.c.h.b16 %v4816
        %v4878 = vpack.c.b16 %v4848, %v4846
        %v4879 = vpack.c.b16 %v4849, %v4847
        %v4880 = vpack.c.b16 %v4852, %v4850
        %v4881 = vpack.c.b16 %v4853, %v4851
        %v4882 = vpack.c.b16 %v4856, %v4854
        %v4883 = vpack.c.b16 %v4857, %v4855
        %v4884 = vpack.c.b16 %v4860, %v4858
        %v4885 = vpack.c.b16 %v4861, %v4859
        %v4886 = vpack.c.b16 %v4864, %v4862
        %v4887 = vpack.c.b16 %v4865, %v4863
        %v4888 = vpack.c.b16 %v4868, %v4866
        %v4889 = vpack.c.b16 %v4869, %v4867
        %v4890 = vpack.c.b16 %v4872, %v4870
        %v4891 = vpack.c.b16 %v4873, %v4871
        %v4892 = vpack.c.b16 %v4876, %v4874
        %v4893 = vpack.c.b16 %v4877, %v4875
        %4910 = vmatprep.subr.bf16.mxu0 %v4879
        %4911 = vmatpush1.bf16.msra.mxu0 %v4878
        %4912 = vmatprep.subr.bf16.mxu0 %v4881
        %4913 = vmatpush1.bf16.msra.mxu0 %v4880
        %4914 = vmatprep.subr.bf16.mxu0 %v4883
        %4915 = vmatpush1.bf16.msra.mxu0 %v4882
        %4916 = vmatprep.subr.bf16.mxu0 %v4885
        %4917 = vmatpush1.bf16.msra.mxu0 %v4884
        %4918 = vmatprep.subr.bf16.mxu0 %v4887
        %4919 = vmatpush1.bf16.msra.mxu0 %v4886
        %4920 = vmatprep.subr.bf16.mxu0 %v4889
        %4921 = vmatpush1.bf16.msra.mxu0 %v4888
        %4922 = vmatprep.subr.bf16.mxu0 %v4891
        %4923 = vmatpush1.bf16.msra.mxu0 %v4890
        %4924 = vmatprep.subr.bf16.mxu0 %v4893
        %4925 = vmatpush1.bf16.msra.mxu0 %v4892
        %4926 = vmatprep.subr.bf16.mxu0 0
        %4927 = vmatpush1.bf16.msra.mxu0 0
        %4928 = vmatprep.subr.bf16.mxu0 0
        %4929 = vmatpush1.bf16.msra.mxu0 0
        %4930 = vmatprep.subr.bf16.mxu0 0
        %4931 = vmatpush1.bf16.msra.mxu0 0
        %4932 = vmatprep.subr.bf16.mxu0 0
        %4933 = vmatpush1.bf16.msra.mxu0 0
        %4934 = vmatprep.subr.bf16.mxu0 0
        %4935 = vmatpush1.bf16.msra.mxu0 0
        %4936 = vmatprep.subr.bf16.mxu0 0
        %4937 = vmatpush1.bf16.msra.mxu0 0
        %4938 = vmatprep.subr.bf16.mxu0 0
        %4939 = vmatpush1.bf16.msra.mxu0 0
        %4940 = vmatprep.subr.bf16.mxu0 0
        %4941 = vmatpush1.bf16.msra.mxu0 0
        %4942 = vmatprep.mubr.bf16.mxu0 0
        %4943 = vmatmul.mubr.bf16.gmra.mrb[0].mxu0 %v4799
        %v4944 = vpop.f32.mrb[0].mxu0
        %v4945 = vadd.f32 %v4823, %v4944
        %v4946 = vpop.f32.mrb[0].mxu0
        %v4947 = vadd.f32 %v4827, %v4946
        %v4948 = vpop.f32.mrb[0].mxu0
        %v4949 = vadd.f32 %v4823, %v4948
        %v4950 = vpop.f32.mrb[0].mxu0
        %v4951 = vadd.f32 %v4827, %v4950
        %4952 = vdwg.mxu0
        %v4953 = vmul.f32 %v4945, %v4945
        %v4954 = vmul.f32 %v4947, %v4947
        %v4955 = vmul.f32 %v4949, %v4949
        %v4956 = vmul.f32 %v4951, %v4951
        %v4957 = vmul.f32 %v4945, %v4953
        %v4958 = vmul.f32 %v4947, %v4954
        %v4959 = vmul.f32 %v4949, %v4955
        %v4960 = vmul.f32 %v4951, %v4956
        %v4961 = vmul.f32 %v4957, 0.044715
        %v4962 = vmul.f32 %v4958, 0.044715
        %v4963 = vmul.f32 %v4959, 0.044715
        %v4964 = vmul.f32 %v4960, 0.044715
        %v4965 = vadd.f32 %v4945, %v4961
        %v4966 = vadd.f32 %v4947, %v4962
        %v4967 = vadd.f32 %v4949, %v4963
        %v4968 = vadd.f32 %v4951, %v4964
        %v4969 = vmul.f32 %v4965, 0.7978846
        %v4970 = vmul.f32 %v4966, 0.7978846
        %v4971 = vmul.f32 %v4967, 0.7978846
        %v4972 = vmul.f32 %v4968, 0.7978846
        %v4973 = vtanh.pop %v4969
        %v4974 = vtanh.pop %v4970
        %v4975 = vtanh.pop %v4971
        %v4976 = vtanh.pop %v4972
        %v4977 = vadd.f32 %v4973, 1.0
        %v4978 = vadd.f32 %v4974, 1.0
        %v4979 = vadd.f32 %v4975, 1.0
        %v4980 = vadd.f32 %v4976, 1.0
        %v4981 = vmul.f32 %v4977, 0.5
        %v4982 = vmul.f32 %v4978, 0.5
        %v4983 = vmul.f32 %v4979, 0.5
        %v4984 = vmul.f32 %v4980, 0.5
        %v4985 = vmul.f32 %v4945, %v4981
        %v4986 = vmul.f32 %v4947, %v4982
        %v4987 = vmul.f32 %v4949, %v4983
        %v4988 = vmul.f32 %v4951, %v4984
        %v4989 = vpack.c.bf16 %v4987, %v4985
        %v4990 = vpack.c.bf16 %v4988, %v4986
        %s4991 = scalar_lea.vmem [#allocation8], 128
        %v4992 = vld [vmem:[%s4991] sm:$0xf]
        %v4993 = vld [vmem:[%s4991 + $0x4] sm:$0xf]
        %v4994 = vld [vmem:[%s4991 + $0x8] sm:$0xf]
        %v4995 = vld [vmem:[%s4991 + $0xc] sm:$0xf]
        %v4996 = vld [vmem:[%s4991 + $0x10] sm:$0xf]
        %v4997 = vld [vmem:[%s4991 + $0x14] sm:$0xf]
        %v4998 = vld [vmem:[%s4991 + $0x18] sm:$0xf]
        %v4999 = vld [vmem:[%s4991 + $0x1c] sm:$0xf]
        %v5000 = vld [vmem:[%s4991 + $0x20] sm:$0xf]
        %v5001 = vld [vmem:[%s4991 + $0x24] sm:$0xf]
        %v5002 = vld [vmem:[%s4991 + $0x28] sm:$0xf]
        %v5003 = vld [vmem:[%s4991 + $0x2c] sm:$0xf]
        %v5004 = vld [vmem:[%s4991 + $0x30] sm:$0xf]
        %v5005 = vld [vmem:[%s4991 + $0x34] sm:$0xf]
        %v5006 = vld [vmem:[%s4991 + $0x38] sm:$0xf]
        %v5007 = vld [vmem:[%s4991 + $0x3c] sm:$0xf]
        %v5008 = vld [vmem:[%s4991 + $0x40] sm:$0xf]
        %v5009 = vld [vmem:[%s4991 + $0x44] sm:$0xf]
        %v5010 = vld [vmem:[%s4991 + $0x48] sm:$0xf]
        %v5011 = vld [vmem:[%s4991 + $0x4c] sm:$0xf]
        %v5012 = vld [vmem:[%s4991 + $0x50] sm:$0xf]
        %v5013 = vld [vmem:[%s4991 + $0x54] sm:$0xf]
        %v5014 = vld [vmem:[%s4991 + $0x58] sm:$0xf]
        %v5015 = vld [vmem:[%s4991 + $0x5c] sm:$0xf]
        %v5016 = vld [vmem:[%s4991 + $0x60] sm:$0xf]
        %v5017 = vld [vmem:[%s4991 + $0x64] sm:$0xf]
        %v5018 = vld [vmem:[%s4991 + $0x68] sm:$0xf]
        %v5019 = vld [vmem:[%s4991 + $0x6c] sm:$0xf]
        %v5020 = vld [vmem:[%s4991 + $0x70] sm:$0xf]
        %v5021 = vld [vmem:[%s4991 + $0x74] sm:$0xf]
        %v5022 = vld [vmem:[%s4991 + $0x78] sm:$0xf]
        %v5023 = vld [vmem:[%s4991 + $0x7c] sm:$0xf]
        %v5056 = vunpack.c.l.b16 %v4992
        %v5057 = vunpack.c.l.b16 %v4993
        %v5058 = vunpack.c.l.b16 %v4994
        %v5059 = vunpack.c.l.b16 %v4995
        %v5060 = vunpack.c.l.b16 %v4996
        %v5061 = vunpack.c.l.b16 %v4997
        %v5062 = vunpack.c.l.b16 %v4998
        %v5063 = vunpack.c.l.b16 %v4999
        %v5064 = vunpack.c.l.b16 %v5000
        %v5065 = vunpack.c.l.b16 %v5001
        %v5066 = vunpack.c.l.b16 %v5002
        %v5067 = vunpack.c.l.b16 %v5003
        %v5068 = vunpack.c.l.b16 %v5004
        %v5069 = vunpack.c.l.b16 %v5005
        %v5070 = vunpack.c.l.b16 %v5006
        %v5071 = vunpack.c.l.b16 %v5007
        %v5072 = vunpack.c.l.b16 %v5008
        %v5073 = vunpack.c.l.b16 %v5009
        %v5074 = vunpack.c.l.b16 %v5010
        %v5075 = vunpack.c.l.b16 %v5011
        %v5076 = vunpack.c.l.b16 %v5012
        %v5077 = vunpack.c.l.b16 %v5013
        %v5078 = vunpack.c.l.b16 %v5014
        %v5079 = vunpack.c.l.b16 %v5015
        %v5080 = vunpack.c.l.b16 %v5016
        %v5081 = vunpack.c.l.b16 %v5017
        %v5082 = vunpack.c.l.b16 %v5018
        %v5083 = vunpack.c.l.b16 %v5019
        %v5084 = vunpack.c.l.b16 %v5020
        %v5085 = vunpack.c.l.b16 %v5021
        %v5086 = vunpack.c.l.b16 %v5022
        %v5087 = vunpack.c.l.b16 %v5023
        %v5088 = vpack.c.b16 %v5057, %v5056
        %v5089 = vpack.c.b16 %v5059, %v5058
        %v5090 = vpack.c.b16 %v5061, %v5060
        %v5091 = vpack.c.b16 %v5063, %v5062
        %v5092 = vpack.c.b16 %v5065, %v5064
        %v5093 = vpack.c.b16 %v5067, %v5066
        %v5094 = vpack.c.b16 %v5069, %v5068
        %v5095 = vpack.c.b16 %v5071, %v5070
        %v5096 = vpack.c.b16 %v5073, %v5072
        %v5097 = vpack.c.b16 %v5075, %v5074
        %v5098 = vpack.c.b16 %v5077, %v5076
        %v5099 = vpack.c.b16 %v5079, %v5078
        %v5100 = vpack.c.b16 %v5081, %v5080
        %v5101 = vpack.c.b16 %v5083, %v5082
        %v5102 = vpack.c.b16 %v5085, %v5084
        %v5103 = vpack.c.b16 %v5087, %v5086
        %5120 = vmatprep.subr.bf16.mxu0 0
        %5121 = vmatpush1.bf16.msra.mxu0 %v5088
        %5122 = vmatprep.subr.bf16.mxu0 0
        %5123 = vmatpush1.bf16.msra.mxu0 %v5089
        %5124 = vmatprep.subr.bf16.mxu0 0
        %5125 = vmatpush1.bf16.msra.mxu0 %v5090
        %5126 = vmatprep.subr.bf16.mxu0 0
        %5127 = vmatpush1.bf16.msra.mxu0 %v5091
        %5128 = vmatprep.subr.bf16.mxu0 0
        %5129 = vmatpush1.bf16.msra.mxu0 %v5092
        %5130 = vmatprep.subr.bf16.mxu0 0
        %5131 = vmatpush1.bf16.msra.mxu0 %v5093
        %5132 = vmatprep.subr.bf16.mxu0 0
        %5133 = vmatpush1.bf16.msra.mxu0 %v5094
        %5134 = vmatprep.subr.bf16.mxu0 0
        %5135 = vmatpush1.bf16.msra.mxu0 %v5095
        %5136 = vmatprep.subr.bf16.mxu0 0
        %5137 = vmatpush1.bf16.msra.mxu0 %v5096
        %5138 = vmatprep.subr.bf16.mxu0 0
        %5139 = vmatpush1.bf16.msra.mxu0 %v5097
        %5140 = vmatprep.subr.bf16.mxu0 0
        %5141 = vmatpush1.bf16.msra.mxu0 %v5098
        %5142 = vmatprep.subr.bf16.mxu0 0
        %5143 = vmatpush1.bf16.msra.mxu0 %v5099
        %5144 = vmatprep.subr.bf16.mxu0 0
        %5145 = vmatpush1.bf16.msra.mxu0 %v5100
        %5146 = vmatprep.subr.bf16.mxu0 0
        %5147 = vmatpush1.bf16.msra.mxu0 %v5101
        %5148 = vmatprep.subr.bf16.mxu0 0
        %5149 = vmatpush1.bf16.msra.mxu0 %v5102
        %5150 = vmatprep.subr.bf16.mxu0 0
        %5151 = vmatpush1.bf16.msra.mxu0 %v5103
        %5152 = vmatprep.mubr.bf16.mxu0 %v4990
        %5153 = vmatmul.mubr.bf16.gmra.mrb[0].mxu0 %v4989
        %v5154 = vpop.f32.mrb[0].mxu0
        %v5155 = vadd.f32 0.0, %v5154
        %v5156 = vpop.f32.mrb[0].mxu0
        %v5157 = vpop.f32.mrb[0].mxu0
        %v5158 = vadd.f32 0.0, %v5157
        %v5159 = vpop.f32.mrb[0].mxu0
        %5160 = vdwg.mxu0
        %v5161 = vadd.f32 %v4753, %v5155
        %v5162 = vadd.f32 %v4754, %v5158
        %s5163 = scalar_lea.vmem %s15, 1
        %v5164 = vld [vmem:[%s5163] sm:$0x1]
        %v5166 = vlaneseq
        %v5167 = vshrl.u32 %v5166, 7
        %v5168 = vsub.s32 0, %v5167
        %v5169 = vrot.slane %v5164, %v5168
        %v5171 = vadd.f32 %v5161, %v5169
        %v5172 = vadd.f32 %v5162, %v5169
        %v5173 = vld [vmem:[%s16] sm:$0x1]
        %v5174 = vld [vmem:[%s17] sm:$0x1]
        %5175 = vadd.xlane.f32.xlu0 %v5171
        %v5176 = vpop.xlane.xlu0 %5175
        %5177 = vadd.xlane.f32.xlu0 %v5172
        %v5178 = vpop.xlane.xlu0 %5177
        %v5179 = vmul.f32 %v5176, 0.015625
        %v5180 = vmul.f32 %v5178, 0.015625
        %v5181 = vsub.f32 %v5171, %v5179
        %v5182 = vsub.f32 %v5172, %v5180
        %v5183 = vmul.f32 %v5181, %v696
        %v5184 = vmul.f32 %v5182, %v696
        %v5185 = vmul.f32 %v5183, %v5183
        %v5186 = vmul.f32 %v5184, %v5184
        %5187 = vadd.xlane.f32.xlu0 %v5185
        %v5188 = vpop.xlane.xlu0 %5187
        %5189 = vadd.xlane.f32.xlu0 %v5186
        %v5190 = vpop.xlane.xlu0 %5189
        %v5191 = vmul.f32 %v5188, 0.015625
        %v5192 = vmul.f32 %v5190, 0.015625
        %v5193 = vadd.f32 %v5191, 1e-05
        %v5194 = vadd.f32 %v5192, 1e-05
        %v5195 = vrsqrt.pop %v5193
        %v5196 = vrsqrt.pop %v5194
        %v5197 = vmul.f32 %v5183, %v5195
        %v5198 = vmul.f32 %v5184, %v5196
        %v5200 = vlaneseq
        %v5201 = vshrl.u32 %v5200, 7
        %v5202 = vsub.s32 0, %v5201
        %v5203 = vrot.slane %v5173, %v5202
        %v5205 = vmul.f32 %v5197, %v5203
        %v5206 = vmul.f32 %v5198, %v5203
        %v5208 = vlaneseq
        %v5209 = vshrl.u32 %v5208, 7
        %v5210 = vsub.s32 0, %v5209
        %v5211 = vrot.slane %v5174, %v5210
        %v5213 = vadd.f32 %v5205, %v5211
        %v5214 = vadd.f32 %v5206, %v5211
        %v5215 = vld [vmem:[%s18] sm:$0x1]
        %v5217 = vlaneseq
        %v5218 = vshrl.u32 %v5217, 7
        %v5219 = vsub.s32 0, %v5218
        %v5220 = vrot.slane %v5215, %v5219
        %v5222 = vmul.f32 %v5213, %v5220
        %v5223 = vmul.f32 %v5214, %v5220
        %5224 = vadd.xlane.f32.xlu0 %v5222
        %v5225 = vpop.xlane.xlu0 %5224
        %5226 = vadd.xlane.f32.xlu0 %v5223
        %v5227 = vpop.xlane.xlu0 %5226
        %v5228 = vld [vmem:[#allocation2] sm:$0x1]
        %v5230 = vlaneseq
        %v5231 = vshrl.u32 %v5230, 7
        %v5232 = vsub.s32 0, %v5231
        %v5233 = vrot.slane %v5228, %v5232
        %v5235 = vadd.f32 %v5225, %v5233
        %v5236 = vadd.f32 %v5227, %v5233
        %5238 = vset.pattern.permute.xlu0 0
        %5239 = vperm.xlu0 %5238, %v5235
        %v5240 = vpop.permute.xlu0 %5239
        %5243 = vset.pattern.permute.xlu0 0
        %5244 = vperm.xlu0 %5243, %v5236
        %v5245 = vpop.permute.xlu0 %5244
        %5247 = vst [vmem:[%s690] sm:$0xff] %v5240
        %5248 = vst [vmem:[%s690 + $0x8] sm:$0xff] %v5245
        %p5249 = scmp.lt.s32.totalorder %s36, 1
        %s5250 = scalar_select %p5249, %s36, 1
        %s5251 = smul.addr %s5250, 2
        %s5252 = smul.addr %s5251, 8
        %s5253 = scalar_lea.vmem %s20, %s5252
        // Predicated region
        $region117: #{forward.1} parent=99 // pred_check
          %p5254 = pneg %p479
        $region118: #{forward.1} parent=99 // pred_check_branch
          %5256 = sbr.rel (%p5254) target = $region120
        $region119: #{forward.1} parent=99 // pred_region
          _
        $region120: #{forward.1} parent=99 // pred_fallthru
          _
      $region100: #{forward.1} parent=5 // pred_fallthru
        _
      %p5257 = scmp.le.s32.totalorder 2, %s31
      // Predicated region
      $region121: #{forward.1} parent=5 // pred_check
        %p5258 = pneg %p5257
      $region122: #{forward.1} parent=5 // pred_check_branch
        %5260 = sbr.rel (%p5258) target = $region124
      $region123: #{forward.1} parent=5 // pred_region
        %s5261 = ssub.s32 %s31, 2
        // Predicated region
        $region125: #{forward.1} parent=123 // pred_check
          %p5262 = pneg %p485
        $region126: #{forward.1} parent=123 // pred_check_branch
          %5264 = sbr.rel (%p5262) target = $region128
        $region127: #{forward.1} parent=123 // pred_region
          %p5265 = scmp.lt.s32.totalorder %s37, 1
          %s5266 = scalar_select %p5265, %s37, 1
          %s5267 = smul.addr %s5266, 2
          %s5268 = smul.addr %s5267, 8
          %s5269 = scalar_lea.vmem %s20, %s5268
        $region128: #{forward.1} parent=123 // pred_fallthru
          _
      $region124: #{forward.1} parent=5 // pred_fallthru
        _
    $region6: #{forward.1} parent=1 // loop_footer
      %s35 = sadd.s32 1, %s31
    $region7: #{forward.1} parent=1 // loop_footer_branch
      %30 = sbr.rel target = $region3
    $region8: #{forward.1} parent=1 // loop_exit
      _
    %5270 = vsyncpa [#allocation4], 1
    %s5271 = scalar_lea.sflag [#allocation4], 1
    %5272 = vsyncpa %s5271, 1
    %5273 = vsyncpa [#allocation6], 1
    %5274 = vsyncpa [#allocation9], 1

</llo_original>
